<compile_context>
chip_gen: v6e
topology: v6e:2x2x1
jax: 0.10.0
libtpu: 0.0.40
codegen_flags: <defaults>
</compile_context>

<pallas_src>
import math

import jax
import jax.numpy as jnp
from jax.experimental import pallas as pl
from jax.experimental.pallas import tpu as pltpu


# ------------------------------- helpers ----------------------------------- #

def _pick_tile(dim, target, align):
    """Largest `align`-aligned tile <= target that divides dim, else the full dim.

    Never returns a tile that violates the (8, 128) BlockSpec rule: the result is either a
    multiple of `align` or equal to `dim` itself (full extent is always legal).
    """
    if dim <= target:
        return dim
    t = (target // align) * align
    while t >= align:
        if dim % t == 0:
            return t
        t -= align
    return dim          # no aligned divisor: fall back to the full (always-legal) extent


def _default_attn_block():
    """Attention tile size heuristic: 512 on v6e/v7x, 256 on v5e (weak VPU/EUP, 4x128^2 MXU)."""
    try:
        kind = jax.devices()[0].device_kind.lower()
    except Exception:
        return 256
    if "v5 lite" in kind or "v5e" in kind or "v5litepod" in kind:
        return 256
    return 512


# --------------------------- tiled linear kernel ---------------------------- #

def pallas_linear(x, w, b, *, out_dtype=None, tm=512, tn=1024, tk=512):
    """y = x @ w + b.  bf16 MXU operands, f32 accumulation, K innermost grid axis.

    If out_dtype is f32 the accumulation happens directly in the resident output block
    (no scratch); otherwise an f32 VMEM scratch accumulator is used and cast at the end.
    """
    M, K = x.shape
    Kw, N = w.shape
    assert K == Kw and b.shape == (1, N)
    out_dtype = jnp.dtype(out_dtype) if out_dtype is not None else x.dtype

    tm = _pick_tile(M, tm, 8)
    tn = _pick_tile(N, tn, 128)
    tk = _pick_tile(K, tk, 128)
    grid = (M // tm, N // tn, K // tk)

    direct = out_dtype == jnp.dtype(jnp.float32)

    def kernel_direct(x_ref, w_ref, b_ref, o_ref):
        # f32 output block is VMEM-resident across the K axis -> accumulate in place.
        @pl.when(pl.program_id(2) == 0)
        def _init():
            o_ref[...] = jnp.zeros_like(o_ref)

        o_ref[...] += jnp.dot(x_ref[...].astype(jnp.bfloat16),
                              w_ref[...].astype(jnp.bfloat16),
                              preferred_element_type=jnp.float32)

        @pl.when(pl.program_id(2) == pl.num_programs(2) - 1)
        def _finalize():
            o_ref[...] += b_ref[...].astype(jnp.float32)

    def kernel_acc(x_ref, w_ref, b_ref, o_ref, acc_ref):
        @pl.when(pl.program_id(2) == 0)
        def _init():
            acc_ref[...] = jnp.zeros_like(acc_ref)

        acc_ref[...] += jnp.dot(x_ref[...].astype(jnp.bfloat16),
                                w_ref[...].astype(jnp.bfloat16),
                                preferred_element_type=jnp.float32)

        @pl.when(pl.program_id(2) == pl.num_programs(2) - 1)
        def _finalize():
            o_ref[...] = (acc_ref[...] + b_ref[...].astype(jnp.float32)).astype(o_ref.dtype)

    kernel = kernel_direct if direct else kernel_acc
    scratch = [] if direct else [pltpu.VMEM((tm, tn), jnp.float32)]

    # Double-buffered bf16 tiles at these sizes stay well under the scoped-VMEM default on
    # v5e/v6e/v7x; no vmem_limit_bytes override needed.
    return pl.pallas_call(
        kernel,
        out_shape=jax.ShapeDtypeStruct((M, N), out_dtype),
        grid_spec=pltpu.PrefetchScalarGridSpec(
            num_scalar_prefetch=0,
            grid=grid,
            in_specs=[pl.BlockSpec((tm, tk), lambda i, j, k: (i, k)),
                      pl.BlockSpec((tk, tn), lambda i, j, k: (k, j)),
                      pl.BlockSpec((1, tn), lambda i, j, k: (0, j))],
            out_specs=pl.BlockSpec((tm, tn), lambda i, j, k: (i, j)),
            scratch_shapes=scratch),
        compiler_params=pltpu.CompilerParams(
            dimension_semantics=("parallel", "parallel", "arbitrary")),
    )(x, w, b)


# ---------------------- causal flash attention kernel ----------------------- #

def pallas_fused_causal_attention(qkv, *, num_heads, head_dim, block=None, out_dtype=None):
    """Causal softmax attention reading q/k/v directly from the fused qkv buffer.

    qkv: (B, S, 3*hidden) with layout [q | k | v], hidden = num_heads*head_dim, and the 1/sqrt(D)
    scale already folded into the q columns by the caller.
    Returns ctx: (B, S, hidden) with heads already merged (ready for out_proj).
    """
    B, S, three_hidden = qkv.shape
    H, D = num_heads, head_dim
    hidden = H * D
    assert three_hidden == 3 * hidden
    # The per-head BlockSpec carves a last-dim block of size D out of (B, S, 3*hidden).
    assert D % 128 == 0, "head_dim must be a multiple of 128 for the fused-qkv BlockSpec"
    # TODO(synk): head_dim=64 (real GPT-2: hidden=768, 12 heads) needs a head-grouped layout.

    out_dtype = out_dtype if out_dtype is not None else qkv.dtype
    if block is None:
        block = _default_attn_block()
    blk = _pick_tile(S, block, 128)
    nq = S // blk

    # Flattened lower-triangular (qi, ki) schedule: every grid step is a valid tile, so no
    # grid steps (or DMA clamping hacks) are wasted on the upper triangle.  ki runs 0..qi
    # within each qi run, so ki==0 marks init and ki==qi marks the masked/finalize step.
    qi_list, ki_list = [], []
    for qi in range(nq):
        for ki in range(qi + 1):
            qi_list.append(qi)
            ki_list.append(ki)
    n_tri = len(qi_list)
    qi_tab = jnp.asarray(qi_list, dtype=jnp.int32)
    ki_tab = jnp.asarray(ki_list, dtype=jnp.int32)

    # grid = (batch, head, triangular-tile); index_maps receive the prefetch refs positionally.
    def q_map(b, h, t, qi_ref, ki_ref):
        return (b, qi_ref[t], h)

    def k_map(b, h, t, qi_ref, ki_ref):
        return (b, ki_ref[t], H + h)

    def v_map(b, h, t, qi_ref, ki_ref):
        return (b, ki_ref[t], 2 * H + h)

    def o_map(b, h, t, qi_ref, ki_ref):
        return (b, qi_ref[t], h)

    def kernel(qi_ref, ki_ref, q_ref, k_ref, v_ref, o_ref, m_ref, l_ref, acc_ref):
        t = pl.program_id(2)
        qi = qi_ref[t]
        ki = ki_ref[t]

        @pl.when(ki == 0)
        def _init():
            m_ref[...] = jnp.full_like(m_ref, -jnp.inf)
            l_ref[...] = jnp.zeros_like(l_ref)
            acc_ref[...] = jnp.zeros_like(acc_ref)

        q = q_ref[...].astype(jnp.bfloat16)            # (blk, D); scale pre-folded into weights
        k = k_ref[...].astype(jnp.bfloat16)            # (blk, D)
        v = v_ref[...].astype(jnp.bfloat16)            # (blk, D)
        # Contract on D directly (no k.T -> no XLU transpose / VMEM copy); bf16 MXU, f32 acc.
        s = jax.lax.dot_general(q, k, (((1,), (1,)), ((), ())),
                                preferred_element_type=jnp.float32)    # (blk, blk)

        def online_softmax_update(scores):
            # Softmax bookkeeping stays in f32 (v5e has no bf16 VPU/EUP).
            m_prev = m_ref[...]
            m_new = jnp.maximum(m_prev, jnp.max(scores, axis=-1, keepdims=True))
            alpha = jnp.exp(m_prev - m_new)
            p = jnp.exp(scores - m_new)
            l_ref[...] = alpha * l_ref[...] + jnp.sum(p, axis=-1, keepdims=True)
            acc_ref[...] = alpha * acc_ref[...] + jnp.dot(
                p.astype(jnp.bfloat16), v, preferred_element_type=jnp.float32)
            m_ref[...] = m_new

        @pl.when(ki < qi)          # strictly below the diagonal: no mask work at all
        def _dense():
            online_softmax_update(s)

        @pl.when(ki == qi)         # diagonal tile: tile-local causal mask, then finalize
        def _diag_and_finalize():
            row = jax.lax.broadcasted_iota(jnp.int32, (blk, blk), 0)
            col = jax.lax.broadcasted_iota(jnp.int32, (blk, blk), 1)
            online_softmax_update(jnp.where(col <= row, s, -jnp.inf))
            # Single O(blk*D) normalization via EUP reciprocal; every q row has >=1 unmasked key.
            inv_l = pl.reciprocal(l_ref[...], approx=True)
            o_ref[...] = (acc_ref[...] * inv_l).astype(o_ref.dtype)

    qkv_spec = lambda imap: pl.BlockSpec((pl.Squeezed(), blk, D), imap)
    return pl.pallas_call(
        kernel,
        out_shape=jax.ShapeDtypeStruct((B, S, hidden), out_dtype),
        grid_spec=pltpu.PrefetchScalarGridSpec(
            num_scalar_prefetch=2,
            grid=(B, H, n_tri),
            in_specs=[qkv_spec(q_map), qkv_spec(k_map), qkv_spec(v_map)],
            out_specs=pl.BlockSpec((pl.Squeezed(), blk, D), o_map),
            scratch_shapes=[pltpu.VMEM((blk, 1), jnp.float32),    # m (running max)
                            pltpu.VMEM((blk, 1), jnp.float32),    # l (running denom)
                            pltpu.VMEM((blk, D), jnp.float32)]),  # acc (unnormalized out)
        compiler_params=pltpu.CompilerParams(
            dimension_semantics=("parallel", "parallel", "arbitrary")),
    )(qi_tab, ki_tab, qkv, qkv, qkv)


# --------------------------- Module-level wrapper --------------------------- #

class GPT2AttentionWithXFPallas:
    """JAX/Pallas equivalent of GPT2AttentionWithXF.forward (eval mode, p=0)."""

    def __init__(self, hidden_size, num_attention_heads, key):
        assert hidden_size % num_attention_heads == 0
        self.hidden_size = hidden_size
        self.num_heads = num_attention_heads
        self.head_dim = hidden_size // num_attention_heads

        k1, k2, k3, k4 = jax.random.split(key, 4)
        std = 0.02
        # Canonical f32 parameters (used by the pure-JAX reference).
        self.qkv_w = std * jax.random.normal(k1, (hidden_size, 3 * hidden_size), jnp.float32)
        self.qkv_b = std * jax.random.normal(k2, (1, 3 * hidden_size), jnp.float32)
        self.proj_w = std * jax.random.normal(k3, (hidden_size, hidden_size), jnp.float32)
        self.proj_b = std * jax.random.normal(k4, (1, hidden_size), jnp.float32)

        # Kernel-side parameters: fold the 1/sqrt(D) softmax scale into the q columns (so the
        # attention kernel never multiplies q), and pre-cast weights to bf16 (MXU-native,
        # halves weight HBM traffic).  Biases stay f32 (added after the f32 accumulation).
        scale = 1.0 / math.sqrt(self.head_dim)
        self.qkv_w_k = self.qkv_w.at[:, :hidden_size].multiply(scale).astype(jnp.bfloat16)
        self.qkv_b_k = self.qkv_b.at[:, :hidden_size].multiply(scale)
        self.proj_w_k = self.proj_w.astype(jnp.bfloat16)
        self.proj_b_k = self.proj_b

    def __call__(self, hidden_states):
        B, S, Hd = hidden_states.shape
        H, D = self.num_heads, self.head_dim

        x2d = hidden_states.reshape(B * S, Hd)
        # qkv activation carried in bf16 (halves the (B,S,3*hidden) HBM round-trip).
        qkv = pallas_linear(x2d, self.qkv_w_k, self.qkv_b_k,
                            out_dtype=jnp.bfloat16)                       # (B*S, 3*hidden)
        qkv = qkv.reshape(B, S, 3 * Hd)                                   # free (contiguous)

        # q/k/v slicing + per-head layout are folded into the attention BlockSpecs.
        ctx = pallas_fused_causal_attention(qkv, num_heads=H, head_dim=D,
                                            out_dtype=jnp.bfloat16)       # (B, S, hidden)

        # out_proj accumulates directly into the f32 output block (no scratch).
        out = pallas_linear(ctx.reshape(B * S, Hd), self.proj_w_k, self.proj_b_k,
                            out_dtype=hidden_states.dtype)
        return out.reshape(B, S, Hd)
        # TODO(synk): attn_pdrop / resid_pdrop dropout omitted (p=0, deterministic eval).

    # Pure-JAX f32 reference (mirrors attention_native + Linear layers) for self-check.
    def reference(self, hidden_states):
        B, S, Hd = hidden_states.shape
        H, D = self.num_heads, self.head_dim
        x2d = hidden_states.reshape(B * S, Hd)
        qkv = x2d @ self.qkv_w + self.qkv_b
        q, k, v = jnp.split(qkv, 3, axis=-1)

        def to_heads(t):
            return t.reshape(B, S, H, D).transpose(0, 2, 1, 3)      # (B, H, S, D)

        qh, kh, vh = map(to_heads, (q, k, v))
        scale = 1.0 / math.sqrt(D)
        s = jnp.einsum("bhqd,bhkd->bhqk", qh * scale, kh)
        causal = jnp.tril(jnp.ones((S, S), dtype=bool))
        s = jnp.where(causal[None, None], s, -1e30)
        p = jax.nn.softmax(s, axis=-1)
        ctx = jnp.einsum("bhqk,bhkd->bhqd", p, vh)
        ctx = ctx.transpose(0, 2, 1, 3).reshape(B * S, Hd)
        out = ctx @ self.proj_w + self.proj_b
        return out.reshape(B, S, Hd)


if __name__ == "__main__":
    key = jax.random.PRNGKey(0)
    kparams, kx = jax.random.split(key)

    # Small but TPU-aligned shapes: B=2, S=128, hidden=256, heads=2 -> head_dim=128.
    B, S, hidden, heads = 2, 128, 256, 2
    attn = GPT2AttentionWithXFPallas(hidden, heads, kparams)

    hidden_states = jax.random.normal(kx, (B, S, hidden), jnp.float32)

    out = attn(hidden_states)
    out = jax.block_until_ready(out)

    ref = attn.reference(hidden_states)
    assert out.shape == (B, S, hidden)
    # bf16 matmul operands / bf16 inter-kernel activations / approx reciprocal -> looser
    # tolerance than pure-f32 (observed error is well below this bound).
    assert jnp.allclose(out, ref, atol=2e-2, rtol=2e-2), (
        f"mismatch vs JAX reference, max abs err = {jnp.max(jnp.abs(out - ref))}")

    print("KERNEL_OK")
</pallas_src>

<mosaic_0001>
module attributes {stable_mosaic.version = 11 : i64} {
  func.func @kernel_acc(%arg0: i32, %arg1: i32, %arg2: i32, %arg3: memref<256x256xf32, #tpu.memory_space<vmem>>, %arg4: memref<256x768xbf16, #tpu.memory_space<vmem>>, %arg5: memref<1x768xf32, #tpu.memory_space<vmem>>, %arg6: memref<256x768xbf16, #tpu.memory_space<vmem>>, %arg7: memref<256x768xf32, #tpu.memory_space<vmem>>) attributes {dimension_semantics = [#tpu.dimension_semantics<parallel>, #tpu.dimension_semantics<parallel>, #tpu.dimension_semantics<arbitrary>], iteration_bounds = array<i64: 1, 1, 1>, scalar_prefetch = 0 : i64, scratch_operands = 1 : i64, tpu.core_type = #tpu.core_type<tc>, window_params = [{transform_indices = @transform_0, window_bounds = array<i64: 256, 256>}, {transform_indices = @transform_1, window_bounds = array<i64: 256, 768>}, {transform_indices = @transform_2, window_bounds = array<i64: 1, 768>}, {transform_indices = @transform_3, window_bounds = array<i64: 256, 768>}]} {
    %c0_i32 = arith.constant 0 : i32
    %0 = arith.cmpi eq, %arg2, %c0_i32 : i32
    %1 = arith.extui %0 : i1 to i32
    %c0_i32_0 = arith.constant 0 : i32
    %2 = arith.cmpi ne, %1, %c0_i32_0 : i32
    scf.if %2 {
      %cst_10 = arith.constant 0.000000e+00 : f32
      %13 = vector.broadcast %cst_10 : f32 to vector<256x768xf32>
      %c0_11 = arith.constant 0 : index
      %c0_12 = arith.constant 0 : index
      %14 = vector.load %arg7[%c0_11, %c0_12] : memref<256x768xf32, #tpu.memory_space<vmem>>, vector<256x768xf32>
      tpu.vector_store %arg7[%c0_11, %c0_12], %13 {strides = array<i32>} : memref<256x768xf32, #tpu.memory_space<vmem>>, vector<256x768xf32>,
    } else {
    }
    %c0 = arith.constant 0 : index
    %c0_1 = arith.constant 0 : index
    %3 = vector.load %arg7[%c0, %c0_1] : memref<256x768xf32, #tpu.memory_space<vmem>>, vector<256x768xf32>
    %c0_2 = arith.constant 0 : index
    %c0_3 = arith.constant 0 : index
    %4 = vector.load %arg3[%c0_2, %c0_3] : memref<256x256xf32, #tpu.memory_space<vmem>>, vector<256x256xf32>
    %5 = arith.truncf %4 : vector<256x256xf32> to vector<256x256xbf16>
    %c0_4 = arith.constant 0 : index
    %c0_5 = arith.constant 0 : index
    %6 = vector.load %arg4[%c0_4, %c0_5] : memref<256x768xbf16, #tpu.memory_space<vmem>>, vector<256x768xbf16>
    %cst = arith.constant dense<0.000000e+00> : vector<256x768xf32>
    %7 = tpu.matmul %5, %6, %cst {dimension_numbers = #tpu.dot_dimension_numbers<[1], [0], [0], [1], [0, 0, 1, 1], [], []>} : vector<256x256xbf16>, vector<256x768xbf16>, vector<256x768xf32> -> vector<256x768xf32>
    %8 = arith.addf %3, %7 : vector<256x768xf32>
    %c0_6 = arith.constant 0 : index
    %c0_7 = arith.constant 0 : index
    %9 = vector.load %arg7[%c0_6, %c0_7] : memref<256x768xf32, #tpu.memory_space<vmem>>, vector<256x768xf32>
    tpu.vector_store %arg7[%c0_6, %c0_7], %8 {strides = array<i32>} : memref<256x768xf32, #tpu.memory_space<vmem>>, vector<256x768xf32>,
    %c0_i32_8 = arith.constant 0 : i32
    %10 = arith.cmpi eq, %arg2, %c0_i32_8 : i32
    %11 = arith.extui %10 : i1 to i32
    %c0_i32_9 = arith.constant 0 : i32
    %12 = arith.cmpi ne, %11, %c0_i32_9 : i32
    scf.if %12 {
      %c0_10 = arith.constant 0 : index
      %c0_11 = arith.constant 0 : index
      %13 = vector.load %arg7[%c0_10, %c0_11] : memref<256x768xf32, #tpu.memory_space<vmem>>, vector<256x768xf32>
      %c0_12 = arith.constant 0 : index
      %c0_13 = arith.constant 0 : index
      %14 = vector.load %arg5[%c0_12, %c0_13] : memref<1x768xf32, #tpu.memory_space<vmem>>, vector<1x768xf32>
      %15 = vector.broadcast %14 : vector<1x768xf32> to vector<256x768xf32>
      %16 = arith.addf %13, %15 : vector<256x768xf32>
      %17 = arith.truncf %16 : vector<256x768xf32> to vector<256x768xbf16>
      %c0_14 = arith.constant 0 : index
      %c0_15 = arith.constant 0 : index
      %18 = vector.load %arg6[%c0_14, %c0_15] : memref<256x768xbf16, #tpu.memory_space<vmem>>, vector<256x768xbf16>
      tpu.vector_store %arg6[%c0_14, %c0_15], %17 {strides = array<i32>} : memref<256x768xbf16, #tpu.memory_space<vmem>>, vector<256x768xbf16>,
    } else {
    }
    return
  }
  func.func @transform_0(%arg0: i32, %arg1: i32, %arg2: i32) -> (i32, i32) {
    %c0_i32 = arith.constant 0 : i32
    return %arg0, %arg2 : i32, i32
  }
  func.func @transform_1(%arg0: i32, %arg1: i32, %arg2: i32) -> (i32, i32) {
    %c0_i32 = arith.constant 0 : i32
    return %arg2, %arg1 : i32, i32
  }
  func.func @transform_2(%arg0: i32, %arg1: i32, %arg2: i32) -> (i32, i32) {
    %c0_i32 = arith.constant 0 : i32
    %c0_i32_0 = arith.constant 0 : i32
    return %c0_i32, %arg1 : i32, i32
  }
  func.func @transform_3(%arg0: i32, %arg1: i32, %arg2: i32) -> (i32, i32) {
    %c0_i32 = arith.constant 0 : i32
    return %arg0, %arg1 : i32, i32
  }
}

</mosaic_0001>

<llo_original>
// kernel: tpu_custom_call.1
$region0: #{tpu_custom_call.1}
  #allocation0 [shape = 'u32[]', space=smem, size = 0x4, offset = 0x4, fixed_abs, tag = 'smem constant byte address 0x4 - core index']
  #allocation1 [shape = 'u32[144,128]{1,0:T(1,128)}', space=vmem, size = 0x12000, scoped, tag = 'internal scratch']
  #allocation2 [shape = 'f32[256,768]{1,0:T(8,128)}', space=vmem, size = 0xc0000, scoped, tag = 'scratch operand']
  %s0 = inlined_call_operand.hbm [shape: f32[256,256], index: 0, kind: input, shape index: {}]
  %s1 = inlined_call_operand.hbm [shape: bf16[256,768], index: 1, kind: input, shape index: {}]
  %s2 = inlined_call_operand.hbm [shape: f32[1,768], index: 2, kind: input, shape index: {}]
  %s3 = inlined_call_operand.hbm [shape: bf16[256,768], index: 3, kind: output, shape index: {}]
  %s4 = sld [smem:[#allocation0]]
  $region42: #{tpu_custom_call.1} parent=0
    _
  %s6 = ssub.s32 1, %s4
  %s7 = scalar_select 0, %s6, %s4
  $region1: #{tpu_custom_call.1} parent=0
    #allocation3 [shape = 'u8[262144]{0}', space=vmem, size = 0x40000, scoped, tag = 'input window, operand 0, single buffered']
    #allocation4 [shape = 's32[1]{0}', space=sflag, size = 0x4, scoped, tag = 'scoped memory for tpu_custom_call.1']
    #allocation5 [shape = 's32[1]{0}', space=sflag, size = 0x4, scoped, tag = 'scoped memory for tpu_custom_call.1']
    #allocation6 [shape = 'u8[393216]{0}', space=vmem, size = 0x60000, scoped, tag = 'input window, operand 1, single buffered']
    #allocation7 [shape = 's32[1]{0}', space=sflag, size = 0x4, scoped, tag = 'scoped memory for tpu_custom_call.1']
    #allocation8 [shape = 'u8[3072]{0}', space=vmem, size = 0xc00, scoped, tag = 'input window, operand 2, single buffered']
    #allocation9 [shape = 'u8[393216]{0}', space=vmem, size = 0x60000, scoped, tag = 'output window, operand 0, single buffered']
    %8 = vsyncpa [#allocation4], 0
    %9 = vsyncpa [#allocation7], 0
    %10 = vsyncpa [#allocation5], 0
    // Predicated region
    $region2: #{tpu_custom_call.1} parent=1 // pred_check
      _
    $region3: #{tpu_custom_call.1} parent=1 // pred_check_branch
      %12 = sbr.rel (0) target = $region5
    $region4: #{tpu_custom_call.1} parent=1 // pred_region
      %s14 = ssub.s32 8192, 8192
      %15 = vsyncadd [#allocation4], %s14
      %s16 = sshll.u32 [#allocation3], 4
      %s17 = int_to_ptr.vmem [resolvable:$true] %s16
      %22 = dma.hbm_to_vmem [thread:$0]  %s0, 8192, %s17, [#allocation4], 256, 256, 16
    $region5: #{tpu_custom_call.1} parent=1 // pred_fallthru
      _
    // Predicated region
    $region6: #{tpu_custom_call.1} parent=1 // pred_check
      _
    $region7: #{tpu_custom_call.1} parent=1 // pred_check_branch
      %24 = sbr.rel (0) target = $region9
    $region8: #{tpu_custom_call.1} parent=1 // pred_region
      %s26 = ssub.s32 12288, 12288
      %27 = vsyncadd [#allocation7], %s26
      %s28 = sshll.u32 [#allocation6], 4
      %s29 = int_to_ptr.vmem [resolvable:$true] %s28
      %34 = dma.hbm_to_vmem [thread:$0]  %s1, 12288, %s29, [#allocation7], 384, 384, 24
    $region9: #{tpu_custom_call.1} parent=1 // pred_fallthru
      _
    // Predicated region
    $region10: #{tpu_custom_call.1} parent=1 // pred_check
      _
    $region11: #{tpu_custom_call.1} parent=1 // pred_check_branch
      %36 = sbr.rel (0) target = $region13
    $region12: #{tpu_custom_call.1} parent=1 // pred_region
      %s38 = ssub.s32 96, 96
      %39 = vsyncadd [#allocation7], %s38
      %s41 = sshll.u32 [#allocation8], 4
      %s42 = int_to_ptr.vmem [resolvable:$true] %s41
      %44 = dma.hbm_to_vmem [thread:$0]  %s2, 96, %s42, [#allocation7]
    $region13: #{tpu_custom_call.1} parent=1 // pred_fallthru
      _
    // Predicated region
    $region14: #{tpu_custom_call.1} parent=1 // pred_check
      _
    $region15: #{tpu_custom_call.1} parent=1 // pred_check_branch
      %46 = sbr.rel (0) target = $region17
    $region16: #{tpu_custom_call.1} parent=1 // pred_region
      %47 = dma.done [#allocation4], 8192
    $region17: #{tpu_custom_call.1} parent=1 // pred_fallthru
      _
    // Predicated region
    $region18: #{tpu_custom_call.1} parent=1 // pred_check
      _
    $region19: #{tpu_custom_call.1} parent=1 // pred_check_branch
      %49 = sbr.rel (0) target = $region21
    $region20: #{tpu_custom_call.1} parent=1 // pred_region
      %50 = dma.done [#allocation7], 12288
    $region21: #{tpu_custom_call.1} parent=1 // pred_fallthru
      _
    // Predicated region
    $region22: #{tpu_custom_call.1} parent=1 // pred_check
      _
    $region23: #{tpu_custom_call.1} parent=1 // pred_check_branch
      %52 = sbr.rel (0) target = $region25
    $region24: #{tpu_custom_call.1} parent=1 // pred_region
      %53 = dma.done [#allocation7], 96
    $region25: #{tpu_custom_call.1} parent=1 // pred_fallthru
      _
    %p54 = scmp.eq.s32.totalorder 0, 0
    // Predicated region
    $region26: #{tpu_custom_call.1} parent=1 // pred_check
      %p55 = pneg %p54
    $region27: #{tpu_custom_call.1} parent=1 // pred_check_branch
      %57 = sbr.rel (%p55) target = $region29
    $region28: #{tpu_custom_call.1} parent=1 // pred_region
      %58 = vst [vmem:[#allocation2] sm:$0xff] 0.0
      %59 = vst [vmem:[#allocation2 + $0x8] sm:$0xff] 0.0
      %60 = vst [vmem:[#allocation2 + $0x10] sm:$0xff] 0.0
      %61 = vst [vmem:[#allocation2 + $0x18] sm:$0xff] 0.0
      %62 = vst [vmem:[#allocation2 + $0x20] sm:$0xff] 0.0
      %63 = vst [vmem:[#allocation2 + $0x28] sm:$0xff] 0.0
      %64 = vst [vmem:[#allocation2 + $0x30] sm:$0xff] 0.0
      %65 = vst [vmem:[#allocation2 + $0x38] sm:$0xff] 0.0
      %66 = vst [vmem:[#allocation2 + $0x40] sm:$0xff] 0.0
      %67 = vst [vmem:[#allocation2 + $0x48] sm:$0xff] 0.0
      %68 = vst [vmem:[#allocation2 + $0x50] sm:$0xff] 0.0
      %69 = vst [vmem:[#allocation2 + $0x58] sm:$0xff] 0.0
      %70 = vst [vmem:[#allocation2 + $0x60] sm:$0xff] 0.0
      %71 = vst [vmem:[#allocation2 + $0x68] sm:$0xff] 0.0
      %72 = vst [vmem:[#allocation2 + $0x70] sm:$0xff] 0.0
      %73 = vst [vmem:[#allocation2 + $0x78] sm:$0xff] 0.0
      %74 = vst [vmem:[#allocation2 + $0x80] sm:$0xff] 0.0
      %75 = vst [vmem:[#allocation2 + $0x88] sm:$0xff] 0.0
      %76 = vst [vmem:[#allocation2 + $0x90] sm:$0xff] 0.0
      %77 = vst [vmem:[#allocation2 + $0x98] sm:$0xff] 0.0
      %78 = vst [vmem:[#allocation2 + $0xa0] sm:$0xff] 0.0
      %79 = vst [vmem:[#allocation2 + $0xa8] sm:$0xff] 0.0
      %80 = vst [vmem:[#allocation2 + $0xb0] sm:$0xff] 0.0
      %81 = vst [vmem:[#allocation2 + $0xb8] sm:$0xff] 0.0
      %82 = vst [vmem:[#allocation2 + $0xc0] sm:$0xff] 0.0
      %83 = vst [vmem:[#allocation2 + $0xc8] sm:$0xff] 0.0
      %84 = vst [vmem:[#allocation2 + $0xd0] sm:$0xff] 0.0
      %85 = vst [vmem:[#allocation2 + $0xd8] sm:$0xff] 0.0
      %86 = vst [vmem:[#allocation2 + $0xe0] sm:$0xff] 0.0
      %87 = vst [vmem:[#allocation2 + $0xe8] sm:$0xff] 0.0
      %88 = vst [vmem:[#allocation2 + $0xf0] sm:$0xff] 0.0
      %89 = vst [vmem:[#allocation2 + $0xf8] sm:$0xff] 0.0
      %90 = vst [vmem:[#allocation2 + $0x100] sm:$0xff] 0.0
      %91 = vst [vmem:[#allocation2 + $0x108] sm:$0xff] 0.0
      %92 = vst [vmem:[#allocation2 + $0x110] sm:$0xff] 0.0
      %93 = vst [vmem:[#allocation2 + $0x118] sm:$0xff] 0.0
      %94 = vst [vmem:[#allocation2 + $0x120] sm:$0xff] 0.0
      %95 = vst [vmem:[#allocation2 + $0x128] sm:$0xff] 0.0
      %96 = vst [vmem:[#allocation2 + $0x130] sm:$0xff] 0.0
      %97 = vst [vmem:[#allocation2 + $0x138] sm:$0xff] 0.0
      %98 = vst [vmem:[#allocation2 + $0x140] sm:$0xff] 0.0
      %99 = vst [vmem:[#allocation2 + $0x148] sm:$0xff] 0.0
      %100 = vst [vmem:[#allocation2 + $0x150] sm:$0xff] 0.0
      %101 = vst [vmem:[#allocation2 + $0x158] sm:$0xff] 0.0
      %102 = vst [vmem:[#allocation2 + $0x160] sm:$0xff] 0.0
      %103 = vst [vmem:[#allocation2 + $0x168] sm:$0xff] 0.0
      %104 = vst [vmem:[#allocation2 + $0x170] sm:$0xff] 0.0
      %105 = vst [vmem:[#allocation2 + $0x178] sm:$0xff] 0.0
      %106 = vst [vmem:[#allocation2 + $0x180] sm:$0xff] 0.0
      %107 = vst [vmem:[#allocation2 + $0x188] sm:$0xff] 0.0
      %108 = vst [vmem:[#allocation2 + $0x190] sm:$0xff] 0.0
      %109 = vst [vmem:[#allocation2 + $0x198] sm:$0xff] 0.0
      %110 = vst [vmem:[#allocation2 + $0x1a0] sm:$0xff] 0.0
      %111 = vst [vmem:[#allocation2 + $0x1a8] sm:$0xff] 0.0
      %112 = vst [vmem:[#allocation2 + $0x1b0] sm:$0xff] 0.0
      %113 = vst [vmem:[#allocation2 + $0x1b8] sm:$0xff] 0.0
      %114 = vst [vmem:[#allocation2 + $0x1c0] sm:$0xff] 0.0
      %115 = vst [vmem:[#allocation2 + $0x1c8] sm:$0xff] 0.0
      %116 = vst [vmem:[#allocation2 + $0x1d0] sm:$0xff] 0.0
      %117 = vst [vmem:[#allocation2 + $0x1d8] sm:$0xff] 0.0
      %118 = vst [vmem:[#allocation2 + $0x1e0] sm:$0xff] 0.0
      %119 = vst [vmem:[#allocation2 + $0x1e8] sm:$0xff] 0.0
      %120 = vst [vmem:[#allocation2 + $0x1f0] sm:$0xff] 0.0
      %121 = vst [vmem:[#allocation2 + $0x1f8] sm:$0xff] 0.0
      %122 = vst [vmem:[#allocation2 + $0x200] sm:$0xff] 0.0
      %123 = vst [vmem:[#allocation2 + $0x208] sm:$0xff] 0.0
      %124 = vst [vmem:[#allocation2 + $0x210] sm:$0xff] 0.0
      %125 = vst [vmem:[#allocation2 + $0x218] sm:$0xff] 0.0
      %126 = vst [vmem:[#allocation2 + $0x220] sm:$0xff] 0.0
      %127 = vst [vmem:[#allocation2 + $0x228] sm:$0xff] 0.0
      %128 = vst [vmem:[#allocation2 + $0x230] sm:$0xff] 0.0
      %129 = vst [vmem:[#allocation2 + $0x238] sm:$0xff] 0.0
      %130 = vst [vmem:[#allocation2 + $0x240] sm:$0xff] 0.0
      %131 = vst [vmem:[#allocation2 + $0x248] sm:$0xff] 0.0
      %132 = vst [vmem:[#allocation2 + $0x250] sm:$0xff] 0.0
      %133 = vst [vmem:[#allocation2 + $0x258] sm:$0xff] 0.0
      %134 = vst [vmem:[#allocation2 + $0x260] sm:$0xff] 0.0
      %135 = vst [vmem:[#allocation2 + $0x268] sm:$0xff] 0.0
      %136 = vst [vmem:[#allocation2 + $0x270] sm:$0xff] 0.0
      %137 = vst [vmem:[#allocation2 + $0x278] sm:$0xff] 0.0
      %138 = vst [vmem:[#allocation2 + $0x280] sm:$0xff] 0.0
      %139 = vst [vmem:[#allocation2 + $0x288] sm:$0xff] 0.0
      %140 = vst [vmem:[#allocation2 + $0x290] sm:$0xff] 0.0
      %141 = vst [vmem:[#allocation2 + $0x298] sm:$0xff] 0.0
      %142 = vst [vmem:[#allocation2 + $0x2a0] sm:$0xff] 0.0
      %143 = vst [vmem:[#allocation2 + $0x2a8] sm:$0xff] 0.0
      %144 = vst [vmem:[#allocation2 + $0x2b0] sm:$0xff] 0.0
      %145 = vst [vmem:[#allocation2 + $0x2b8] sm:$0xff] 0.0
      %146 = vst [vmem:[#allocation2 + $0x2c0] sm:$0xff] 0.0
      %147 = vst [vmem:[#allocation2 + $0x2c8] sm:$0xff] 0.0
      %148 = vst [vmem:[#allocation2 + $0x2d0] sm:$0xff] 0.0
      %149 = vst [vmem:[#allocation2 + $0x2d8] sm:$0xff] 0.0
      %150 = vst [vmem:[#allocation2 + $0x2e0] sm:$0xff] 0.0
      %151 = vst [vmem:[#allocation2 + $0x2e8] sm:$0xff] 0.0
      %152 = vst [vmem:[#allocation2 + $0x2f0] sm:$0xff] 0.0
      %153 = vst [vmem:[#allocation2 + $0x2f8] sm:$0xff] 0.0
      %154 = vst [vmem:[#allocation2 + $0x300] sm:$0xff] 0.0
      %155 = vst [vmem:[#allocation2 + $0x308] sm:$0xff] 0.0
      %156 = vst [vmem:[#allocation2 + $0x310] sm:$0xff] 0.0
      %157 = vst [vmem:[#allocation2 + $0x318] sm:$0xff] 0.0
      %158 = vst [vmem:[#allocation2 + $0x320] sm:$0xff] 0.0
      %159 = vst [vmem:[#allocation2 + $0x328] sm:$0xff] 0.0
      %160 = vst [vmem:[#allocation2 + $0x330] sm:$0xff] 0.0
      %161 = vst [vmem:[#allocation2 + $0x338] sm:$0xff] 0.0
      %162 = vst [vmem:[#allocation2 + $0x340] sm:$0xff] 0.0
      %163 = vst [vmem:[#allocation2 + $0x348] sm:$0xff] 0.0
      %164 = vst [vmem:[#allocation2 + $0x350] sm:$0xff] 0.0
      %165 = vst [vmem:[#allocation2 + $0x358] sm:$0xff] 0.0
      %166 = vst [vmem:[#allocation2 + $0x360] sm:$0xff] 0.0
      %167 = vst [vmem:[#allocation2 + $0x368] sm:$0xff] 0.0
      %168 = vst [vmem:[#allocation2 + $0x370] sm:$0xff] 0.0
      %169 = vst [vmem:[#allocation2 + $0x378] sm:$0xff] 0.0
      %170 = vst [vmem:[#allocation2 + $0x380] sm:$0xff] 0.0
      %171 = vst [vmem:[#allocation2 + $0x388] sm:$0xff] 0.0
      %172 = vst [vmem:[#allocation2 + $0x390] sm:$0xff] 0.0
      %173 = vst [vmem:[#allocation2 + $0x398] sm:$0xff] 0.0
      %174 = vst [vmem:[#allocation2 + $0x3a0] sm:$0xff] 0.0
      %175 = vst [vmem:[#allocation2 + $0x3a8] sm:$0xff] 0.0
      %176 = vst [vmem:[#allocation2 + $0x3b0] sm:$0xff] 0.0
      %177 = vst [vmem:[#allocation2 + $0x3b8] sm:$0xff] 0.0
      %178 = vst [vmem:[#allocation2 + $0x3c0] sm:$0xff] 0.0
      %179 = vst [vmem:[#allocation2 + $0x3c8] sm:$0xff] 0.0
      %180 = vst [vmem:[#allocation2 + $0x3d0] sm:$0xff] 0.0
      %181 = vst [vmem:[#allocation2 + $0x3d8] sm:$0xff] 0.0
      %182 = vst [vmem:[#allocation2 + $0x3e0] sm:$0xff] 0.0
      %183 = vst [vmem:[#allocation2 + $0x3e8] sm:$0xff] 0.0
      %184 = vst [vmem:[#allocation2 + $0x3f0] sm:$0xff] 0.0
      %185 = vst [vmem:[#allocation2 + $0x3f8] sm:$0xff] 0.0
      %186 = vst [vmem:[#allocation2 + $0x400] sm:$0xff] 0.0
      %187 = vst [vmem:[#allocation2 + $0x408] sm:$0xff] 0.0
      %188 = vst [vmem:[#allocation2 + $0x410] sm:$0xff] 0.0
      %189 = vst [vmem:[#allocation2 + $0x418] sm:$0xff] 0.0
      %190 = vst [vmem:[#allocation2 + $0x420] sm:$0xff] 0.0
      %191 = vst [vmem:[#allocation2 + $0x428] sm:$0xff] 0.0
      %192 = vst [vmem:[#allocation2 + $0x430] sm:$0xff] 0.0
      %193 = vst [vmem:[#allocation2 + $0x438] sm:$0xff] 0.0
      %194 = vst [vmem:[#allocation2 + $0x440] sm:$0xff] 0.0
      %195 = vst [vmem:[#allocation2 + $0x448] sm:$0xff] 0.0
      %196 = vst [vmem:[#allocation2 + $0x450] sm:$0xff] 0.0
      %197 = vst [vmem:[#allocation2 + $0x458] sm:$0xff] 0.0
      %198 = vst [vmem:[#allocation2 + $0x460] sm:$0xff] 0.0
      %199 = vst [vmem:[#allocation2 + $0x468] sm:$0xff] 0.0
      %200 = vst [vmem:[#allocation2 + $0x470] sm:$0xff] 0.0
      %201 = vst [vmem:[#allocation2 + $0x478] sm:$0xff] 0.0
      %202 = vst [vmem:[#allocation2 + $0x480] sm:$0xff] 0.0
      %203 = vst [vmem:[#allocation2 + $0x488] sm:$0xff] 0.0
      %204 = vst [vmem:[#allocation2 + $0x490] sm:$0xff] 0.0
      %205 = vst [vmem:[#allocation2 + $0x498] sm:$0xff] 0.0
      %206 = vst [vmem:[#allocation2 + $0x4a0] sm:$0xff] 0.0
      %207 = vst [vmem:[#allocation2 + $0x4a8] sm:$0xff] 0.0
      %208 = vst [vmem:[#allocation2 + $0x4b0] sm:$0xff] 0.0
      %209 = vst [vmem:[#allocation2 + $0x4b8] sm:$0xff] 0.0
      %210 = vst [vmem:[#allocation2 + $0x4c0] sm:$0xff] 0.0
      %211 = vst [vmem:[#allocation2 + $0x4c8] sm:$0xff] 0.0
      %212 = vst [vmem:[#allocation2 + $0x4d0] sm:$0xff] 0.0
      %213 = vst [vmem:[#allocation2 + $0x4d8] sm:$0xff] 0.0
      %214 = vst [vmem:[#allocation2 + $0x4e0] sm:$0xff] 0.0
      %215 = vst [vmem:[#allocation2 + $0x4e8] sm:$0xff] 0.0
      %216 = vst [vmem:[#allocation2 + $0x4f0] sm:$0xff] 0.0
      %217 = vst [vmem:[#allocation2 + $0x4f8] sm:$0xff] 0.0
      %218 = vst [vmem:[#allocation2 + $0x500] sm:$0xff] 0.0
      %219 = vst [vmem:[#allocation2 + $0x508] sm:$0xff] 0.0
      %220 = vst [vmem:[#allocation2 + $0x510] sm:$0xff] 0.0
      %221 = vst [vmem:[#allocation2 + $0x518] sm:$0xff] 0.0
      %222 = vst [vmem:[#allocation2 + $0x520] sm:$0xff] 0.0
      %223 = vst [vmem:[#allocation2 + $0x528] sm:$0xff] 0.0
      %224 = vst [vmem:[#allocation2 + $0x530] sm:$0xff] 0.0
      %225 = vst [vmem:[#allocation2 + $0x538] sm:$0xff] 0.0
      %226 = vst [vmem:[#allocation2 + $0x540] sm:$0xff] 0.0
      %227 = vst [vmem:[#allocation2 + $0x548] sm:$0xff] 0.0
      %228 = vst [vmem:[#allocation2 + $0x550] sm:$0xff] 0.0
      %229 = vst [vmem:[#allocation2 + $0x558] sm:$0xff] 0.0
      %230 = vst [vmem:[#allocation2 + $0x560] sm:$0xff] 0.0
      %231 = vst [vmem:[#allocation2 + $0x568] sm:$0xff] 0.0
      %232 = vst [vmem:[#allocation2 + $0x570] sm:$0xff] 0.0
      %233 = vst [vmem:[#allocation2 + $0x578] sm:$0xff] 0.0
      %234 = vst [vmem:[#allocation2 + $0x580] sm:$0xff] 0.0
      %235 = vst [vmem:[#allocation2 + $0x588] sm:$0xff] 0.0
      %236 = vst [vmem:[#allocation2 + $0x590] sm:$0xff] 0.0
      %237 = vst [vmem:[#allocation2 + $0x598] sm:$0xff] 0.0
      %238 = vst [vmem:[#allocation2 + $0x5a0] sm:$0xff] 0.0
      %239 = vst [vmem:[#allocation2 + $0x5a8] sm:$0xff] 0.0
      %240 = vst [vmem:[#allocation2 + $0x5b0] sm:$0xff] 0.0
      %241 = vst [vmem:[#allocation2 + $0x5b8] sm:$0xff] 0.0
      %242 = vst [vmem:[#allocation2 + $0x5c0] sm:$0xff] 0.0
      %243 = vst [vmem:[#allocation2 + $0x5c8] sm:$0xff] 0.0
      %244 = vst [vmem:[#allocation2 + $0x5d0] sm:$0xff] 0.0
      %245 = vst [vmem:[#allocation2 + $0x5d8] sm:$0xff] 0.0
      %246 = vst [vmem:[#allocation2 + $0x5e0] sm:$0xff] 0.0
      %247 = vst [vmem:[#allocation2 + $0x5e8] sm:$0xff] 0.0
      %248 = vst [vmem:[#allocation2 + $0x5f0] sm:$0xff] 0.0
      %249 = vst [vmem:[#allocation2 + $0x5f8] sm:$0xff] 0.0
    $region29: #{tpu_custom_call.1} parent=1 // pred_fallthru
      _
    %v250 = vld [vmem:[#allocation2] sm:$0xff]
    %v251 = vld [vmem:[#allocation2 + $0x8] sm:$0xff]
    %v252 = vld [vmem:[#allocation2 + $0x10] sm:$0xff]
    %v253 = vld [vmem:[#allocation2 + $0x18] sm:$0xff]
    %v254 = vld [vmem:[#allocation2 + $0x20] sm:$0xff]
    %v255 = vld [vmem:[#allocation2 + $0x28] sm:$0xff]
    %v256 = vld [vmem:[#allocation2 + $0x30] sm:$0xff]
    %v257 = vld [vmem:[#allocation2 + $0x38] sm:$0xff]
    %v258 = vld [vmem:[#allocation2 + $0x40] sm:$0xff]
    %v259 = vld [vmem:[#allocation2 + $0x48] sm:$0xff]
    %v260 = vld [vmem:[#allocation2 + $0x50] sm:$0xff]
    %v261 = vld [vmem:[#allocation2 + $0x58] sm:$0xff]
    %v262 = vld [vmem:[#allocation2 + $0x60] sm:$0xff]
    %v263 = vld [vmem:[#allocation2 + $0x68] sm:$0xff]
    %v264 = vld [vmem:[#allocation2 + $0x70] sm:$0xff]
    %v265 = vld [vmem:[#allocation2 + $0x78] sm:$0xff]
    %v266 = vld [vmem:[#allocation2 + $0x80] sm:$0xff]
    %v267 = vld [vmem:[#allocation2 + $0x88] sm:$0xff]
    %v268 = vld [vmem:[#allocation2 + $0x90] sm:$0xff]
    %v269 = vld [vmem:[#allocation2 + $0x98] sm:$0xff]
    %v270 = vld [vmem:[#allocation2 + $0xa0] sm:$0xff]
    %v271 = vld [vmem:[#allocation2 + $0xa8] sm:$0xff]
    %v272 = vld [vmem:[#allocation2 + $0xb0] sm:$0xff]
    %v273 = vld [vmem:[#allocation2 + $0xb8] sm:$0xff]
    %v274 = vld [vmem:[#allocation2 + $0xc0] sm:$0xff]
    %v275 = vld [vmem:[#allocation2 + $0xc8] sm:$0xff]
    %v276 = vld [vmem:[#allocation2 + $0xd0] sm:$0xff]
    %v277 = vld [vmem:[#allocation2 + $0xd8] sm:$0xff]
    %v278 = vld [vmem:[#allocation2 + $0xe0] sm:$0xff]
    %v279 = vld [vmem:[#allocation2 + $0xe8] sm:$0xff]
    %v280 = vld [vmem:[#allocation2 + $0xf0] sm:$0xff]
    %v281 = vld [vmem:[#allocation2 + $0xf8] sm:$0xff]
    %v282 = vld [vmem:[#allocation2 + $0x100] sm:$0xff]
    %v283 = vld [vmem:[#allocation2 + $0x108] sm:$0xff]
    %v284 = vld [vmem:[#allocation2 + $0x110] sm:$0xff]
    %v285 = vld [vmem:[#allocation2 + $0x118] sm:$0xff]
    %v286 = vld [vmem:[#allocation2 + $0x120] sm:$0xff]
    %v287 = vld [vmem:[#allocation2 + $0x128] sm:$0xff]
    %v288 = vld [vmem:[#allocation2 + $0x130] sm:$0xff]
    %v289 = vld [vmem:[#allocation2 + $0x138] sm:$0xff]
    %v290 = vld [vmem:[#allocation2 + $0x140] sm:$0xff]
    %v291 = vld [vmem:[#allocation2 + $0x148] sm:$0xff]
    %v292 = vld [vmem:[#allocation2 + $0x150] sm:$0xff]
    %v293 = vld [vmem:[#allocation2 + $0x158] sm:$0xff]
    %v294 = vld [vmem:[#allocation2 + $0x160] sm:$0xff]
    %v295 = vld [vmem:[#allocation2 + $0x168] sm:$0xff]
    %v296 = vld [vmem:[#allocation2 + $0x170] sm:$0xff]
    %v297 = vld [vmem:[#allocation2 + $0x178] sm:$0xff]
    %v298 = vld [vmem:[#allocation2 + $0x180] sm:$0xff]
    %v299 = vld [vmem:[#allocation2 + $0x188] sm:$0xff]
    %v300 = vld [vmem:[#allocation2 + $0x190] sm:$0xff]
    %v301 = vld [vmem:[#allocation2 + $0x198] sm:$0xff]
    %v302 = vld [vmem:[#allocation2 + $0x1a0] sm:$0xff]
    %v303 = vld [vmem:[#allocation2 + $0x1a8] sm:$0xff]
    %v304 = vld [vmem:[#allocation2 + $0x1b0] sm:$0xff]
    %v305 = vld [vmem:[#allocation2 + $0x1b8] sm:$0xff]
    %v306 = vld [vmem:[#allocation2 + $0x1c0] sm:$0xff]
    %v307 = vld [vmem:[#allocation2 + $0x1c8] sm:$0xff]
    %v308 = vld [vmem:[#allocation2 + $0x1d0] sm:$0xff]
    %v309 = vld [vmem:[#allocation2 + $0x1d8] sm:$0xff]
    %v310 = vld [vmem:[#allocation2 + $0x1e0] sm:$0xff]
    %v311 = vld [vmem:[#allocation2 + $0x1e8] sm:$0xff]
    %v312 = vld [vmem:[#allocation2 + $0x1f0] sm:$0xff]
    %v313 = vld [vmem:[#allocation2 + $0x1f8] sm:$0xff]
    %v314 = vld [vmem:[#allocation2 + $0x200] sm:$0xff]
    %v315 = vld [vmem:[#allocation2 + $0x208] sm:$0xff]
    %v316 = vld [vmem:[#allocation2 + $0x210] sm:$0xff]
    %v317 = vld [vmem:[#allocation2 + $0x218] sm:$0xff]
    %v318 = vld [vmem:[#allocation2 + $0x220] sm:$0xff]
    %v319 = vld [vmem:[#allocation2 + $0x228] sm:$0xff]
    %v320 = vld [vmem:[#allocation2 + $0x230] sm:$0xff]
    %v321 = vld [vmem:[#allocation2 + $0x238] sm:$0xff]
    %v322 = vld [vmem:[#allocation2 + $0x240] sm:$0xff]
    %v323 = vld [vmem:[#allocation2 + $0x248] sm:$0xff]
    %v324 = vld [vmem:[#allocation2 + $0x250] sm:$0xff]
    %v325 = vld [vmem:[#allocation2 + $0x258] sm:$0xff]
    %v326 = vld [vmem:[#allocation2 + $0x260] sm:$0xff]
    %v327 = vld [vmem:[#allocation2 + $0x268] sm:$0xff]
    %v328 = vld [vmem:[#allocation2 + $0x270] sm:$0xff]
    %v329 = vld [vmem:[#allocation2 + $0x278] sm:$0xff]
    %v330 = vld [vmem:[#allocation2 + $0x280] sm:$0xff]
    %v331 = vld [vmem:[#allocation2 + $0x288] sm:$0xff]
    %v332 = vld [vmem:[#allocation2 + $0x290] sm:$0xff]
    %v333 = vld [vmem:[#allocation2 + $0x298] sm:$0xff]
    %v334 = vld [vmem:[#allocation2 + $0x2a0] sm:$0xff]
    %v335 = vld [vmem:[#allocation2 + $0x2a8] sm:$0xff]
    %v336 = vld [vmem:[#allocation2 + $0x2b0] sm:$0xff]
    %v337 = vld [vmem:[#allocation2 + $0x2b8] sm:$0xff]
    %v338 = vld [vmem:[#allocation2 + $0x2c0] sm:$0xff]
    %v339 = vld [vmem:[#allocation2 + $0x2c8] sm:$0xff]
    %v340 = vld [vmem:[#allocation2 + $0x2d0] sm:$0xff]
    %v341 = vld [vmem:[#allocation2 + $0x2d8] sm:$0xff]
    %v342 = vld [vmem:[#allocation2 + $0x2e0] sm:$0xff]
    %v343 = vld [vmem:[#allocation2 + $0x2e8] sm:$0xff]
    %v344 = vld [vmem:[#allocation2 + $0x2f0] sm:$0xff]
    %v345 = vld [vmem:[#allocation2 + $0x2f8] sm:$0xff]
    %v346 = vld [vmem:[#allocation2 + $0x300] sm:$0xff]
    %v347 = vld [vmem:[#allocation2 + $0x308] sm:$0xff]
    %v348 = vld [vmem:[#allocation2 + $0x310] sm:$0xff]
    %v349 = vld [vmem:[#allocation2 + $0x318] sm:$0xff]
    %v350 = vld [vmem:[#allocation2 + $0x320] sm:$0xff]
    %v351 = vld [vmem:[#allocation2 + $0x328] sm:$0xff]
    %v352 = vld [vmem:[#allocation2 + $0x330] sm:$0xff]
    %v353 = vld [vmem:[#allocation2 + $0x338] sm:$0xff]
    %v354 = vld [vmem:[#allocation2 + $0x340] sm:$0xff]
    %v355 = vld [vmem:[#allocation2 + $0x348] sm:$0xff]
    %v356 = vld [vmem:[#allocation2 + $0x350] sm:$0xff]
    %v357 = vld [vmem:[#allocation2 + $0x358] sm:$0xff]
    %v358 = vld [vmem:[#allocation2 + $0x360] sm:$0xff]
    %v359 = vld [vmem:[#allocation2 + $0x368] sm:$0xff]
    %v360 = vld [vmem:[#allocation2 + $0x370] sm:$0xff]
    %v361 = vld [vmem:[#allocation2 + $0x378] sm:$0xff]
    %v362 = vld [vmem:[#allocation2 + $0x380] sm:$0xff]
    %v363 = vld [vmem:[#allocation2 + $0x388] sm:$0xff]
    %v364 = vld [vmem:[#allocation2 + $0x390] sm:$0xff]
    %v365 = vld [vmem:[#allocation2 + $0x398] sm:$0xff]
    %v366 = vld [vmem:[#allocation2 + $0x3a0] sm:$0xff]
    %v367 = vld [vmem:[#allocation2 + $0x3a8] sm:$0xff]
    %v368 = vld [vmem:[#allocation2 + $0x3b0] sm:$0xff]
    %v369 = vld [vmem:[#allocation2 + $0x3b8] sm:$0xff]
    %v370 = vld [vmem:[#allocation2 + $0x3c0] sm:$0xff]
    %v371 = vld [vmem:[#allocation2 + $0x3c8] sm:$0xff]
    %v372 = vld [vmem:[#allocation2 + $0x3d0] sm:$0xff]
    %v373 = vld [vmem:[#allocation2 + $0x3d8] sm:$0xff]
    %v374 = vld [vmem:[#allocation2 + $0x3e0] sm:$0xff]
    %v375 = vld [vmem:[#allocation2 + $0x3e8] sm:$0xff]
    %v376 = vld [vmem:[#allocation2 + $0x3f0] sm:$0xff]
    %v377 = vld [vmem:[#allocation2 + $0x3f8] sm:$0xff]
    %v378 = vld [vmem:[#allocation2 + $0x400] sm:$0xff]
    %v379 = vld [vmem:[#allocation2 + $0x408] sm:$0xff]
    %v380 = vld [vmem:[#allocation2 + $0x410] sm:$0xff]
    %v381 = vld [vmem:[#allocation2 + $0x418] sm:$0xff]
    %v382 = vld [vmem:[#allocation2 + $0x420] sm:$0xff]
    %v383 = vld [vmem:[#allocation2 + $0x428] sm:$0xff]
    %v384 = vld [vmem:[#allocation2 + $0x430] sm:$0xff]
    %v385 = vld [vmem:[#allocation2 + $0x438] sm:$0xff]
    %v386 = vld [vmem:[#allocation2 + $0x440] sm:$0xff]
    %v387 = vld [vmem:[#allocation2 + $0x448] sm:$0xff]
    %v388 = vld [vmem:[#allocation2 + $0x450] sm:$0xff]
    %v389 = vld [vmem:[#allocation2 + $0x458] sm:$0xff]
    %v390 = vld [vmem:[#allocation2 + $0x460] sm:$0xff]
    %v391 = vld [vmem:[#allocation2 + $0x468] sm:$0xff]
    %v392 = vld [vmem:[#allocation2 + $0x470] sm:$0xff]
    %v393 = vld [vmem:[#allocation2 + $0x478] sm:$0xff]
    %v394 = vld [vmem:[#allocation2 + $0x480] sm:$0xff]
    %v395 = vld [vmem:[#allocation2 + $0x488] sm:$0xff]
    %v396 = vld [vmem:[#allocation2 + $0x490] sm:$0xff]
    %v397 = vld [vmem:[#allocation2 + $0x498] sm:$0xff]
    %v398 = vld [vmem:[#allocation2 + $0x4a0] sm:$0xff]
    %v399 = vld [vmem:[#allocation2 + $0x4a8] sm:$0xff]
    %v400 = vld [vmem:[#allocation2 + $0x4b0] sm:$0xff]
    %v401 = vld [vmem:[#allocation2 + $0x4b8] sm:$0xff]
    %v402 = vld [vmem:[#allocation2 + $0x4c0] sm:$0xff]
    %v403 = vld [vmem:[#allocation2 + $0x4c8] sm:$0xff]
    %v404 = vld [vmem:[#allocation2 + $0x4d0] sm:$0xff]
    %v405 = vld [vmem:[#allocation2 + $0x4d8] sm:$0xff]
    %v406 = vld [vmem:[#allocation2 + $0x4e0] sm:$0xff]
    %v407 = vld [vmem:[#allocation2 + $0x4e8] sm:$0xff]
    %v408 = vld [vmem:[#allocation2 + $0x4f0] sm:$0xff]
    %v409 = vld [vmem:[#allocation2 + $0x4f8] sm:$0xff]
    %v410 = vld [vmem:[#allocation2 + $0x500] sm:$0xff]
    %v411 = vld [vmem:[#allocation2 + $0x508] sm:$0xff]
    %v412 = vld [vmem:[#allocation2 + $0x510] sm:$0xff]
    %v413 = vld [vmem:[#allocation2 + $0x518] sm:$0xff]
    %v414 = vld [vmem:[#allocation2 + $0x520] sm:$0xff]
    %v415 = vld [vmem:[#allocation2 + $0x528] sm:$0xff]
    %v416 = vld [vmem:[#allocation2 + $0x530] sm:$0xff]
    %v417 = vld [vmem:[#allocation2 + $0x538] sm:$0xff]
    %v418 = vld [vmem:[#allocation2 + $0x540] sm:$0xff]
    %v419 = vld [vmem:[#allocation2 + $0x548] sm:$0xff]
    %v420 = vld [vmem:[#allocation2 + $0x550] sm:$0xff]
    %v421 = vld [vmem:[#allocation2 + $0x558] sm:$0xff]
    %v422 = vld [vmem:[#allocation2 + $0x560] sm:$0xff]
    %v423 = vld [vmem:[#allocation2 + $0x568] sm:$0xff]
    %v424 = vld [vmem:[#allocation2 + $0x570] sm:$0xff]
    %v425 = vld [vmem:[#allocation2 + $0x578] sm:$0xff]
    %v426 = vld [vmem:[#allocation2 + $0x580] sm:$0xff]
    %v427 = vld [vmem:[#allocation2 + $0x588] sm:$0xff]
    %v428 = vld [vmem:[#allocation2 + $0x590] sm:$0xff]
    %v429 = vld [vmem:[#allocation2 + $0x598] sm:$0xff]
    %v430 = vld [vmem:[#allocation2 + $0x5a0] sm:$0xff]
    %v431 = vld [vmem:[#allocation2 + $0x5a8] sm:$0xff]
    %v432 = vld [vmem:[#allocation2 + $0x5b0] sm:$0xff]
    %v433 = vld [vmem:[#allocation2 + $0x5b8] sm:$0xff]
    %v434 = vld [vmem:[#allocation2 + $0x5c0] sm:$0xff]
    %v435 = vld [vmem:[#allocation2 + $0x5c8] sm:$0xff]
    %v436 = vld [vmem:[#allocation2 + $0x5d0] sm:$0xff]
    %v437 = vld [vmem:[#allocation2 + $0x5d8] sm:$0xff]
    %v438 = vld [vmem:[#allocation2 + $0x5e0] sm:$0xff]
    %v439 = vld [vmem:[#allocation2 + $0x5e8] sm:$0xff]
    %v440 = vld [vmem:[#allocation2 + $0x5f0] sm:$0xff]
    %v441 = vld [vmem:[#allocation2 + $0x5f8] sm:$0xff]
    %v442 = vld [vmem:[#allocation3] sm:$0xff]
    %v443 = vld [vmem:[#allocation3 + $0x8] sm:$0xff]
    %v444 = vld [vmem:[#allocation3 + $0x10] sm:$0xff]
    %v445 = vld [vmem:[#allocation3 + $0x18] sm:$0xff]
    %v446 = vld [vmem:[#allocation3 + $0x20] sm:$0xff]
    %v447 = vld [vmem:[#allocation3 + $0x28] sm:$0xff]
    %v448 = vld [vmem:[#allocation3 + $0x30] sm:$0xff]
    %v449 = vld [vmem:[#allocation3 + $0x38] sm:$0xff]
    %v450 = vld [vmem:[#allocation3 + $0x40] sm:$0xff]
    %v451 = vld [vmem:[#allocation3 + $0x48] sm:$0xff]
    %v452 = vld [vmem:[#allocation3 + $0x50] sm:$0xff]
    %v453 = vld [vmem:[#allocation3 + $0x58] sm:$0xff]
    %v454 = vld [vmem:[#allocation3 + $0x60] sm:$0xff]
    %v455 = vld [vmem:[#allocation3 + $0x68] sm:$0xff]
    %v456 = vld [vmem:[#allocation3 + $0x70] sm:$0xff]
    %v457 = vld [vmem:[#allocation3 + $0x78] sm:$0xff]
    %v458 = vld [vmem:[#allocation3 + $0x80] sm:$0xff]
    %v459 = vld [vmem:[#allocation3 + $0x88] sm:$0xff]
    %v460 = vld [vmem:[#allocation3 + $0x90] sm:$0xff]
    %v461 = vld [vmem:[#allocation3 + $0x98] sm:$0xff]
    %v462 = vld [vmem:[#allocation3 + $0xa0] sm:$0xff]
    %v463 = vld [vmem:[#allocation3 + $0xa8] sm:$0xff]
    %v464 = vld [vmem:[#allocation3 + $0xb0] sm:$0xff]
    %v465 = vld [vmem:[#allocation3 + $0xb8] sm:$0xff]
    %v466 = vld [vmem:[#allocation3 + $0xc0] sm:$0xff]
    %v467 = vld [vmem:[#allocation3 + $0xc8] sm:$0xff]
    %v468 = vld [vmem:[#allocation3 + $0xd0] sm:$0xff]
    %v469 = vld [vmem:[#allocation3 + $0xd8] sm:$0xff]
    %v470 = vld [vmem:[#allocation3 + $0xe0] sm:$0xff]
    %v471 = vld [vmem:[#allocation3 + $0xe8] sm:$0xff]
    %v472 = vld [vmem:[#allocation3 + $0xf0] sm:$0xff]
    %v473 = vld [vmem:[#allocation3 + $0xf8] sm:$0xff]
    %v474 = vld [vmem:[#allocation3 + $0x100] sm:$0xff]
    %v475 = vld [vmem:[#allocation3 + $0x108] sm:$0xff]
    %v476 = vld [vmem:[#allocation3 + $0x110] sm:$0xff]
    %v477 = vld [vmem:[#allocation3 + $0x118] sm:$0xff]
    %v478 = vld [vmem:[#allocation3 + $0x120] sm:$0xff]
    %v479 = vld [vmem:[#allocation3 + $0x128] sm:$0xff]
    %v480 = vld [vmem:[#allocation3 + $0x130] sm:$0xff]
    %v481 = vld [vmem:[#allocation3 + $0x138] sm:$0xff]
    %v482 = vld [vmem:[#allocation3 + $0x140] sm:$0xff]
    %v483 = vld [vmem:[#allocation3 + $0x148] sm:$0xff]
    %v484 = vld [vmem:[#allocation3 + $0x150] sm:$0xff]
    %v485 = vld [vmem:[#allocation3 + $0x158] sm:$0xff]
    %v486 = vld [vmem:[#allocation3 + $0x160] sm:$0xff]
    %v487 = vld [vmem:[#allocation3 + $0x168] sm:$0xff]
    %v488 = vld [vmem:[#allocation3 + $0x170] sm:$0xff]
    %v489 = vld [vmem:[#allocation3 + $0x178] sm:$0xff]
    %v490 = vld [vmem:[#allocation3 + $0x180] sm:$0xff]
    %v491 = vld [vmem:[#allocation3 + $0x188] sm:$0xff]
    %v492 = vld [vmem:[#allocation3 + $0x190] sm:$0xff]
    %v493 = vld [vmem:[#allocation3 + $0x198] sm:$0xff]
    %v494 = vld [vmem:[#allocation3 + $0x1a0] sm:$0xff]
    %v495 = vld [vmem:[#allocation3 + $0x1a8] sm:$0xff]
    %v496 = vld [vmem:[#allocation3 + $0x1b0] sm:$0xff]
    %v497 = vld [vmem:[#allocation3 + $0x1b8] sm:$0xff]
    %v498 = vld [vmem:[#allocation3 + $0x1c0] sm:$0xff]
    %v499 = vld [vmem:[#allocation3 + $0x1c8] sm:$0xff]
    %v500 = vld [vmem:[#allocation3 + $0x1d0] sm:$0xff]
    %v501 = vld [vmem:[#allocation3 + $0x1d8] sm:$0xff]
    %v502 = vld [vmem:[#allocation3 + $0x1e0] sm:$0xff]
    %v503 = vld [vmem:[#allocation3 + $0x1e8] sm:$0xff]
    %v504 = vld [vmem:[#allocation3 + $0x1f0] sm:$0xff]
    %v505 = vld [vmem:[#allocation3 + $0x1f8] sm:$0xff]
    %v506 = vpack.c.bf16 %v444, %v442
    %v507 = vpack.c.bf16 %v445, %v443
    %v508 = vpack.c.bf16 %v448, %v446
    %v509 = vpack.c.bf16 %v449, %v447
    %v510 = vpack.c.bf16 %v452, %v450
    %v511 = vpack.c.bf16 %v453, %v451
    %v512 = vpack.c.bf16 %v456, %v454
    %v513 = vpack.c.bf16 %v457, %v455
    %v514 = vpack.c.bf16 %v460, %v458
    %v515 = vpack.c.bf16 %v461, %v459
    %v516 = vpack.c.bf16 %v464, %v462
    %v517 = vpack.c.bf16 %v465, %v463
    %v518 = vpack.c.bf16 %v468, %v466
    %v519 = vpack.c.bf16 %v469, %v467
    %v520 = vpack.c.bf16 %v472, %v470
    %v521 = vpack.c.bf16 %v473, %v471
    %v522 = vpack.c.bf16 %v476, %v474
    %v523 = vpack.c.bf16 %v477, %v475
    %v524 = vpack.c.bf16 %v480, %v478
    %v525 = vpack.c.bf16 %v481, %v479
    %v526 = vpack.c.bf16 %v484, %v482
    %v527 = vpack.c.bf16 %v485, %v483
    %v528 = vpack.c.bf16 %v488, %v486
    %v529 = vpack.c.bf16 %v489, %v487
    %v530 = vpack.c.bf16 %v492, %v490
    %v531 = vpack.c.bf16 %v493, %v491
    %v532 = vpack.c.bf16 %v496, %v494
    %v533 = vpack.c.bf16 %v497, %v495
    %v534 = vpack.c.bf16 %v500, %v498
    %v535 = vpack.c.bf16 %v501, %v499
    %v536 = vpack.c.bf16 %v504, %v502
    %v537 = vpack.c.bf16 %v505, %v503
    %v538 = vld [vmem:[#allocation6] sm:$0xff]
    %v539 = vld [vmem:[#allocation6 + $0x8] sm:$0xff]
    %v540 = vld [vmem:[#allocation6 + $0x10] sm:$0xff]
    %v541 = vld [vmem:[#allocation6 + $0x18] sm:$0xff]
    %v542 = vld [vmem:[#allocation6 + $0x20] sm:$0xff]
    %v543 = vld [vmem:[#allocation6 + $0x28] sm:$0xff]
    %v544 = vld [vmem:[#allocation6 + $0x30] sm:$0xff]
    %v545 = vld [vmem:[#allocation6 + $0x38] sm:$0xff]
    %v546 = vld [vmem:[#allocation6 + $0x40] sm:$0xff]
    %v547 = vld [vmem:[#allocation6 + $0x48] sm:$0xff]
    %v548 = vld [vmem:[#allocation6 + $0x50] sm:$0xff]
    %v549 = vld [vmem:[#allocation6 + $0x58] sm:$0xff]
    %v550 = vld [vmem:[#allocation6 + $0x60] sm:$0xff]
    %v551 = vld [vmem:[#allocation6 + $0x68] sm:$0xff]
    %v552 = vld [vmem:[#allocation6 + $0x70] sm:$0xff]
    %v553 = vld [vmem:[#allocation6 + $0x78] sm:$0xff]
    %v554 = vld [vmem:[#allocation6 + $0x80] sm:$0xff]
    %v555 = vld [vmem:[#allocation6 + $0x88] sm:$0xff]
    %v556 = vld [vmem:[#allocation6 + $0x90] sm:$0xff]
    %v557 = vld [vmem:[#allocation6 + $0x98] sm:$0xff]
    %v558 = vld [vmem:[#allocation6 + $0xa0] sm:$0xff]
    %v559 = vld [vmem:[#allocation6 + $0xa8] sm:$0xff]
    %v560 = vld [vmem:[#allocation6 + $0xb0] sm:$0xff]
    %v561 = vld [vmem:[#allocation6 + $0xb8] sm:$0xff]
    %v562 = vld [vmem:[#allocation6 + $0xc0] sm:$0xff]
    %v563 = vld [vmem:[#allocation6 + $0xc8] sm:$0xff]
    %v564 = vld [vmem:[#allocation6 + $0xd0] sm:$0xff]
    %v565 = vld [vmem:[#allocation6 + $0xd8] sm:$0xff]
    %v566 = vld [vmem:[#allocation6 + $0xe0] sm:$0xff]
    %v567 = vld [vmem:[#allocation6 + $0xe8] sm:$0xff]
    %v568 = vld [vmem:[#allocation6 + $0xf0] sm:$0xff]
    %v569 = vld [vmem:[#allocation6 + $0xf8] sm:$0xff]
    %v570 = vld [vmem:[#allocation6 + $0x100] sm:$0xff]
    %v571 = vld [vmem:[#allocation6 + $0x108] sm:$0xff]
    %v572 = vld [vmem:[#allocation6 + $0x110] sm:$0xff]
    %v573 = vld [vmem:[#allocation6 + $0x118] sm:$0xff]
    %v574 = vld [vmem:[#allocation6 + $0x120] sm:$0xff]
    %v575 = vld [vmem:[#allocation6 + $0x128] sm:$0xff]
    %v576 = vld [vmem:[#allocation6 + $0x130] sm:$0xff]
    %v577 = vld [vmem:[#allocation6 + $0x138] sm:$0xff]
    %v578 = vld [vmem:[#allocation6 + $0x140] sm:$0xff]
    %v579 = vld [vmem:[#allocation6 + $0x148] sm:$0xff]
    %v580 = vld [vmem:[#allocation6 + $0x150] sm:$0xff]
    %v581 = vld [vmem:[#allocation6 + $0x158] sm:$0xff]
    %v582 = vld [vmem:[#allocation6 + $0x160] sm:$0xff]
    %v583 = vld [vmem:[#allocation6 + $0x168] sm:$0xff]
    %v584 = vld [vmem:[#allocation6 + $0x170] sm:$0xff]
    %v585 = vld [vmem:[#allocation6 + $0x178] sm:$0xff]
    %v586 = vld [vmem:[#allocation6 + $0x180] sm:$0xff]
    %v587 = vld [vmem:[#allocation6 + $0x188] sm:$0xff]
    %v588 = vld [vmem:[#allocation6 + $0x190] sm:$0xff]
    %v589 = vld [vmem:[#allocation6 + $0x198] sm:$0xff]
    %v590 = vld [vmem:[#allocation6 + $0x1a0] sm:$0xff]
    %v591 = vld [vmem:[#allocation6 + $0x1a8] sm:$0xff]
    %v592 = vld [vmem:[#allocation6 + $0x1b0] sm:$0xff]
    %v593 = vld [vmem:[#allocation6 + $0x1b8] sm:$0xff]
    %v594 = vld [vmem:[#allocation6 + $0x1c0] sm:$0xff]
    %v595 = vld [vmem:[#allocation6 + $0x1c8] sm:$0xff]
    %v596 = vld [vmem:[#allocation6 + $0x1d0] sm:$0xff]
    %v597 = vld [vmem:[#allocation6 + $0x1d8] sm:$0xff]
    %v598 = vld [vmem:[#allocation6 + $0x1e0] sm:$0xff]
    %v599 = vld [vmem:[#allocation6 + $0x1e8] sm:$0xff]
    %v600 = vld [vmem:[#allocation6 + $0x1f0] sm:$0xff]
    %v601 = vld [vmem:[#allocation6 + $0x1f8] sm:$0xff]
    %v602 = vld [vmem:[#allocation6 + $0x200] sm:$0xff]
    %v603 = vld [vmem:[#allocation6 + $0x208] sm:$0xff]
    %v604 = vld [vmem:[#allocation6 + $0x210] sm:$0xff]
    %v605 = vld [vmem:[#allocation6 + $0x218] sm:$0xff]
    %v606 = vld [vmem:[#allocation6 + $0x220] sm:$0xff]
    %v607 = vld [vmem:[#allocation6 + $0x228] sm:$0xff]
    %v608 = vld [vmem:[#allocation6 + $0x230] sm:$0xff]
    %v609 = vld [vmem:[#allocation6 + $0x238] sm:$0xff]
    %v610 = vld [vmem:[#allocation6 + $0x240] sm:$0xff]
    %v611 = vld [vmem:[#allocation6 + $0x248] sm:$0xff]
    %v612 = vld [vmem:[#allocation6 + $0x250] sm:$0xff]
    %v613 = vld [vmem:[#allocation6 + $0x258] sm:$0xff]
    %v614 = vld [vmem:[#allocation6 + $0x260] sm:$0xff]
    %v615 = vld [vmem:[#allocation6 + $0x268] sm:$0xff]
    %v616 = vld [vmem:[#allocation6 + $0x270] sm:$0xff]
    %v617 = vld [vmem:[#allocation6 + $0x278] sm:$0xff]
    %v618 = vld [vmem:[#allocation6 + $0x280] sm:$0xff]
    %v619 = vld [vmem:[#allocation6 + $0x288] sm:$0xff]
    %v620 = vld [vmem:[#allocation6 + $0x290] sm:$0xff]
    %v621 = vld [vmem:[#allocation6 + $0x298] sm:$0xff]
    %v622 = vld [vmem:[#allocation6 + $0x2a0] sm:$0xff]
    %v623 = vld [vmem:[#allocation6 + $0x2a8] sm:$0xff]
    %v624 = vld [vmem:[#allocation6 + $0x2b0] sm:$0xff]
    %v625 = vld [vmem:[#allocation6 + $0x2b8] sm:$0xff]
    %v626 = vld [vmem:[#allocation6 + $0x2c0] sm:$0xff]
    %v627 = vld [vmem:[#allocation6 + $0x2c8] sm:$0xff]
    %v628 = vld [vmem:[#allocation6 + $0x2d0] sm:$0xff]
    %v629 = vld [vmem:[#allocation6 + $0x2d8] sm:$0xff]
    %v630 = vld [vmem:[#allocation6 + $0x2e0] sm:$0xff]
    %v631 = vld [vmem:[#allocation6 + $0x2e8] sm:$0xff]
    %v632 = vld [vmem:[#allocation6 + $0x2f0] sm:$0xff]
    %v633 = vld [vmem:[#allocation6 + $0x2f8] sm:$0xff]
    %v730 = vunpack.c.l.b16 %v538
    %v731 = vunpack.c.h.b16 %v538
    %v732 = vunpack.c.l.b16 %v539
    %v733 = vunpack.c.h.b16 %v539
    %v734 = vunpack.c.l.b16 %v540
    %v735 = vunpack.c.h.b16 %v540
    %v736 = vunpack.c.l.b16 %v541
    %v737 = vunpack.c.h.b16 %v541
    %v738 = vunpack.c.l.b16 %v542
    %v739 = vunpack.c.h.b16 %v542
    %v740 = vunpack.c.l.b16 %v543
    %v741 = vunpack.c.h.b16 %v543
    %v742 = vunpack.c.l.b16 %v544
    %v743 = vunpack.c.h.b16 %v544
    %v744 = vunpack.c.l.b16 %v545
    %v745 = vunpack.c.h.b16 %v545
    %v746 = vunpack.c.l.b16 %v546
    %v747 = vunpack.c.h.b16 %v546
    %v748 = vunpack.c.l.b16 %v547
    %v749 = vunpack.c.h.b16 %v547
    %v750 = vunpack.c.l.b16 %v548
    %v751 = vunpack.c.h.b16 %v548
    %v752 = vunpack.c.l.b16 %v549
    %v753 = vunpack.c.h.b16 %v549
    %v754 = vunpack.c.l.b16 %v550
    %v755 = vunpack.c.h.b16 %v550
    %v756 = vunpack.c.l.b16 %v551
    %v757 = vunpack.c.h.b16 %v551
    %v758 = vunpack.c.l.b16 %v552
    %v759 = vunpack.c.h.b16 %v552
    %v760 = vunpack.c.l.b16 %v553
    %v761 = vunpack.c.h.b16 %v553
    %v762 = vunpack.c.l.b16 %v554
    %v763 = vunpack.c.h.b16 %v554
    %v764 = vunpack.c.l.b16 %v555
    %v765 = vunpack.c.h.b16 %v555
    %v766 = vunpack.c.l.b16 %v556
    %v767 = vunpack.c.h.b16 %v556
    %v768 = vunpack.c.l.b16 %v557
    %v769 = vunpack.c.h.b16 %v557
    %v770 = vunpack.c.l.b16 %v558
    %v771 = vunpack.c.h.b16 %v558
    %v772 = vunpack.c.l.b16 %v559
    %v773 = vunpack.c.h.b16 %v559
    %v774 = vunpack.c.l.b16 %v560
    %v775 = vunpack.c.h.b16 %v560
    %v776 = vunpack.c.l.b16 %v561
    %v777 = vunpack.c.h.b16 %v561
    %v778 = vunpack.c.l.b16 %v562
    %v779 = vunpack.c.h.b16 %v562
    %v780 = vunpack.c.l.b16 %v563
    %v781 = vunpack.c.h.b16 %v563
    %v782 = vunpack.c.l.b16 %v564
    %v783 = vunpack.c.h.b16 %v564
    %v784 = vunpack.c.l.b16 %v565
    %v785 = vunpack.c.h.b16 %v565
    %v786 = vunpack.c.l.b16 %v566
    %v787 = vunpack.c.h.b16 %v566
    %v788 = vunpack.c.l.b16 %v567
    %v789 = vunpack.c.h.b16 %v567
    %v790 = vunpack.c.l.b16 %v568
    %v791 = vunpack.c.h.b16 %v568
    %v792 = vunpack.c.l.b16 %v569
    %v793 = vunpack.c.h.b16 %v569
    %v794 = vunpack.c.l.b16 %v570
    %v795 = vunpack.c.h.b16 %v570
    %v796 = vunpack.c.l.b16 %v571
    %v797 = vunpack.c.h.b16 %v571
    %v798 = vunpack.c.l.b16 %v572
    %v799 = vunpack.c.h.b16 %v572
    %v800 = vunpack.c.l.b16 %v573
    %v801 = vunpack.c.h.b16 %v573
    %v802 = vunpack.c.l.b16 %v574
    %v803 = vunpack.c.h.b16 %v574
    %v804 = vunpack.c.l.b16 %v575
    %v805 = vunpack.c.h.b16 %v575
    %v806 = vunpack.c.l.b16 %v576
    %v807 = vunpack.c.h.b16 %v576
    %v808 = vunpack.c.l.b16 %v577
    %v809 = vunpack.c.h.b16 %v577
    %v810 = vunpack.c.l.b16 %v578
    %v811 = vunpack.c.h.b16 %v578
    %v812 = vunpack.c.l.b16 %v579
    %v813 = vunpack.c.h.b16 %v579
    %v814 = vunpack.c.l.b16 %v580
    %v815 = vunpack.c.h.b16 %v580
    %v816 = vunpack.c.l.b16 %v581
    %v817 = vunpack.c.h.b16 %v581
    %v818 = vunpack.c.l.b16 %v582
    %v819 = vunpack.c.h.b16 %v582
    %v820 = vunpack.c.l.b16 %v583
    %v821 = vunpack.c.h.b16 %v583
    %v822 = vunpack.c.l.b16 %v584
    %v823 = vunpack.c.h.b16 %v584
    %v824 = vunpack.c.l.b16 %v585
    %v825 = vunpack.c.h.b16 %v585
    %v826 = vunpack.c.l.b16 %v586
    %v827 = vunpack.c.h.b16 %v586
    %v828 = vunpack.c.l.b16 %v587
    %v829 = vunpack.c.h.b16 %v587
    %v830 = vunpack.c.l.b16 %v588
    %v831 = vunpack.c.h.b16 %v588
    %v832 = vunpack.c.l.b16 %v589
    %v833 = vunpack.c.h.b16 %v589
    %v834 = vunpack.c.l.b16 %v590
    %v835 = vunpack.c.h.b16 %v590
    %v836 = vunpack.c.l.b16 %v591
    %v837 = vunpack.c.h.b16 %v591
    %v838 = vunpack.c.l.b16 %v592
    %v839 = vunpack.c.h.b16 %v592
    %v840 = vunpack.c.l.b16 %v593
    %v841 = vunpack.c.h.b16 %v593
    %v842 = vunpack.c.l.b16 %v594
    %v843 = vunpack.c.h.b16 %v594
    %v844 = vunpack.c.l.b16 %v595
    %v845 = vunpack.c.h.b16 %v595
    %v846 = vunpack.c.l.b16 %v596
    %v847 = vunpack.c.h.b16 %v596
    %v848 = vunpack.c.l.b16 %v597
    %v849 = vunpack.c.h.b16 %v597
    %v850 = vunpack.c.l.b16 %v598
    %v851 = vunpack.c.h.b16 %v598
    %v852 = vunpack.c.l.b16 %v599
    %v853 = vunpack.c.h.b16 %v599
    %v854 = vunpack.c.l.b16 %v600
    %v855 = vunpack.c.h.b16 %v600
    %v856 = vunpack.c.l.b16 %v601
    %v857 = vunpack.c.h.b16 %v601
    %v858 = vunpack.c.l.b16 %v602
    %v859 = vunpack.c.h.b16 %v602
    %v860 = vunpack.c.l.b16 %v603
    %v861 = vunpack.c.h.b16 %v603
    %v862 = vunpack.c.l.b16 %v604
    %v863 = vunpack.c.h.b16 %v604
    %v864 = vunpack.c.l.b16 %v605
    %v865 = vunpack.c.h.b16 %v605
    %v866 = vunpack.c.l.b16 %v606
    %v867 = vunpack.c.h.b16 %v606
    %v868 = vunpack.c.l.b16 %v607
    %v869 = vunpack.c.h.b16 %v607
    %v870 = vunpack.c.l.b16 %v608
    %v871 = vunpack.c.h.b16 %v608
    %v872 = vunpack.c.l.b16 %v609
    %v873 = vunpack.c.h.b16 %v609
    %v874 = vunpack.c.l.b16 %v610
    %v875 = vunpack.c.h.b16 %v610
    %v876 = vunpack.c.l.b16 %v611
    %v877 = vunpack.c.h.b16 %v611
    %v878 = vunpack.c.l.b16 %v612
    %v879 = vunpack.c.h.b16 %v612
    %v880 = vunpack.c.l.b16 %v613
    %v881 = vunpack.c.h.b16 %v613
    %v882 = vunpack.c.l.b16 %v614
    %v883 = vunpack.c.h.b16 %v614
    %v884 = vunpack.c.l.b16 %v615
    %v885 = vunpack.c.h.b16 %v615
    %v886 = vunpack.c.l.b16 %v616
    %v887 = vunpack.c.h.b16 %v616
    %v888 = vunpack.c.l.b16 %v617
    %v889 = vunpack.c.h.b16 %v617
    %v890 = vunpack.c.l.b16 %v618
    %v891 = vunpack.c.h.b16 %v618
    %v892 = vunpack.c.l.b16 %v619
    %v893 = vunpack.c.h.b16 %v619
    %v894 = vunpack.c.l.b16 %v620
    %v895 = vunpack.c.h.b16 %v620
    %v896 = vunpack.c.l.b16 %v621
    %v897 = vunpack.c.h.b16 %v621
    %v898 = vunpack.c.l.b16 %v622
    %v899 = vunpack.c.h.b16 %v622
    %v900 = vunpack.c.l.b16 %v623
    %v901 = vunpack.c.h.b16 %v623
    %v902 = vunpack.c.l.b16 %v624
    %v903 = vunpack.c.h.b16 %v624
    %v904 = vunpack.c.l.b16 %v625
    %v905 = vunpack.c.h.b16 %v625
    %v906 = vunpack.c.l.b16 %v626
    %v907 = vunpack.c.h.b16 %v626
    %v908 = vunpack.c.l.b16 %v627
    %v909 = vunpack.c.h.b16 %v627
    %v910 = vunpack.c.l.b16 %v628
    %v911 = vunpack.c.h.b16 %v628
    %v912 = vunpack.c.l.b16 %v629
    %v913 = vunpack.c.h.b16 %v629
    %v914 = vunpack.c.l.b16 %v630
    %v915 = vunpack.c.h.b16 %v630
    %v916 = vunpack.c.l.b16 %v631
    %v917 = vunpack.c.h.b16 %v631
    %v918 = vunpack.c.l.b16 %v632
    %v919 = vunpack.c.h.b16 %v632
    %v920 = vunpack.c.l.b16 %v633
    %v921 = vunpack.c.h.b16 %v633
    %v922 = vpack.c.b16 %v736, %v730
    %v923 = vpack.c.b16 %v737, %v731
    %v924 = vpack.c.b16 %v738, %v732
    %v925 = vpack.c.b16 %v739, %v733
    %v926 = vpack.c.b16 %v740, %v734
    %v927 = vpack.c.b16 %v741, %v735
    %v928 = vpack.c.b16 %v748, %v742
    %v929 = vpack.c.b16 %v749, %v743
    %v930 = vpack.c.b16 %v750, %v744
    %v931 = vpack.c.b16 %v751, %v745
    %v932 = vpack.c.b16 %v752, %v746
    %v933 = vpack.c.b16 %v753, %v747
    %v934 = vpack.c.b16 %v760, %v754
    %v935 = vpack.c.b16 %v761, %v755
    %v936 = vpack.c.b16 %v762, %v756
    %v937 = vpack.c.b16 %v763, %v757
    %v938 = vpack.c.b16 %v764, %v758
    %v939 = vpack.c.b16 %v765, %v759
    %v940 = vpack.c.b16 %v772, %v766
    %v941 = vpack.c.b16 %v773, %v767
    %v942 = vpack.c.b16 %v774, %v768
    %v943 = vpack.c.b16 %v775, %v769
    %v944 = vpack.c.b16 %v776, %v770
    %v945 = vpack.c.b16 %v777, %v771
    %v946 = vpack.c.b16 %v784, %v778
    %v947 = vpack.c.b16 %v785, %v779
    %v948 = vpack.c.b16 %v786, %v780
    %v949 = vpack.c.b16 %v787, %v781
    %v950 = vpack.c.b16 %v788, %v782
    %v951 = vpack.c.b16 %v789, %v783
    %v952 = vpack.c.b16 %v796, %v790
    %v953 = vpack.c.b16 %v797, %v791
    %v954 = vpack.c.b16 %v798, %v792
    %v955 = vpack.c.b16 %v799, %v793
    %v956 = vpack.c.b16 %v800, %v794
    %v957 = vpack.c.b16 %v801, %v795
    %v958 = vpack.c.b16 %v808, %v802
    %v959 = vpack.c.b16 %v809, %v803
    %v960 = vpack.c.b16 %v810, %v804
    %v961 = vpack.c.b16 %v811, %v805
    %v962 = vpack.c.b16 %v812, %v806
    %v963 = vpack.c.b16 %v813, %v807
    %v964 = vpack.c.b16 %v820, %v814
    %v965 = vpack.c.b16 %v821, %v815
    %v966 = vpack.c.b16 %v822, %v816
    %v967 = vpack.c.b16 %v823, %v817
    %v968 = vpack.c.b16 %v824, %v818
    %v969 = vpack.c.b16 %v825, %v819
    %v970 = vpack.c.b16 %v832, %v826
    %v971 = vpack.c.b16 %v833, %v827
    %v972 = vpack.c.b16 %v834, %v828
    %v973 = vpack.c.b16 %v835, %v829
    %v974 = vpack.c.b16 %v836, %v830
    %v975 = vpack.c.b16 %v837, %v831
    %v976 = vpack.c.b16 %v844, %v838
    %v977 = vpack.c.b16 %v845, %v839
    %v978 = vpack.c.b16 %v846, %v840
    %v979 = vpack.c.b16 %v847, %v841
    %v980 = vpack.c.b16 %v848, %v842
    %v981 = vpack.c.b16 %v849, %v843
    %v982 = vpack.c.b16 %v856, %v850
    %v983 = vpack.c.b16 %v857, %v851
    %v984 = vpack.c.b16 %v858, %v852
    %v985 = vpack.c.b16 %v859, %v853
    %v986 = vpack.c.b16 %v860, %v854
    %v987 = vpack.c.b16 %v861, %v855
    %v988 = vpack.c.b16 %v868, %v862
    %v989 = vpack.c.b16 %v869, %v863
    %v990 = vpack.c.b16 %v870, %v864
    %v991 = vpack.c.b16 %v871, %v865
    %v992 = vpack.c.b16 %v872, %v866
    %v993 = vpack.c.b16 %v873, %v867
    %v994 = vpack.c.b16 %v880, %v874
    %v995 = vpack.c.b16 %v881, %v875
    %v996 = vpack.c.b16 %v882, %v876
    %v997 = vpack.c.b16 %v883, %v877
    %v998 = vpack.c.b16 %v884, %v878
    %v999 = vpack.c.b16 %v885, %v879
    %v1000 = vpack.c.b16 %v892, %v886
    %v1001 = vpack.c.b16 %v893, %v887
    %v1002 = vpack.c.b16 %v894, %v888
    %v1003 = vpack.c.b16 %v895, %v889
    %v1004 = vpack.c.b16 %v896, %v890
    %v1005 = vpack.c.b16 %v897, %v891
    %v1006 = vpack.c.b16 %v904, %v898
    %v1007 = vpack.c.b16 %v905, %v899
    %v1008 = vpack.c.b16 %v906, %v900
    %v1009 = vpack.c.b16 %v907, %v901
    %v1010 = vpack.c.b16 %v908, %v902
    %v1011 = vpack.c.b16 %v909, %v903
    %v1012 = vpack.c.b16 %v916, %v910
    %v1013 = vpack.c.b16 %v917, %v911
    %v1014 = vpack.c.b16 %v918, %v912
    %v1015 = vpack.c.b16 %v919, %v913
    %v1016 = vpack.c.b16 %v920, %v914
    %v1017 = vpack.c.b16 %v921, %v915
    %1114 = vmatprep.subr.bf16.mxu0 %v965
    %1115 = vmatpush1.bf16.msra.mxu0 %v964
    %1116 = vmatprep.subr.bf16.mxu0 %v959
    %1117 = vmatpush1.bf16.msra.mxu0 %v958
    %1118 = vmatprep.subr.bf16.mxu0 %v953
    %1119 = vmatpush1.bf16.msra.mxu0 %v952
    %1120 = vmatprep.subr.bf16.mxu0 %v947
    %1121 = vmatpush1.bf16.msra.mxu0 %v946
    %1122 = vmatprep.subr.bf16.mxu0 %v941
    %1123 = vmatpush1.bf16.msra.mxu0 %v940
    %1124 = vmatprep.subr.bf16.mxu0 %v935
    %1125 = vmatpush1.bf16.msra.mxu0 %v934
    %1126 = vmatprep.subr.bf16.mxu0 %v929
    %1127 = vmatpush1.bf16.msra.mxu0 %v928
    %1128 = vmatprep.subr.bf16.mxu0 %v923
    %1129 = vmatpush1.bf16.msra.mxu0 %v922
    %1130 = vmatprep.subr.bf16.mxu0 %v1013
    %1131 = vmatpush2.bf16.msra.mxu0 %v1012
    %1132 = vmatprep.subr.bf16.mxu0 %v1007
    %1133 = vmatpush2.bf16.msra.mxu0 %v1006
    %1134 = vmatprep.subr.bf16.mxu0 %v1001
    %1135 = vmatpush2.bf16.msra.mxu0 %v1000
    %1136 = vmatprep.subr.bf16.mxu0 %v995
    %1137 = vmatpush2.bf16.msra.mxu0 %v994
    %1138 = vmatprep.subr.bf16.mxu0 %v989
    %1139 = vmatpush2.bf16.msra.mxu0 %v988
    %1140 = vmatprep.subr.bf16.mxu0 %v983
    %1141 = vmatpush2.bf16.msra.mxu0 %v982
    %1142 = vmatprep.subr.bf16.mxu0 %v977
    %1143 = vmatpush2.bf16.msra.mxu0 %v976
    %1144 = vmatprep.subr.bf16.mxu0 %v971
    %1145 = vmatpush2.bf16.msra.mxu0 %v970
    %1146 = vmatprep.mubr.bf16.mxu0 %v507
    %1147 = vmatmul.mubr.bf16.gmra.mxu0 %v506
    %v1148 = vpop.f32.mrf.mxu0
    %v1149 = vadd.f32 0.0, %v1148
    %v1150 = vpop.f32.mrf.mxu0
    %v1151 = vadd.f32 0.0, %v1150
    %v1152 = vpop.f32.mrf.mxu0
    %v1153 = vadd.f32 0.0, %v1152
    %v1154 = vpop.f32.mrf.mxu0
    %v1155 = vadd.f32 0.0, %v1154
    %1156 = vmatprep.mubr.bf16.mxu0 %v509
    %1157 = vmatmul.mubr.bf16.gmra.mxu0 %v508
    %v1158 = vpop.f32.mrf.mxu0
    %v1159 = vadd.f32 0.0, %v1158
    %v1160 = vpop.f32.mrf.mxu0
    %v1161 = vadd.f32 0.0, %v1160
    %v1162 = vpop.f32.mrf.mxu0
    %v1163 = vadd.f32 0.0, %v1162
    %v1164 = vpop.f32.mrf.mxu0
    %v1165 = vadd.f32 0.0, %v1164
    %1166 = vmatprep.mubr.bf16.mxu0 %v511
    %1167 = vmatmul.mubr.bf16.gmra.mxu0 %v510
    %v1168 = vpop.f32.mrf.mxu0
    %v1169 = vadd.f32 0.0, %v1168
    %v1170 = vpop.f32.mrf.mxu0
    %v1171 = vadd.f32 0.0, %v1170
    %v1172 = vpop.f32.mrf.mxu0
    %v1173 = vadd.f32 0.0, %v1172
    %v1174 = vpop.f32.mrf.mxu0
    %v1175 = vadd.f32 0.0, %v1174
    %1176 = vmatprep.mubr.bf16.mxu0 %v513
    %1177 = vmatmul.mubr.bf16.gmra.mxu0 %v512
    %v1178 = vpop.f32.mrf.mxu0
    %v1179 = vadd.f32 0.0, %v1178
    %v1180 = vpop.f32.mrf.mxu0
    %v1181 = vadd.f32 0.0, %v1180
    %v1182 = vpop.f32.mrf.mxu0
    %v1183 = vadd.f32 0.0, %v1182
    %v1184 = vpop.f32.mrf.mxu0
    %v1185 = vadd.f32 0.0, %v1184
    %1186 = vmatprep.mubr.bf16.mxu0 %v515
    %1187 = vmatmul.mubr.bf16.gmra.mxu0 %v514
    %v1188 = vpop.f32.mrf.mxu0
    %v1189 = vadd.f32 0.0, %v1188
    %v1190 = vpop.f32.mrf.mxu0
    %v1191 = vadd.f32 0.0, %v1190
    %v1192 = vpop.f32.mrf.mxu0
    %v1193 = vadd.f32 0.0, %v1192
    %v1194 = vpop.f32.mrf.mxu0
    %v1195 = vadd.f32 0.0, %v1194
    %1196 = vmatprep.mubr.bf16.mxu0 %v517
    %1197 = vmatmul.mubr.bf16.gmra.mxu0 %v516
    %v1198 = vpop.f32.mrf.mxu0
    %v1199 = vadd.f32 0.0, %v1198
    %v1200 = vpop.f32.mrf.mxu0
    %v1201 = vadd.f32 0.0, %v1200
    %v1202 = vpop.f32.mrf.mxu0
    %v1203 = vadd.f32 0.0, %v1202
    %v1204 = vpop.f32.mrf.mxu0
    %v1205 = vadd.f32 0.0, %v1204
    %1206 = vmatprep.mubr.bf16.mxu0 %v519
    %1207 = vmatmul.mubr.bf16.gmra.mxu0 %v518
    %v1208 = vpop.f32.mrf.mxu0
    %v1209 = vadd.f32 0.0, %v1208
    %v1210 = vpop.f32.mrf.mxu0
    %v1211 = vadd.f32 0.0, %v1210
    %v1212 = vpop.f32.mrf.mxu0
    %v1213 = vadd.f32 0.0, %v1212
    %v1214 = vpop.f32.mrf.mxu0
    %v1215 = vadd.f32 0.0, %v1214
    %1216 = vmatprep.mubr.bf16.mxu0 %v521
    %1217 = vmatmul.mubr.bf16.gmra.mxu0 %v520
    %v1218 = vpop.f32.mrf.mxu0
    %v1219 = vadd.f32 0.0, %v1218
    %v1220 = vpop.f32.mrf.mxu0
    %v1221 = vadd.f32 0.0, %v1220
    %v1222 = vpop.f32.mrf.mxu0
    %v1223 = vadd.f32 0.0, %v1222
    %v1224 = vpop.f32.mrf.mxu0
    %v1225 = vadd.f32 0.0, %v1224
    %1226 = vmatprep.mubr.bf16.mxu0 %v523
    %1227 = vmatmul.mubr.bf16.gmra.mxu0 %v522
    %v1228 = vpop.f32.mrf.mxu0
    %v1229 = vadd.f32 0.0, %v1228
    %v1230 = vpop.f32.mrf.mxu0
    %v1231 = vadd.f32 0.0, %v1230
    %v1232 = vpop.f32.mrf.mxu0
    %v1233 = vadd.f32 0.0, %v1232
    %v1234 = vpop.f32.mrf.mxu0
    %v1235 = vadd.f32 0.0, %v1234
    %1236 = vmatprep.mubr.bf16.mxu0 %v525
    %1237 = vmatmul.mubr.bf16.gmra.mxu0 %v524
    %v1238 = vpop.f32.mrf.mxu0
    %v1239 = vadd.f32 0.0, %v1238
    %v1240 = vpop.f32.mrf.mxu0
    %v1241 = vadd.f32 0.0, %v1240
    %v1242 = vpop.f32.mrf.mxu0
    %v1243 = vadd.f32 0.0, %v1242
    %v1244 = vpop.f32.mrf.mxu0
    %v1245 = vadd.f32 0.0, %v1244
    %1246 = vmatprep.mubr.bf16.mxu0 %v527
    %1247 = vmatmul.mubr.bf16.gmra.mxu0 %v526
    %v1248 = vpop.f32.mrf.mxu0
    %v1249 = vadd.f32 0.0, %v1248
    %v1250 = vpop.f32.mrf.mxu0
    %v1251 = vadd.f32 0.0, %v1250
    %v1252 = vpop.f32.mrf.mxu0
    %v1253 = vadd.f32 0.0, %v1252
    %v1254 = vpop.f32.mrf.mxu0
    %v1255 = vadd.f32 0.0, %v1254
    %1256 = vmatprep.mubr.bf16.mxu0 %v529
    %1257 = vmatmul.mubr.bf16.gmra.mxu0 %v528
    %v1258 = vpop.f32.mrf.mxu0
    %v1259 = vadd.f32 0.0, %v1258
    %v1260 = vpop.f32.mrf.mxu0
    %v1261 = vadd.f32 0.0, %v1260
    %v1262 = vpop.f32.mrf.mxu0
    %v1263 = vadd.f32 0.0, %v1262
    %v1264 = vpop.f32.mrf.mxu0
    %v1265 = vadd.f32 0.0, %v1264
    %1266 = vmatprep.mubr.bf16.mxu0 %v531
    %1267 = vmatmul.mubr.bf16.gmra.mxu0 %v530
    %v1268 = vpop.f32.mrf.mxu0
    %v1269 = vadd.f32 0.0, %v1268
    %v1270 = vpop.f32.mrf.mxu0
    %v1271 = vadd.f32 0.0, %v1270
    %v1272 = vpop.f32.mrf.mxu0
    %v1273 = vadd.f32 0.0, %v1272
    %v1274 = vpop.f32.mrf.mxu0
    %v1275 = vadd.f32 0.0, %v1274
    %1276 = vmatprep.mubr.bf16.mxu0 %v533
    %1277 = vmatmul.mubr.bf16.gmra.mxu0 %v532
    %v1278 = vpop.f32.mrf.mxu0
    %v1279 = vadd.f32 0.0, %v1278
    %v1280 = vpop.f32.mrf.mxu0
    %v1281 = vadd.f32 0.0, %v1280
    %v1282 = vpop.f32.mrf.mxu0
    %v1283 = vadd.f32 0.0, %v1282
    %v1284 = vpop.f32.mrf.mxu0
    %v1285 = vadd.f32 0.0, %v1284
    %1286 = vmatprep.mubr.bf16.mxu0 %v535
    %1287 = vmatmul.mubr.bf16.gmra.mxu0 %v534
    %v1288 = vpop.f32.mrf.mxu0
    %v1289 = vadd.f32 0.0, %v1288
    %v1290 = vpop.f32.mrf.mxu0
    %v1291 = vadd.f32 0.0, %v1290
    %v1292 = vpop.f32.mrf.mxu0
    %v1293 = vadd.f32 0.0, %v1292
    %v1294 = vpop.f32.mrf.mxu0
    %v1295 = vadd.f32 0.0, %v1294
    %1296 = vmatprep.mubr.bf16.mxu0 %v537
    %1297 = vmatmul.mubr.bf16.gmra.mxu0 %v536
    %v1298 = vpop.f32.mrf.mxu0
    %v1299 = vadd.f32 0.0, %v1298
    %v1300 = vpop.f32.mrf.mxu0
    %v1301 = vadd.f32 0.0, %v1300
    %v1302 = vpop.f32.mrf.mxu0
    %v1303 = vadd.f32 0.0, %v1302
    %v1304 = vpop.f32.mrf.mxu0
    %v1305 = vadd.f32 0.0, %v1304
    %1306 = vdwg.mxu0
    %1307 = vmatprep.subr.bf16.mxu0 %v967
    %1308 = vmatpush1.bf16.msra.mxu0 %v966
    %1309 = vmatprep.subr.bf16.mxu0 %v961
    %1310 = vmatpush1.bf16.msra.mxu0 %v960
    %1311 = vmatprep.subr.bf16.mxu0 %v955
    %1312 = vmatpush1.bf16.msra.mxu0 %v954
    %1313 = vmatprep.subr.bf16.mxu0 %v949
    %1314 = vmatpush1.bf16.msra.mxu0 %v948
    %1315 = vmatprep.subr.bf16.mxu0 %v943
    %1316 = vmatpush1.bf16.msra.mxu0 %v942
    %1317 = vmatprep.subr.bf16.mxu0 %v937
    %1318 = vmatpush1.bf16.msra.mxu0 %v936
    %1319 = vmatprep.subr.bf16.mxu0 %v931
    %1320 = vmatpush1.bf16.msra.mxu0 %v930
    %1321 = vmatprep.subr.bf16.mxu0 %v925
    %1322 = vmatpush1.bf16.msra.mxu0 %v924
    %1323 = vmatprep.subr.bf16.mxu0 %v1015
    %1324 = vmatpush2.bf16.msra.mxu0 %v1014
    %1325 = vmatprep.subr.bf16.mxu0 %v1009
    %1326 = vmatpush2.bf16.msra.mxu0 %v1008
    %1327 = vmatprep.subr.bf16.mxu0 %v1003
    %1328 = vmatpush2.bf16.msra.mxu0 %v1002
    %1329 = vmatprep.subr.bf16.mxu0 %v997
    %1330 = vmatpush2.bf16.msra.mxu0 %v996
    %1331 = vmatprep.subr.bf16.mxu0 %v991
    %1332 = vmatpush2.bf16.msra.mxu0 %v990
    %1333 = vmatprep.subr.bf16.mxu0 %v985
    %1334 = vmatpush2.bf16.msra.mxu0 %v984
    %1335 = vmatprep.subr.bf16.mxu0 %v979
    %1336 = vmatpush2.bf16.msra.mxu0 %v978
    %1337 = vmatprep.subr.bf16.mxu0 %v973
    %1338 = vmatpush2.bf16.msra.mxu0 %v972
    %1339 = vmatprep.mubr.bf16.mxu0 %v507
    %1340 = vmatmul.mubr.bf16.gmra.mxu0 %v506
    %v1341 = vpop.f32.mrf.mxu0
    %v1342 = vadd.f32 0.0, %v1341
    %v1343 = vpop.f32.mrf.mxu0
    %v1344 = vadd.f32 0.0, %v1343
    %v1345 = vpop.f32.mrf.mxu0
    %v1346 = vadd.f32 0.0, %v1345
    %v1347 = vpop.f32.mrf.mxu0
    %v1348 = vadd.f32 0.0, %v1347
    %1349 = vmatprep.mubr.bf16.mxu0 %v509
    %1350 = vmatmul.mubr.bf16.gmra.mxu0 %v508
    %v1351 = vpop.f32.mrf.mxu0
    %v1352 = vadd.f32 0.0, %v1351
    %v1353 = vpop.f32.mrf.mxu0
    %v1354 = vadd.f32 0.0, %v1353
    %v1355 = vpop.f32.mrf.mxu0
    %v1356 = vadd.f32 0.0, %v1355
    %v1357 = vpop.f32.mrf.mxu0
    %v1358 = vadd.f32 0.0, %v1357
    %1359 = vmatprep.mubr.bf16.mxu0 %v511
    %1360 = vmatmul.mubr.bf16.gmra.mxu0 %v510
    %v1361 = vpop.f32.mrf.mxu0
    %v1362 = vadd.f32 0.0, %v1361
    %v1363 = vpop.f32.mrf.mxu0
    %v1364 = vadd.f32 0.0, %v1363
    %v1365 = vpop.f32.mrf.mxu0
    %v1366 = vadd.f32 0.0, %v1365
    %v1367 = vpop.f32.mrf.mxu0
    %v1368 = vadd.f32 0.0, %v1367
    %1369 = vmatprep.mubr.bf16.mxu0 %v513
    %1370 = vmatmul.mubr.bf16.gmra.mxu0 %v512
    %v1371 = vpop.f32.mrf.mxu0
    %v1372 = vadd.f32 0.0, %v1371
    %v1373 = vpop.f32.mrf.mxu0
    %v1374 = vadd.f32 0.0, %v1373
    %v1375 = vpop.f32.mrf.mxu0
    %v1376 = vadd.f32 0.0, %v1375
    %v1377 = vpop.f32.mrf.mxu0
    %v1378 = vadd.f32 0.0, %v1377
    %1379 = vmatprep.mubr.bf16.mxu0 %v515
    %1380 = vmatmul.mubr.bf16.gmra.mxu0 %v514
    %v1381 = vpop.f32.mrf.mxu0
    %v1382 = vadd.f32 0.0, %v1381
    %v1383 = vpop.f32.mrf.mxu0
    %v1384 = vadd.f32 0.0, %v1383
    %v1385 = vpop.f32.mrf.mxu0
    %v1386 = vadd.f32 0.0, %v1385
    %v1387 = vpop.f32.mrf.mxu0
    %v1388 = vadd.f32 0.0, %v1387
    %1389 = vmatprep.mubr.bf16.mxu0 %v517
    %1390 = vmatmul.mubr.bf16.gmra.mxu0 %v516
    %v1391 = vpop.f32.mrf.mxu0
    %v1392 = vadd.f32 0.0, %v1391
    %v1393 = vpop.f32.mrf.mxu0
    %v1394 = vadd.f32 0.0, %v1393
    %v1395 = vpop.f32.mrf.mxu0
    %v1396 = vadd.f32 0.0, %v1395
    %v1397 = vpop.f32.mrf.mxu0
    %v1398 = vadd.f32 0.0, %v1397
    %1399 = vmatprep.mubr.bf16.mxu0 %v519
    %1400 = vmatmul.mubr.bf16.gmra.mxu0 %v518
    %v1401 = vpop.f32.mrf.mxu0
    %v1402 = vadd.f32 0.0, %v1401
    %v1403 = vpop.f32.mrf.mxu0
    %v1404 = vadd.f32 0.0, %v1403
    %v1405 = vpop.f32.mrf.mxu0
    %v1406 = vadd.f32 0.0, %v1405
    %v1407 = vpop.f32.mrf.mxu0
    %v1408 = vadd.f32 0.0, %v1407
    %1409 = vmatprep.mubr.bf16.mxu0 %v521
    %1410 = vmatmul.mubr.bf16.gmra.mxu0 %v520
    %v1411 = vpop.f32.mrf.mxu0
    %v1412 = vadd.f32 0.0, %v1411
    %v1413 = vpop.f32.mrf.mxu0
    %v1414 = vadd.f32 0.0, %v1413
    %v1415 = vpop.f32.mrf.mxu0
    %v1416 = vadd.f32 0.0, %v1415
    %v1417 = vpop.f32.mrf.mxu0
    %v1418 = vadd.f32 0.0, %v1417
    %1419 = vmatprep.mubr.bf16.mxu0 %v523
    %1420 = vmatmul.mubr.bf16.gmra.mxu0 %v522
    %v1421 = vpop.f32.mrf.mxu0
    %v1422 = vadd.f32 0.0, %v1421
    %v1423 = vpop.f32.mrf.mxu0
    %v1424 = vadd.f32 0.0, %v1423
    %v1425 = vpop.f32.mrf.mxu0
    %v1426 = vadd.f32 0.0, %v1425
    %v1427 = vpop.f32.mrf.mxu0
    %v1428 = vadd.f32 0.0, %v1427
    %1429 = vmatprep.mubr.bf16.mxu0 %v525
    %1430 = vmatmul.mubr.bf16.gmra.mxu0 %v524
    %v1431 = vpop.f32.mrf.mxu0
    %v1432 = vadd.f32 0.0, %v1431
    %v1433 = vpop.f32.mrf.mxu0
    %v1434 = vadd.f32 0.0, %v1433
    %v1435 = vpop.f32.mrf.mxu0
    %v1436 = vadd.f32 0.0, %v1435
    %v1437 = vpop.f32.mrf.mxu0
    %v1438 = vadd.f32 0.0, %v1437
    %1439 = vmatprep.mubr.bf16.mxu0 %v527
    %1440 = vmatmul.mubr.bf16.gmra.mxu0 %v526
    %v1441 = vpop.f32.mrf.mxu0
    %v1442 = vadd.f32 0.0, %v1441
    %v1443 = vpop.f32.mrf.mxu0
    %v1444 = vadd.f32 0.0, %v1443
    %v1445 = vpop.f32.mrf.mxu0
    %v1446 = vadd.f32 0.0, %v1445
    %v1447 = vpop.f32.mrf.mxu0
    %v1448 = vadd.f32 0.0, %v1447
    %1449 = vmatprep.mubr.bf16.mxu0 %v529
    %1450 = vmatmul.mubr.bf16.gmra.mxu0 %v528
    %v1451 = vpop.f32.mrf.mxu0
    %v1452 = vadd.f32 0.0, %v1451
    %v1453 = vpop.f32.mrf.mxu0
    %v1454 = vadd.f32 0.0, %v1453
    %v1455 = vpop.f32.mrf.mxu0
    %v1456 = vadd.f32 0.0, %v1455
    %v1457 = vpop.f32.mrf.mxu0
    %v1458 = vadd.f32 0.0, %v1457
    %1459 = vmatprep.mubr.bf16.mxu0 %v531
    %1460 = vmatmul.mubr.bf16.gmra.mxu0 %v530
    %v1461 = vpop.f32.mrf.mxu0
    %v1462 = vadd.f32 0.0, %v1461
    %v1463 = vpop.f32.mrf.mxu0
    %v1464 = vadd.f32 0.0, %v1463
    %v1465 = vpop.f32.mrf.mxu0
    %v1466 = vadd.f32 0.0, %v1465
    %v1467 = vpop.f32.mrf.mxu0
    %v1468 = vadd.f32 0.0, %v1467
    %1469 = vmatprep.mubr.bf16.mxu0 %v533
    %1470 = vmatmul.mubr.bf16.gmra.mxu0 %v532
    %v1471 = vpop.f32.mrf.mxu0
    %v1472 = vadd.f32 0.0, %v1471
    %v1473 = vpop.f32.mrf.mxu0
    %v1474 = vadd.f32 0.0, %v1473
    %v1475 = vpop.f32.mrf.mxu0
    %v1476 = vadd.f32 0.0, %v1475
    %v1477 = vpop.f32.mrf.mxu0
    %v1478 = vadd.f32 0.0, %v1477
    %1479 = vmatprep.mubr.bf16.mxu0 %v535
    %1480 = vmatmul.mubr.bf16.gmra.mxu0 %v534
    %v1481 = vpop.f32.mrf.mxu0
    %v1482 = vadd.f32 0.0, %v1481
    %v1483 = vpop.f32.mrf.mxu0
    %v1484 = vadd.f32 0.0, %v1483
    %v1485 = vpop.f32.mrf.mxu0
    %v1486 = vadd.f32 0.0, %v1485
    %v1487 = vpop.f32.mrf.mxu0
    %v1488 = vadd.f32 0.0, %v1487
    %1489 = vmatprep.mubr.bf16.mxu0 %v537
    %1490 = vmatmul.mubr.bf16.gmra.mxu0 %v536
    %v1491 = vpop.f32.mrf.mxu0
    %v1492 = vadd.f32 0.0, %v1491
    %v1493 = vpop.f32.mrf.mxu0
    %v1494 = vadd.f32 0.0, %v1493
    %v1495 = vpop.f32.mrf.mxu0
    %v1496 = vadd.f32 0.0, %v1495
    %v1497 = vpop.f32.mrf.mxu0
    %v1498 = vadd.f32 0.0, %v1497
    %1499 = vdwg.mxu0
    %1500 = vmatprep.subr.bf16.mxu0 %v969
    %1501 = vmatpush1.bf16.msra.mxu0 %v968
    %1502 = vmatprep.subr.bf16.mxu0 %v963
    %1503 = vmatpush1.bf16.msra.mxu0 %v962
    %1504 = vmatprep.subr.bf16.mxu0 %v957
    %1505 = vmatpush1.bf16.msra.mxu0 %v956
    %1506 = vmatprep.subr.bf16.mxu0 %v951
    %1507 = vmatpush1.bf16.msra.mxu0 %v950
    %1508 = vmatprep.subr.bf16.mxu0 %v945
    %1509 = vmatpush1.bf16.msra.mxu0 %v944
    %1510 = vmatprep.subr.bf16.mxu0 %v939
    %1511 = vmatpush1.bf16.msra.mxu0 %v938
    %1512 = vmatprep.subr.bf16.mxu0 %v933
    %1513 = vmatpush1.bf16.msra.mxu0 %v932
    %1514 = vmatprep.subr.bf16.mxu0 %v927
    %1515 = vmatpush1.bf16.msra.mxu0 %v926
    %1516 = vmatprep.subr.bf16.mxu0 %v1017
    %1517 = vmatpush2.bf16.msra.mxu0 %v1016
    %1518 = vmatprep.subr.bf16.mxu0 %v1011
    %1519 = vmatpush2.bf16.msra.mxu0 %v1010
    %1520 = vmatprep.subr.bf16.mxu0 %v1005
    %1521 = vmatpush2.bf16.msra.mxu0 %v1004
    %1522 = vmatprep.subr.bf16.mxu0 %v999
    %1523 = vmatpush2.bf16.msra.mxu0 %v998
    %1524 = vmatprep.subr.bf16.mxu0 %v993
    %1525 = vmatpush2.bf16.msra.mxu0 %v992
    %1526 = vmatprep.subr.bf16.mxu0 %v987
    %1527 = vmatpush2.bf16.msra.mxu0 %v986
    %1528 = vmatprep.subr.bf16.mxu0 %v981
    %1529 = vmatpush2.bf16.msra.mxu0 %v980
    %1530 = vmatprep.subr.bf16.mxu0 %v975
    %1531 = vmatpush2.bf16.msra.mxu0 %v974
    %1532 = vmatprep.mubr.bf16.mxu0 %v507
    %1533 = vmatmul.mubr.bf16.gmra.mxu0 %v506
    %v1534 = vpop.f32.mrf.mxu0
    %v1535 = vadd.f32 0.0, %v1534
    %v1536 = vpop.f32.mrf.mxu0
    %v1537 = vadd.f32 0.0, %v1536
    %v1538 = vpop.f32.mrf.mxu0
    %v1539 = vadd.f32 0.0, %v1538
    %v1540 = vpop.f32.mrf.mxu0
    %v1541 = vadd.f32 0.0, %v1540
    %1542 = vmatprep.mubr.bf16.mxu0 %v509
    %1543 = vmatmul.mubr.bf16.gmra.mxu0 %v508
    %v1544 = vpop.f32.mrf.mxu0
    %v1545 = vadd.f32 0.0, %v1544
    %v1546 = vpop.f32.mrf.mxu0
    %v1547 = vadd.f32 0.0, %v1546
    %v1548 = vpop.f32.mrf.mxu0
    %v1549 = vadd.f32 0.0, %v1548
    %v1550 = vpop.f32.mrf.mxu0
    %v1551 = vadd.f32 0.0, %v1550
    %1552 = vmatprep.mubr.bf16.mxu0 %v511
    %1553 = vmatmul.mubr.bf16.gmra.mxu0 %v510
    %v1554 = vpop.f32.mrf.mxu0
    %v1555 = vadd.f32 0.0, %v1554
    %v1556 = vpop.f32.mrf.mxu0
    %v1557 = vadd.f32 0.0, %v1556
    %v1558 = vpop.f32.mrf.mxu0
    %v1559 = vadd.f32 0.0, %v1558
    %v1560 = vpop.f32.mrf.mxu0
    %v1561 = vadd.f32 0.0, %v1560
    %1562 = vmatprep.mubr.bf16.mxu0 %v513
    %1563 = vmatmul.mubr.bf16.gmra.mxu0 %v512
    %v1564 = vpop.f32.mrf.mxu0
    %v1565 = vadd.f32 0.0, %v1564
    %v1566 = vpop.f32.mrf.mxu0
    %v1567 = vadd.f32 0.0, %v1566
    %v1568 = vpop.f32.mrf.mxu0
    %v1569 = vadd.f32 0.0, %v1568
    %v1570 = vpop.f32.mrf.mxu0
    %v1571 = vadd.f32 0.0, %v1570
    %1572 = vmatprep.mubr.bf16.mxu0 %v515
    %1573 = vmatmul.mubr.bf16.gmra.mxu0 %v514
    %v1574 = vpop.f32.mrf.mxu0
    %v1575 = vadd.f32 0.0, %v1574
    %v1576 = vpop.f32.mrf.mxu0
    %v1577 = vadd.f32 0.0, %v1576
    %v1578 = vpop.f32.mrf.mxu0
    %v1579 = vadd.f32 0.0, %v1578
    %v1580 = vpop.f32.mrf.mxu0
    %v1581 = vadd.f32 0.0, %v1580
    %1582 = vmatprep.mubr.bf16.mxu0 %v517
    %1583 = vmatmul.mubr.bf16.gmra.mxu0 %v516
    %v1584 = vpop.f32.mrf.mxu0
    %v1585 = vadd.f32 0.0, %v1584
    %v1586 = vpop.f32.mrf.mxu0
    %v1587 = vadd.f32 0.0, %v1586
    %v1588 = vpop.f32.mrf.mxu0
    %v1589 = vadd.f32 0.0, %v1588
    %v1590 = vpop.f32.mrf.mxu0
    %v1591 = vadd.f32 0.0, %v1590
    %1592 = vmatprep.mubr.bf16.mxu0 %v519
    %1593 = vmatmul.mubr.bf16.gmra.mxu0 %v518
    %v1594 = vpop.f32.mrf.mxu0
    %v1595 = vadd.f32 0.0, %v1594
    %v1596 = vpop.f32.mrf.mxu0
    %v1597 = vadd.f32 0.0, %v1596
    %v1598 = vpop.f32.mrf.mxu0
    %v1599 = vadd.f32 0.0, %v1598
    %v1600 = vpop.f32.mrf.mxu0
    %v1601 = vadd.f32 0.0, %v1600
    %1602 = vmatprep.mubr.bf16.mxu0 %v521
    %1603 = vmatmul.mubr.bf16.gmra.mxu0 %v520
    %v1604 = vpop.f32.mrf.mxu0
    %v1605 = vadd.f32 0.0, %v1604
    %v1606 = vpop.f32.mrf.mxu0
    %v1607 = vadd.f32 0.0, %v1606
    %v1608 = vpop.f32.mrf.mxu0
    %v1609 = vadd.f32 0.0, %v1608
    %v1610 = vpop.f32.mrf.mxu0
    %v1611 = vadd.f32 0.0, %v1610
    %1612 = vmatprep.mubr.bf16.mxu0 %v523
    %1613 = vmatmul.mubr.bf16.gmra.mxu0 %v522
    %v1614 = vpop.f32.mrf.mxu0
    %v1615 = vadd.f32 0.0, %v1614
    %v1616 = vpop.f32.mrf.mxu0
    %v1617 = vadd.f32 0.0, %v1616
    %v1618 = vpop.f32.mrf.mxu0
    %v1619 = vadd.f32 0.0, %v1618
    %v1620 = vpop.f32.mrf.mxu0
    %v1621 = vadd.f32 0.0, %v1620
    %1622 = vmatprep.mubr.bf16.mxu0 %v525
    %1623 = vmatmul.mubr.bf16.gmra.mxu0 %v524
    %v1624 = vpop.f32.mrf.mxu0
    %v1625 = vadd.f32 0.0, %v1624
    %v1626 = vpop.f32.mrf.mxu0
    %v1627 = vadd.f32 0.0, %v1626
    %v1628 = vpop.f32.mrf.mxu0
    %v1629 = vadd.f32 0.0, %v1628
    %v1630 = vpop.f32.mrf.mxu0
    %v1631 = vadd.f32 0.0, %v1630
    %1632 = vmatprep.mubr.bf16.mxu0 %v527
    %1633 = vmatmul.mubr.bf16.gmra.mxu0 %v526
    %v1634 = vpop.f32.mrf.mxu0
    %v1635 = vadd.f32 0.0, %v1634
    %v1636 = vpop.f32.mrf.mxu0
    %v1637 = vadd.f32 0.0, %v1636
    %v1638 = vpop.f32.mrf.mxu0
    %v1639 = vadd.f32 0.0, %v1638
    %v1640 = vpop.f32.mrf.mxu0
    %v1641 = vadd.f32 0.0, %v1640
    %1642 = vmatprep.mubr.bf16.mxu0 %v529
    %1643 = vmatmul.mubr.bf16.gmra.mxu0 %v528
    %v1644 = vpop.f32.mrf.mxu0
    %v1645 = vadd.f32 0.0, %v1644
    %v1646 = vpop.f32.mrf.mxu0
    %v1647 = vadd.f32 0.0, %v1646
    %v1648 = vpop.f32.mrf.mxu0
    %v1649 = vadd.f32 0.0, %v1648
    %v1650 = vpop.f32.mrf.mxu0
    %v1651 = vadd.f32 0.0, %v1650
    %1652 = vmatprep.mubr.bf16.mxu0 %v531
    %1653 = vmatmul.mubr.bf16.gmra.mxu0 %v530
    %v1654 = vpop.f32.mrf.mxu0
    %v1655 = vadd.f32 0.0, %v1654
    %v1656 = vpop.f32.mrf.mxu0
    %v1657 = vadd.f32 0.0, %v1656
    %v1658 = vpop.f32.mrf.mxu0
    %v1659 = vadd.f32 0.0, %v1658
    %v1660 = vpop.f32.mrf.mxu0
    %v1661 = vadd.f32 0.0, %v1660
    %1662 = vmatprep.mubr.bf16.mxu0 %v533
    %1663 = vmatmul.mubr.bf16.gmra.mxu0 %v532
    %v1664 = vpop.f32.mrf.mxu0
    %v1665 = vadd.f32 0.0, %v1664
    %v1666 = vpop.f32.mrf.mxu0
    %v1667 = vadd.f32 0.0, %v1666
    %v1668 = vpop.f32.mrf.mxu0
    %v1669 = vadd.f32 0.0, %v1668
    %v1670 = vpop.f32.mrf.mxu0
    %v1671 = vadd.f32 0.0, %v1670
    %1672 = vmatprep.mubr.bf16.mxu0 %v535
    %1673 = vmatmul.mubr.bf16.gmra.mxu0 %v534
    %v1674 = vpop.f32.mrf.mxu0
    %v1675 = vadd.f32 0.0, %v1674
    %v1676 = vpop.f32.mrf.mxu0
    %v1677 = vadd.f32 0.0, %v1676
    %v1678 = vpop.f32.mrf.mxu0
    %v1679 = vadd.f32 0.0, %v1678
    %v1680 = vpop.f32.mrf.mxu0
    %v1681 = vadd.f32 0.0, %v1680
    %1682 = vmatprep.mubr.bf16.mxu0 %v537
    %1683 = vmatmul.mubr.bf16.gmra.mxu0 %v536
    %v1684 = vpop.f32.mrf.mxu0
    %v1685 = vadd.f32 0.0, %v1684
    %v1686 = vpop.f32.mrf.mxu0
    %v1687 = vadd.f32 0.0, %v1686
    %v1688 = vpop.f32.mrf.mxu0
    %v1689 = vadd.f32 0.0, %v1688
    %v1690 = vpop.f32.mrf.mxu0
    %v1691 = vadd.f32 0.0, %v1690
    %1692 = vdwg.mxu0
    %v1693 = vadd.f32 %v250, %v1149
    %v1694 = vadd.f32 %v251, %v1151
    %v1695 = vadd.f32 %v252, %v1342
    %v1696 = vadd.f32 %v253, %v1344
    %v1697 = vadd.f32 %v254, %v1535
    %v1698 = vadd.f32 %v255, %v1537
    %v1699 = vadd.f32 %v256, %v1153
    %v1700 = vadd.f32 %v257, %v1155
    %v1701 = vadd.f32 %v258, %v1346
    %v1702 = vadd.f32 %v259, %v1348
    %v1703 = vadd.f32 %v260, %v1539
    %v1704 = vadd.f32 %v261, %v1541
    %v1705 = vadd.f32 %v262, %v1159
    %v1706 = vadd.f32 %v263, %v1161
    %v1707 = vadd.f32 %v264, %v1352
    %v1708 = vadd.f32 %v265, %v1354
    %v1709 = vadd.f32 %v266, %v1545
    %v1710 = vadd.f32 %v267, %v1547
    %v1711 = vadd.f32 %v268, %v1163
    %v1712 = vadd.f32 %v269, %v1165
    %v1713 = vadd.f32 %v270, %v1356
    %v1714 = vadd.f32 %v271, %v1358
    %v1715 = vadd.f32 %v272, %v1549
    %v1716 = vadd.f32 %v273, %v1551
    %v1717 = vadd.f32 %v274, %v1169
    %v1718 = vadd.f32 %v275, %v1171
    %v1719 = vadd.f32 %v276, %v1362
    %v1720 = vadd.f32 %v277, %v1364
    %v1721 = vadd.f32 %v278, %v1555
    %v1722 = vadd.f32 %v279, %v1557
    %v1723 = vadd.f32 %v280, %v1173
    %v1724 = vadd.f32 %v281, %v1175
    %v1725 = vadd.f32 %v282, %v1366
    %v1726 = vadd.f32 %v283, %v1368
    %v1727 = vadd.f32 %v284, %v1559
    %v1728 = vadd.f32 %v285, %v1561
    %v1729 = vadd.f32 %v286, %v1179
    %v1730 = vadd.f32 %v287, %v1181
    %v1731 = vadd.f32 %v288, %v1372
    %v1732 = vadd.f32 %v289, %v1374
    %v1733 = vadd.f32 %v290, %v1565
    %v1734 = vadd.f32 %v291, %v1567
    %v1735 = vadd.f32 %v292, %v1183
    %v1736 = vadd.f32 %v293, %v1185
    %v1737 = vadd.f32 %v294, %v1376
    %v1738 = vadd.f32 %v295, %v1378
    %v1739 = vadd.f32 %v296, %v1569
    %v1740 = vadd.f32 %v297, %v1571
    %v1741 = vadd.f32 %v298, %v1189
    %v1742 = vadd.f32 %v299, %v1191
    %v1743 = vadd.f32 %v300, %v1382
    %v1744 = vadd.f32 %v301, %v1384
    %v1745 = vadd.f32 %v302, %v1575
    %v1746 = vadd.f32 %v303, %v1577
    %v1747 = vadd.f32 %v304, %v1193
    %v1748 = vadd.f32 %v305, %v1195
    %v1749 = vadd.f32 %v306, %v1386
    %v1750 = vadd.f32 %v307, %v1388
    %v1751 = vadd.f32 %v308, %v1579
    %v1752 = vadd.f32 %v309, %v1581
    %v1753 = vadd.f32 %v310, %v1199
    %v1754 = vadd.f32 %v311, %v1201
    %v1755 = vadd.f32 %v312, %v1392
    %v1756 = vadd.f32 %v313, %v1394
    %v1757 = vadd.f32 %v314, %v1585
    %v1758 = vadd.f32 %v315, %v1587
    %v1759 = vadd.f32 %v316, %v1203
    %v1760 = vadd.f32 %v317, %v1205
    %v1761 = vadd.f32 %v318, %v1396
    %v1762 = vadd.f32 %v319, %v1398
    %v1763 = vadd.f32 %v320, %v1589
    %v1764 = vadd.f32 %v321, %v1591
    %v1765 = vadd.f32 %v322, %v1209
    %v1766 = vadd.f32 %v323, %v1211
    %v1767 = vadd.f32 %v324, %v1402
    %v1768 = vadd.f32 %v325, %v1404
    %v1769 = vadd.f32 %v326, %v1595
    %v1770 = vadd.f32 %v327, %v1597
    %v1771 = vadd.f32 %v328, %v1213
    %v1772 = vadd.f32 %v329, %v1215
    %v1773 = vadd.f32 %v330, %v1406
    %v1774 = vadd.f32 %v331, %v1408
    %v1775 = vadd.f32 %v332, %v1599
    %v1776 = vadd.f32 %v333, %v1601
    %v1777 = vadd.f32 %v334, %v1219
    %v1778 = vadd.f32 %v335, %v1221
    %v1779 = vadd.f32 %v336, %v1412
    %v1780 = vadd.f32 %v337, %v1414
    %v1781 = vadd.f32 %v338, %v1605
    %v1782 = vadd.f32 %v339, %v1607
    %v1783 = vadd.f32 %v340, %v1223
    %v1784 = vadd.f32 %v341, %v1225
    %v1785 = vadd.f32 %v342, %v1416
    %v1786 = vadd.f32 %v343, %v1418
    %v1787 = vadd.f32 %v344, %v1609
    %v1788 = vadd.f32 %v345, %v1611
    %v1789 = vadd.f32 %v346, %v1229
    %v1790 = vadd.f32 %v347, %v1231
    %v1791 = vadd.f32 %v348, %v1422
    %v1792 = vadd.f32 %v349, %v1424
    %v1793 = vadd.f32 %v350, %v1615
    %v1794 = vadd.f32 %v351, %v1617
    %v1795 = vadd.f32 %v352, %v1233
    %v1796 = vadd.f32 %v353, %v1235
    %v1797 = vadd.f32 %v354, %v1426
    %v1798 = vadd.f32 %v355, %v1428
    %v1799 = vadd.f32 %v356, %v1619
    %v1800 = vadd.f32 %v357, %v1621
    %v1801 = vadd.f32 %v358, %v1239
    %v1802 = vadd.f32 %v359, %v1241
    %v1803 = vadd.f32 %v360, %v1432
    %v1804 = vadd.f32 %v361, %v1434
    %v1805 = vadd.f32 %v362, %v1625
    %v1806 = vadd.f32 %v363, %v1627
    %v1807 = vadd.f32 %v364, %v1243
    %v1808 = vadd.f32 %v365, %v1245
    %v1809 = vadd.f32 %v366, %v1436
    %v1810 = vadd.f32 %v367, %v1438
    %v1811 = vadd.f32 %v368, %v1629
    %v1812 = vadd.f32 %v369, %v1631
    %v1813 = vadd.f32 %v370, %v1249
    %v1814 = vadd.f32 %v371, %v1251
    %v1815 = vadd.f32 %v372, %v1442
    %v1816 = vadd.f32 %v373, %v1444
    %v1817 = vadd.f32 %v374, %v1635
    %v1818 = vadd.f32 %v375, %v1637
    %v1819 = vadd.f32 %v376, %v1253
    %v1820 = vadd.f32 %v377, %v1255
    %v1821 = vadd.f32 %v378, %v1446
    %v1822 = vadd.f32 %v379, %v1448
    %v1823 = vadd.f32 %v380, %v1639
    %v1824 = vadd.f32 %v381, %v1641
    %v1825 = vadd.f32 %v382, %v1259
    %v1826 = vadd.f32 %v383, %v1261
    %v1827 = vadd.f32 %v384, %v1452
    %v1828 = vadd.f32 %v385, %v1454
    %v1829 = vadd.f32 %v386, %v1645
    %v1830 = vadd.f32 %v387, %v1647
    %v1831 = vadd.f32 %v388, %v1263
    %v1832 = vadd.f32 %v389, %v1265
    %v1833 = vadd.f32 %v390, %v1456
    %v1834 = vadd.f32 %v391, %v1458
    %v1835 = vadd.f32 %v392, %v1649
    %v1836 = vadd.f32 %v393, %v1651
    %v1837 = vadd.f32 %v394, %v1269
    %v1838 = vadd.f32 %v395, %v1271
    %v1839 = vadd.f32 %v396, %v1462
    %v1840 = vadd.f32 %v397, %v1464
    %v1841 = vadd.f32 %v398, %v1655
    %v1842 = vadd.f32 %v399, %v1657
    %v1843 = vadd.f32 %v400, %v1273
    %v1844 = vadd.f32 %v401, %v1275
    %v1845 = vadd.f32 %v402, %v1466
    %v1846 = vadd.f32 %v403, %v1468
    %v1847 = vadd.f32 %v404, %v1659
    %v1848 = vadd.f32 %v405, %v1661
    %v1849 = vadd.f32 %v406, %v1279
    %v1850 = vadd.f32 %v407, %v1281
    %v1851 = vadd.f32 %v408, %v1472
    %v1852 = vadd.f32 %v409, %v1474
    %v1853 = vadd.f32 %v410, %v1665
    %v1854 = vadd.f32 %v411, %v1667
    %v1855 = vadd.f32 %v412, %v1283
    %v1856 = vadd.f32 %v413, %v1285
    %v1857 = vadd.f32 %v414, %v1476
    %v1858 = vadd.f32 %v415, %v1478
    %v1859 = vadd.f32 %v416, %v1669
    %v1860 = vadd.f32 %v417, %v1671
    %v1861 = vadd.f32 %v418, %v1289
    %v1862 = vadd.f32 %v419, %v1291
    %v1863 = vadd.f32 %v420, %v1482
    %v1864 = vadd.f32 %v421, %v1484
    %v1865 = vadd.f32 %v422, %v1675
    %v1866 = vadd.f32 %v423, %v1677
    %v1867 = vadd.f32 %v424, %v1293
    %v1868 = vadd.f32 %v425, %v1295
    %v1869 = vadd.f32 %v426, %v1486
    %v1870 = vadd.f32 %v427, %v1488
    %v1871 = vadd.f32 %v428, %v1679
    %v1872 = vadd.f32 %v429, %v1681
    %v1873 = vadd.f32 %v430, %v1299
    %v1874 = vadd.f32 %v431, %v1301
    %v1875 = vadd.f32 %v432, %v1492
    %v1876 = vadd.f32 %v433, %v1494
    %v1877 = vadd.f32 %v434, %v1685
    %v1878 = vadd.f32 %v435, %v1687
    %v1879 = vadd.f32 %v436, %v1303
    %v1880 = vadd.f32 %v437, %v1305
    %v1881 = vadd.f32 %v438, %v1496
    %v1882 = vadd.f32 %v439, %v1498
    %v1883 = vadd.f32 %v440, %v1689
    %v1884 = vadd.f32 %v441, %v1691
    %1885 = vst [vmem:[#allocation2] sm:$0xff] %v1693
    %1886 = vst [vmem:[#allocation2 + $0x8] sm:$0xff] %v1694
    %1887 = vst [vmem:[#allocation2 + $0x10] sm:$0xff] %v1695
    %1888 = vst [vmem:[#allocation2 + $0x18] sm:$0xff] %v1696
    %1889 = vst [vmem:[#allocation2 + $0x20] sm:$0xff] %v1697
    %1890 = vst [vmem:[#allocation2 + $0x28] sm:$0xff] %v1698
    %1891 = vst [vmem:[#allocation2 + $0x30] sm:$0xff] %v1699
    %1892 = vst [vmem:[#allocation2 + $0x38] sm:$0xff] %v1700
    %1893 = vst [vmem:[#allocation2 + $0x40] sm:$0xff] %v1701
    %1894 = vst [vmem:[#allocation2 + $0x48] sm:$0xff] %v1702
    %1895 = vst [vmem:[#allocation2 + $0x50] sm:$0xff] %v1703
    %1896 = vst [vmem:[#allocation2 + $0x58] sm:$0xff] %v1704
    %1897 = vst [vmem:[#allocation2 + $0x60] sm:$0xff] %v1705
    %1898 = vst [vmem:[#allocation2 + $0x68] sm:$0xff] %v1706
    %1899 = vst [vmem:[#allocation2 + $0x70] sm:$0xff] %v1707
    %1900 = vst [vmem:[#allocation2 + $0x78] sm:$0xff] %v1708
    %1901 = vst [vmem:[#allocation2 + $0x80] sm:$0xff] %v1709
    %1902 = vst [vmem:[#allocation2 + $0x88] sm:$0xff] %v1710
    %1903 = vst [vmem:[#allocation2 + $0x90] sm:$0xff] %v1711
    %1904 = vst [vmem:[#allocation2 + $0x98] sm:$0xff] %v1712
    %1905 = vst [vmem:[#allocation2 + $0xa0] sm:$0xff] %v1713
    %1906 = vst [vmem:[#allocation2 + $0xa8] sm:$0xff] %v1714
    %1907 = vst [vmem:[#allocation2 + $0xb0] sm:$0xff] %v1715
    %1908 = vst [vmem:[#allocation2 + $0xb8] sm:$0xff] %v1716
    %1909 = vst [vmem:[#allocation2 + $0xc0] sm:$0xff] %v1717
    %1910 = vst [vmem:[#allocation2 + $0xc8] sm:$0xff] %v1718
    %1911 = vst [vmem:[#allocation2 + $0xd0] sm:$0xff] %v1719
    %1912 = vst [vmem:[#allocation2 + $0xd8] sm:$0xff] %v1720
    %1913 = vst [vmem:[#allocation2 + $0xe0] sm:$0xff] %v1721
    %1914 = vst [vmem:[#allocation2 + $0xe8] sm:$0xff] %v1722
    %1915 = vst [vmem:[#allocation2 + $0xf0] sm:$0xff] %v1723
    %1916 = vst [vmem:[#allocation2 + $0xf8] sm:$0xff] %v1724
    %1917 = vst [vmem:[#allocation2 + $0x100] sm:$0xff] %v1725
    %1918 = vst [vmem:[#allocation2 + $0x108] sm:$0xff] %v1726
    %1919 = vst [vmem:[#allocation2 + $0x110] sm:$0xff] %v1727
    %1920 = vst [vmem:[#allocation2 + $0x118] sm:$0xff] %v1728
    %1921 = vst [vmem:[#allocation2 + $0x120] sm:$0xff] %v1729
    %1922 = vst [vmem:[#allocation2 + $0x128] sm:$0xff] %v1730
    %1923 = vst [vmem:[#allocation2 + $0x130] sm:$0xff] %v1731
    %1924 = vst [vmem:[#allocation2 + $0x138] sm:$0xff] %v1732
    %1925 = vst [vmem:[#allocation2 + $0x140] sm:$0xff] %v1733
    %1926 = vst [vmem:[#allocation2 + $0x148] sm:$0xff] %v1734
    %1927 = vst [vmem:[#allocation2 + $0x150] sm:$0xff] %v1735
    %1928 = vst [vmem:[#allocation2 + $0x158] sm:$0xff] %v1736
    %1929 = vst [vmem:[#allocation2 + $0x160] sm:$0xff] %v1737
    %1930 = vst [vmem:[#allocation2 + $0x168] sm:$0xff] %v1738
    %1931 = vst [vmem:[#allocation2 + $0x170] sm:$0xff] %v1739
    %1932 = vst [vmem:[#allocation2 + $0x178] sm:$0xff] %v1740
    %1933 = vst [vmem:[#allocation2 + $0x180] sm:$0xff] %v1741
    %1934 = vst [vmem:[#allocation2 + $0x188] sm:$0xff] %v1742
    %1935 = vst [vmem:[#allocation2 + $0x190] sm:$0xff] %v1743
    %1936 = vst [vmem:[#allocation2 + $0x198] sm:$0xff] %v1744
    %1937 = vst [vmem:[#allocation2 + $0x1a0] sm:$0xff] %v1745
    %1938 = vst [vmem:[#allocation2 + $0x1a8] sm:$0xff] %v1746
    %1939 = vst [vmem:[#allocation2 + $0x1b0] sm:$0xff] %v1747
    %1940 = vst [vmem:[#allocation2 + $0x1b8] sm:$0xff] %v1748
    %1941 = vst [vmem:[#allocation2 + $0x1c0] sm:$0xff] %v1749
    %1942 = vst [vmem:[#allocation2 + $0x1c8] sm:$0xff] %v1750
    %1943 = vst [vmem:[#allocation2 + $0x1d0] sm:$0xff] %v1751
    %1944 = vst [vmem:[#allocation2 + $0x1d8] sm:$0xff] %v1752
    %1945 = vst [vmem:[#allocation2 + $0x1e0] sm:$0xff] %v1753
    %1946 = vst [vmem:[#allocation2 + $0x1e8] sm:$0xff] %v1754
    %1947 = vst [vmem:[#allocation2 + $0x1f0] sm:$0xff] %v1755
    %1948 = vst [vmem:[#allocation2 + $0x1f8] sm:$0xff] %v1756
    %1949 = vst [vmem:[#allocation2 + $0x200] sm:$0xff] %v1757
    %1950 = vst [vmem:[#allocation2 + $0x208] sm:$0xff] %v1758
    %1951 = vst [vmem:[#allocation2 + $0x210] sm:$0xff] %v1759
    %1952 = vst [vmem:[#allocation2 + $0x218] sm:$0xff] %v1760
    %1953 = vst [vmem:[#allocation2 + $0x220] sm:$0xff] %v1761
    %1954 = vst [vmem:[#allocation2 + $0x228] sm:$0xff] %v1762
    %1955 = vst [vmem:[#allocation2 + $0x230] sm:$0xff] %v1763
    %1956 = vst [vmem:[#allocation2 + $0x238] sm:$0xff] %v1764
    %1957 = vst [vmem:[#allocation2 + $0x240] sm:$0xff] %v1765
    %1958 = vst [vmem:[#allocation2 + $0x248] sm:$0xff] %v1766
    %1959 = vst [vmem:[#allocation2 + $0x250] sm:$0xff] %v1767
    %1960 = vst [vmem:[#allocation2 + $0x258] sm:$0xff] %v1768
    %1961 = vst [vmem:[#allocation2 + $0x260] sm:$0xff] %v1769
    %1962 = vst [vmem:[#allocation2 + $0x268] sm:$0xff] %v1770
    %1963 = vst [vmem:[#allocation2 + $0x270] sm:$0xff] %v1771
    %1964 = vst [vmem:[#allocation2 + $0x278] sm:$0xff] %v1772
    %1965 = vst [vmem:[#allocation2 + $0x280] sm:$0xff] %v1773
    %1966 = vst [vmem:[#allocation2 + $0x288] sm:$0xff] %v1774
    %1967 = vst [vmem:[#allocation2 + $0x290] sm:$0xff] %v1775
    %1968 = vst [vmem:[#allocation2 + $0x298] sm:$0xff] %v1776
    %1969 = vst [vmem:[#allocation2 + $0x2a0] sm:$0xff] %v1777
    %1970 = vst [vmem:[#allocation2 + $0x2a8] sm:$0xff] %v1778
    %1971 = vst [vmem:[#allocation2 + $0x2b0] sm:$0xff] %v1779
    %1972 = vst [vmem:[#allocation2 + $0x2b8] sm:$0xff] %v1780
    %1973 = vst [vmem:[#allocation2 + $0x2c0] sm:$0xff] %v1781
    %1974 = vst [vmem:[#allocation2 + $0x2c8] sm:$0xff] %v1782
    %1975 = vst [vmem:[#allocation2 + $0x2d0] sm:$0xff] %v1783
    %1976 = vst [vmem:[#allocation2 + $0x2d8] sm:$0xff] %v1784
    %1977 = vst [vmem:[#allocation2 + $0x2e0] sm:$0xff] %v1785
    %1978 = vst [vmem:[#allocation2 + $0x2e8] sm:$0xff] %v1786
    %1979 = vst [vmem:[#allocation2 + $0x2f0] sm:$0xff] %v1787
    %1980 = vst [vmem:[#allocation2 + $0x2f8] sm:$0xff] %v1788
    %1981 = vst [vmem:[#allocation2 + $0x300] sm:$0xff] %v1789
    %1982 = vst [vmem:[#allocation2 + $0x308] sm:$0xff] %v1790
    %1983 = vst [vmem:[#allocation2 + $0x310] sm:$0xff] %v1791
    %1984 = vst [vmem:[#allocation2 + $0x318] sm:$0xff] %v1792
    %1985 = vst [vmem:[#allocation2 + $0x320] sm:$0xff] %v1793
    %1986 = vst [vmem:[#allocation2 + $0x328] sm:$0xff] %v1794
    %1987 = vst [vmem:[#allocation2 + $0x330] sm:$0xff] %v1795
    %1988 = vst [vmem:[#allocation2 + $0x338] sm:$0xff] %v1796
    %1989 = vst [vmem:[#allocation2 + $0x340] sm:$0xff] %v1797
    %1990 = vst [vmem:[#allocation2 + $0x348] sm:$0xff] %v1798
    %1991 = vst [vmem:[#allocation2 + $0x350] sm:$0xff] %v1799
    %1992 = vst [vmem:[#allocation2 + $0x358] sm:$0xff] %v1800
    %1993 = vst [vmem:[#allocation2 + $0x360] sm:$0xff] %v1801
    %1994 = vst [vmem:[#allocation2 + $0x368] sm:$0xff] %v1802
    %1995 = vst [vmem:[#allocation2 + $0x370] sm:$0xff] %v1803
    %1996 = vst [vmem:[#allocation2 + $0x378] sm:$0xff] %v1804
    %1997 = vst [vmem:[#allocation2 + $0x380] sm:$0xff] %v1805
    %1998 = vst [vmem:[#allocation2 + $0x388] sm:$0xff] %v1806
    %1999 = vst [vmem:[#allocation2 + $0x390] sm:$0xff] %v1807
    %2000 = vst [vmem:[#allocation2 + $0x398] sm:$0xff] %v1808
    %2001 = vst [vmem:[#allocation2 + $0x3a0] sm:$0xff] %v1809
    %2002 = vst [vmem:[#allocation2 + $0x3a8] sm:$0xff] %v1810
    %2003 = vst [vmem:[#allocation2 + $0x3b0] sm:$0xff] %v1811
    %2004 = vst [vmem:[#allocation2 + $0x3b8] sm:$0xff] %v1812
    %2005 = vst [vmem:[#allocation2 + $0x3c0] sm:$0xff] %v1813
    %2006 = vst [vmem:[#allocation2 + $0x3c8] sm:$0xff] %v1814
    %2007 = vst [vmem:[#allocation2 + $0x3d0] sm:$0xff] %v1815
    %2008 = vst [vmem:[#allocation2 + $0x3d8] sm:$0xff] %v1816
    %2009 = vst [vmem:[#allocation2 + $0x3e0] sm:$0xff] %v1817
    %2010 = vst [vmem:[#allocation2 + $0x3e8] sm:$0xff] %v1818
    %2011 = vst [vmem:[#allocation2 + $0x3f0] sm:$0xff] %v1819
    %2012 = vst [vmem:[#allocation2 + $0x3f8] sm:$0xff] %v1820
    %2013 = vst [vmem:[#allocation2 + $0x400] sm:$0xff] %v1821
    %2014 = vst [vmem:[#allocation2 + $0x408] sm:$0xff] %v1822
    %2015 = vst [vmem:[#allocation2 + $0x410] sm:$0xff] %v1823
    %2016 = vst [vmem:[#allocation2 + $0x418] sm:$0xff] %v1824
    %2017 = vst [vmem:[#allocation2 + $0x420] sm:$0xff] %v1825
    %2018 = vst [vmem:[#allocation2 + $0x428] sm:$0xff] %v1826
    %2019 = vst [vmem:[#allocation2 + $0x430] sm:$0xff] %v1827
    %2020 = vst [vmem:[#allocation2 + $0x438] sm:$0xff] %v1828
    %2021 = vst [vmem:[#allocation2 + $0x440] sm:$0xff] %v1829
    %2022 = vst [vmem:[#allocation2 + $0x448] sm:$0xff] %v1830
    %2023 = vst [vmem:[#allocation2 + $0x450] sm:$0xff] %v1831
    %2024 = vst [vmem:[#allocation2 + $0x458] sm:$0xff] %v1832
    %2025 = vst [vmem:[#allocation2 + $0x460] sm:$0xff] %v1833
    %2026 = vst [vmem:[#allocation2 + $0x468] sm:$0xff] %v1834
    %2027 = vst [vmem:[#allocation2 + $0x470] sm:$0xff] %v1835
    %2028 = vst [vmem:[#allocation2 + $0x478] sm:$0xff] %v1836
    %2029 = vst [vmem:[#allocation2 + $0x480] sm:$0xff] %v1837
    %2030 = vst [vmem:[#allocation2 + $0x488] sm:$0xff] %v1838
    %2031 = vst [vmem:[#allocation2 + $0x490] sm:$0xff] %v1839
    %2032 = vst [vmem:[#allocation2 + $0x498] sm:$0xff] %v1840
    %2033 = vst [vmem:[#allocation2 + $0x4a0] sm:$0xff] %v1841
    %2034 = vst [vmem:[#allocation2 + $0x4a8] sm:$0xff] %v1842
    %2035 = vst [vmem:[#allocation2 + $0x4b0] sm:$0xff] %v1843
    %2036 = vst [vmem:[#allocation2 + $0x4b8] sm:$0xff] %v1844
    %2037 = vst [vmem:[#allocation2 + $0x4c0] sm:$0xff] %v1845
    %2038 = vst [vmem:[#allocation2 + $0x4c8] sm:$0xff] %v1846
    %2039 = vst [vmem:[#allocation2 + $0x4d0] sm:$0xff] %v1847
    %2040 = vst [vmem:[#allocation2 + $0x4d8] sm:$0xff] %v1848
    %2041 = vst [vmem:[#allocation2 + $0x4e0] sm:$0xff] %v1849
    %2042 = vst [vmem:[#allocation2 + $0x4e8] sm:$0xff] %v1850
    %2043 = vst [vmem:[#allocation2 + $0x4f0] sm:$0xff] %v1851
    %2044 = vst [vmem:[#allocation2 + $0x4f8] sm:$0xff] %v1852
    %2045 = vst [vmem:[#allocation2 + $0x500] sm:$0xff] %v1853
    %2046 = vst [vmem:[#allocation2 + $0x508] sm:$0xff] %v1854
    %2047 = vst [vmem:[#allocation2 + $0x510] sm:$0xff] %v1855
    %2048 = vst [vmem:[#allocation2 + $0x518] sm:$0xff] %v1856
    %2049 = vst [vmem:[#allocation2 + $0x520] sm:$0xff] %v1857
    %2050 = vst [vmem:[#allocation2 + $0x528] sm:$0xff] %v1858
    %2051 = vst [vmem:[#allocation2 + $0x530] sm:$0xff] %v1859
    %2052 = vst [vmem:[#allocation2 + $0x538] sm:$0xff] %v1860
    %2053 = vst [vmem:[#allocation2 + $0x540] sm:$0xff] %v1861
    %2054 = vst [vmem:[#allocation2 + $0x548] sm:$0xff] %v1862
    %2055 = vst [vmem:[#allocation2 + $0x550] sm:$0xff] %v1863
    %2056 = vst [vmem:[#allocation2 + $0x558] sm:$0xff] %v1864
    %2057 = vst [vmem:[#allocation2 + $0x560] sm:$0xff] %v1865
    %2058 = vst [vmem:[#allocation2 + $0x568] sm:$0xff] %v1866
    %2059 = vst [vmem:[#allocation2 + $0x570] sm:$0xff] %v1867
    %2060 = vst [vmem:[#allocation2 + $0x578] sm:$0xff] %v1868
    %2061 = vst [vmem:[#allocation2 + $0x580] sm:$0xff] %v1869
    %2062 = vst [vmem:[#allocation2 + $0x588] sm:$0xff] %v1870
    %2063 = vst [vmem:[#allocation2 + $0x590] sm:$0xff] %v1871
    %2064 = vst [vmem:[#allocation2 + $0x598] sm:$0xff] %v1872
    %2065 = vst [vmem:[#allocation2 + $0x5a0] sm:$0xff] %v1873
    %2066 = vst [vmem:[#allocation2 + $0x5a8] sm:$0xff] %v1874
    %2067 = vst [vmem:[#allocation2 + $0x5b0] sm:$0xff] %v1875
    %2068 = vst [vmem:[#allocation2 + $0x5b8] sm:$0xff] %v1876
    %2069 = vst [vmem:[#allocation2 + $0x5c0] sm:$0xff] %v1877
    %2070 = vst [vmem:[#allocation2 + $0x5c8] sm:$0xff] %v1878
    %2071 = vst [vmem:[#allocation2 + $0x5d0] sm:$0xff] %v1879
    %2072 = vst [vmem:[#allocation2 + $0x5d8] sm:$0xff] %v1880
    %2073 = vst [vmem:[#allocation2 + $0x5e0] sm:$0xff] %v1881
    %2074 = vst [vmem:[#allocation2 + $0x5e8] sm:$0xff] %v1882
    %2075 = vst [vmem:[#allocation2 + $0x5f0] sm:$0xff] %v1883
    %2076 = vst [vmem:[#allocation2 + $0x5f8] sm:$0xff] %v1884
    // Predicated region
    $region30: #{tpu_custom_call.1} parent=1 // pred_check
      %p2077 = pneg %p54
    $region31: #{tpu_custom_call.1} parent=1 // pred_check_branch
      %2079 = sbr.rel (%p2077) target = $region33
    $region32: #{tpu_custom_call.1} parent=1 // pred_region
      %v2080 = vld [vmem:[#allocation2] sm:$0xff]
      %v2081 = vld [vmem:[#allocation2 + $0x8] sm:$0xff]
      %v2082 = vld [vmem:[#allocation2 + $0x10] sm:$0xff]
      %v2083 = vld [vmem:[#allocation2 + $0x18] sm:$0xff]
      %v2084 = vld [vmem:[#allocation2 + $0x20] sm:$0xff]
      %v2085 = vld [vmem:[#allocation2 + $0x28] sm:$0xff]
      %v2086 = vld [vmem:[#allocation2 + $0x30] sm:$0xff]
      %v2087 = vld [vmem:[#allocation2 + $0x38] sm:$0xff]
      %v2088 = vld [vmem:[#allocation2 + $0x40] sm:$0xff]
      %v2089 = vld [vmem:[#allocation2 + $0x48] sm:$0xff]
      %v2090 = vld [vmem:[#allocation2 + $0x50] sm:$0xff]
      %v2091 = vld [vmem:[#allocation2 + $0x58] sm:$0xff]
      %v2092 = vld [vmem:[#allocation2 + $0x60] sm:$0xff]
      %v2093 = vld [vmem:[#allocation2 + $0x68] sm:$0xff]
      %v2094 = vld [vmem:[#allocation2 + $0x70] sm:$0xff]
      %v2095 = vld [vmem:[#allocation2 + $0x78] sm:$0xff]
      %v2096 = vld [vmem:[#allocation2 + $0x80] sm:$0xff]
      %v2097 = vld [vmem:[#allocation2 + $0x88] sm:$0xff]
      %v2098 = vld [vmem:[#allocation2 + $0x90] sm:$0xff]
      %v2099 = vld [vmem:[#allocation2 + $0x98] sm:$0xff]
      %v2100 = vld [vmem:[#allocation2 + $0xa0] sm:$0xff]
      %v2101 = vld [vmem:[#allocation2 + $0xa8] sm:$0xff]
      %v2102 = vld [vmem:[#allocation2 + $0xb0] sm:$0xff]
      %v2103 = vld [vmem:[#allocation2 + $0xb8] sm:$0xff]
      %v2104 = vld [vmem:[#allocation2 + $0xc0] sm:$0xff]
      %v2105 = vld [vmem:[#allocation2 + $0xc8] sm:$0xff]
      %v2106 = vld [vmem:[#allocation2 + $0xd0] sm:$0xff]
      %v2107 = vld [vmem:[#allocation2 + $0xd8] sm:$0xff]
      %v2108 = vld [vmem:[#allocation2 + $0xe0] sm:$0xff]
      %v2109 = vld [vmem:[#allocation2 + $0xe8] sm:$0xff]
      %v2110 = vld [vmem:[#allocation2 + $0xf0] sm:$0xff]
      %v2111 = vld [vmem:[#allocation2 + $0xf8] sm:$0xff]
      %v2112 = vld [vmem:[#allocation2 + $0x100] sm:$0xff]
      %v2113 = vld [vmem:[#allocation2 + $0x108] sm:$0xff]
      %v2114 = vld [vmem:[#allocation2 + $0x110] sm:$0xff]
      %v2115 = vld [vmem:[#allocation2 + $0x118] sm:$0xff]
      %v2116 = vld [vmem:[#allocation2 + $0x120] sm:$0xff]
      %v2117 = vld [vmem:[#allocation2 + $0x128] sm:$0xff]
      %v2118 = vld [vmem:[#allocation2 + $0x130] sm:$0xff]
      %v2119 = vld [vmem:[#allocation2 + $0x138] sm:$0xff]
      %v2120 = vld [vmem:[#allocation2 + $0x140] sm:$0xff]
      %v2121 = vld [vmem:[#allocation2 + $0x148] sm:$0xff]
      %v2122 = vld [vmem:[#allocation2 + $0x150] sm:$0xff]
      %v2123 = vld [vmem:[#allocation2 + $0x158] sm:$0xff]
      %v2124 = vld [vmem:[#allocation2 + $0x160] sm:$0xff]
      %v2125 = vld [vmem:[#allocation2 + $0x168] sm:$0xff]
      %v2126 = vld [vmem:[#allocation2 + $0x170] sm:$0xff]
      %v2127 = vld [vmem:[#allocation2 + $0x178] sm:$0xff]
      %v2128 = vld [vmem:[#allocation2 + $0x180] sm:$0xff]
      %v2129 = vld [vmem:[#allocation2 + $0x188] sm:$0xff]
      %v2130 = vld [vmem:[#allocation2 + $0x190] sm:$0xff]
      %v2131 = vld [vmem:[#allocation2 + $0x198] sm:$0xff]
      %v2132 = vld [vmem:[#allocation2 + $0x1a0] sm:$0xff]
      %v2133 = vld [vmem:[#allocation2 + $0x1a8] sm:$0xff]
      %v2134 = vld [vmem:[#allocation2 + $0x1b0] sm:$0xff]
      %v2135 = vld [vmem:[#allocation2 + $0x1b8] sm:$0xff]
      %v2136 = vld [vmem:[#allocation2 + $0x1c0] sm:$0xff]
      %v2137 = vld [vmem:[#allocation2 + $0x1c8] sm:$0xff]
      %v2138 = vld [vmem:[#allocation2 + $0x1d0] sm:$0xff]
      %v2139 = vld [vmem:[#allocation2 + $0x1d8] sm:$0xff]
      %v2140 = vld [vmem:[#allocation2 + $0x1e0] sm:$0xff]
      %v2141 = vld [vmem:[#allocation2 + $0x1e8] sm:$0xff]
      %v2142 = vld [vmem:[#allocation2 + $0x1f0] sm:$0xff]
      %v2143 = vld [vmem:[#allocation2 + $0x1f8] sm:$0xff]
      %v2144 = vld [vmem:[#allocation2 + $0x200] sm:$0xff]
      %v2145 = vld [vmem:[#allocation2 + $0x208] sm:$0xff]
      %v2146 = vld [vmem:[#allocation2 + $0x210] sm:$0xff]
      %v2147 = vld [vmem:[#allocation2 + $0x218] sm:$0xff]
      %v2148 = vld [vmem:[#allocation2 + $0x220] sm:$0xff]
      %v2149 = vld [vmem:[#allocation2 + $0x228] sm:$0xff]
      %v2150 = vld [vmem:[#allocation2 + $0x230] sm:$0xff]
      %v2151 = vld [vmem:[#allocation2 + $0x238] sm:$0xff]
      %v2152 = vld [vmem:[#allocation2 + $0x240] sm:$0xff]
      %v2153 = vld [vmem:[#allocation2 + $0x248] sm:$0xff]
      %v2154 = vld [vmem:[#allocation2 + $0x250] sm:$0xff]
      %v2155 = vld [vmem:[#allocation2 + $0x258] sm:$0xff]
      %v2156 = vld [vmem:[#allocation2 + $0x260] sm:$0xff]
      %v2157 = vld [vmem:[#allocation2 + $0x268] sm:$0xff]
      %v2158 = vld [vmem:[#allocation2 + $0x270] sm:$0xff]
      %v2159 = vld [vmem:[#allocation2 + $0x278] sm:$0xff]
      %v2160 = vld [vmem:[#allocation2 + $0x280] sm:$0xff]
      %v2161 = vld [vmem:[#allocation2 + $0x288] sm:$0xff]
      %v2162 = vld [vmem:[#allocation2 + $0x290] sm:$0xff]
      %v2163 = vld [vmem:[#allocation2 + $0x298] sm:$0xff]
      %v2164 = vld [vmem:[#allocation2 + $0x2a0] sm:$0xff]
      %v2165 = vld [vmem:[#allocation2 + $0x2a8] sm:$0xff]
      %v2166 = vld [vmem:[#allocation2 + $0x2b0] sm:$0xff]
      %v2167 = vld [vmem:[#allocation2 + $0x2b8] sm:$0xff]
      %v2168 = vld [vmem:[#allocation2 + $0x2c0] sm:$0xff]
      %v2169 = vld [vmem:[#allocation2 + $0x2c8] sm:$0xff]
      %v2170 = vld [vmem:[#allocation2 + $0x2d0] sm:$0xff]
      %v2171 = vld [vmem:[#allocation2 + $0x2d8] sm:$0xff]
      %v2172 = vld [vmem:[#allocation2 + $0x2e0] sm:$0xff]
      %v2173 = vld [vmem:[#allocation2 + $0x2e8] sm:$0xff]
      %v2174 = vld [vmem:[#allocation2 + $0x2f0] sm:$0xff]
      %v2175 = vld [vmem:[#allocation2 + $0x2f8] sm:$0xff]
      %v2176 = vld [vmem:[#allocation2 + $0x300] sm:$0xff]
      %v2177 = vld [vmem:[#allocation2 + $0x308] sm:$0xff]
      %v2178 = vld [vmem:[#allocation2 + $0x310] sm:$0xff]
      %v2179 = vld [vmem:[#allocation2 + $0x318] sm:$0xff]
      %v2180 = vld [vmem:[#allocation2 + $0x320] sm:$0xff]
      %v2181 = vld [vmem:[#allocation2 + $0x328] sm:$0xff]
      %v2182 = vld [vmem:[#allocation2 + $0x330] sm:$0xff]
      %v2183 = vld [vmem:[#allocation2 + $0x338] sm:$0xff]
      %v2184 = vld [vmem:[#allocation2 + $0x340] sm:$0xff]
      %v2185 = vld [vmem:[#allocation2 + $0x348] sm:$0xff]
      %v2186 = vld [vmem:[#allocation2 + $0x350] sm:$0xff]
      %v2187 = vld [vmem:[#allocation2 + $0x358] sm:$0xff]
      %v2188 = vld [vmem:[#allocation2 + $0x360] sm:$0xff]
      %v2189 = vld [vmem:[#allocation2 + $0x368] sm:$0xff]
      %v2190 = vld [vmem:[#allocation2 + $0x370] sm:$0xff]
      %v2191 = vld [vmem:[#allocation2 + $0x378] sm:$0xff]
      %v2192 = vld [vmem:[#allocation2 + $0x380] sm:$0xff]
      %v2193 = vld [vmem:[#allocation2 + $0x388] sm:$0xff]
      %v2194 = vld [vmem:[#allocation2 + $0x390] sm:$0xff]
      %v2195 = vld [vmem:[#allocation2 + $0x398] sm:$0xff]
      %v2196 = vld [vmem:[#allocation2 + $0x3a0] sm:$0xff]
      %v2197 = vld [vmem:[#allocation2 + $0x3a8] sm:$0xff]
      %v2198 = vld [vmem:[#allocation2 + $0x3b0] sm:$0xff]
      %v2199 = vld [vmem:[#allocation2 + $0x3b8] sm:$0xff]
      %v2200 = vld [vmem:[#allocation2 + $0x3c0] sm:$0xff]
      %v2201 = vld [vmem:[#allocation2 + $0x3c8] sm:$0xff]
      %v2202 = vld [vmem:[#allocation2 + $0x3d0] sm:$0xff]
      %v2203 = vld [vmem:[#allocation2 + $0x3d8] sm:$0xff]
      %v2204 = vld [vmem:[#allocation2 + $0x3e0] sm:$0xff]
      %v2205 = vld [vmem:[#allocation2 + $0x3e8] sm:$0xff]
      %v2206 = vld [vmem:[#allocation2 + $0x3f0] sm:$0xff]
      %v2207 = vld [vmem:[#allocation2 + $0x3f8] sm:$0xff]
      %v2208 = vld [vmem:[#allocation2 + $0x400] sm:$0xff]
      %v2209 = vld [vmem:[#allocation2 + $0x408] sm:$0xff]
      %v2210 = vld [vmem:[#allocation2 + $0x410] sm:$0xff]
      %v2211 = vld [vmem:[#allocation2 + $0x418] sm:$0xff]
      %v2212 = vld [vmem:[#allocation2 + $0x420] sm:$0xff]
      %v2213 = vld [vmem:[#allocation2 + $0x428] sm:$0xff]
      %v2214 = vld [vmem:[#allocation2 + $0x430] sm:$0xff]
      %v2215 = vld [vmem:[#allocation2 + $0x438] sm:$0xff]
      %v2216 = vld [vmem:[#allocation2 + $0x440] sm:$0xff]
      %v2217 = vld [vmem:[#allocation2 + $0x448] sm:$0xff]
      %v2218 = vld [vmem:[#allocation2 + $0x450] sm:$0xff]
      %v2219 = vld [vmem:[#allocation2 + $0x458] sm:$0xff]
      %v2220 = vld [vmem:[#allocation2 + $0x460] sm:$0xff]
      %v2221 = vld [vmem:[#allocation2 + $0x468] sm:$0xff]
      %v2222 = vld [vmem:[#allocation2 + $0x470] sm:$0xff]
      %v2223 = vld [vmem:[#allocation2 + $0x478] sm:$0xff]
      %v2224 = vld [vmem:[#allocation2 + $0x480] sm:$0xff]
      %v2225 = vld [vmem:[#allocation2 + $0x488] sm:$0xff]
      %v2226 = vld [vmem:[#allocation2 + $0x490] sm:$0xff]
      %v2227 = vld [vmem:[#allocation2 + $0x498] sm:$0xff]
      %v2228 = vld [vmem:[#allocation2 + $0x4a0] sm:$0xff]
      %v2229 = vld [vmem:[#allocation2 + $0x4a8] sm:$0xff]
      %v2230 = vld [vmem:[#allocation2 + $0x4b0] sm:$0xff]
      %v2231 = vld [vmem:[#allocation2 + $0x4b8] sm:$0xff]
      %v2232 = vld [vmem:[#allocation2 + $0x4c0] sm:$0xff]
      %v2233 = vld [vmem:[#allocation2 + $0x4c8] sm:$0xff]
      %v2234 = vld [vmem:[#allocation2 + $0x4d0] sm:$0xff]
      %v2235 = vld [vmem:[#allocation2 + $0x4d8] sm:$0xff]
      %v2236 = vld [vmem:[#allocation2 + $0x4e0] sm:$0xff]
      %v2237 = vld [vmem:[#allocation2 + $0x4e8] sm:$0xff]
      %v2238 = vld [vmem:[#allocation2 + $0x4f0] sm:$0xff]
      %v2239 = vld [vmem:[#allocation2 + $0x4f8] sm:$0xff]
      %v2240 = vld [vmem:[#allocation2 + $0x500] sm:$0xff]
      %v2241 = vld [vmem:[#allocation2 + $0x508] sm:$0xff]
      %v2242 = vld [vmem:[#allocation2 + $0x510] sm:$0xff]
      %v2243 = vld [vmem:[#allocation2 + $0x518] sm:$0xff]
      %v2244 = vld [vmem:[#allocation2 + $0x520] sm:$0xff]
      %v2245 = vld [vmem:[#allocation2 + $0x528] sm:$0xff]
      %v2246 = vld [vmem:[#allocation2 + $0x530] sm:$0xff]
      %v2247 = vld [vmem:[#allocation2 + $0x538] sm:$0xff]
      %v2248 = vld [vmem:[#allocation2 + $0x540] sm:$0xff]
      %v2249 = vld [vmem:[#allocation2 + $0x548] sm:$0xff]
      %v2250 = vld [vmem:[#allocation2 + $0x550] sm:$0xff]
      %v2251 = vld [vmem:[#allocation2 + $0x558] sm:$0xff]
      %v2252 = vld [vmem:[#allocation2 + $0x560] sm:$0xff]
      %v2253 = vld [vmem:[#allocation2 + $0x568] sm:$0xff]
      %v2254 = vld [vmem:[#allocation2 + $0x570] sm:$0xff]
      %v2255 = vld [vmem:[#allocation2 + $0x578] sm:$0xff]
      %v2256 = vld [vmem:[#allocation2 + $0x580] sm:$0xff]
      %v2257 = vld [vmem:[#allocation2 + $0x588] sm:$0xff]
      %v2258 = vld [vmem:[#allocation2 + $0x590] sm:$0xff]
      %v2259 = vld [vmem:[#allocation2 + $0x598] sm:$0xff]
      %v2260 = vld [vmem:[#allocation2 + $0x5a0] sm:$0xff]
      %v2261 = vld [vmem:[#allocation2 + $0x5a8] sm:$0xff]
      %v2262 = vld [vmem:[#allocation2 + $0x5b0] sm:$0xff]
      %v2263 = vld [vmem:[#allocation2 + $0x5b8] sm:$0xff]
      %v2264 = vld [vmem:[#allocation2 + $0x5c0] sm:$0xff]
      %v2265 = vld [vmem:[#allocation2 + $0x5c8] sm:$0xff]
      %v2266 = vld [vmem:[#allocation2 + $0x5d0] sm:$0xff]
      %v2267 = vld [vmem:[#allocation2 + $0x5d8] sm:$0xff]
      %v2268 = vld [vmem:[#allocation2 + $0x5e0] sm:$0xff]
      %v2269 = vld [vmem:[#allocation2 + $0x5e8] sm:$0xff]
      %v2270 = vld [vmem:[#allocation2 + $0x5f0] sm:$0xff]
      %v2271 = vld [vmem:[#allocation2 + $0x5f8] sm:$0xff]
      %v2272 = vld [vmem:[#allocation8] sm:$0x3f]
      %v2274 = vlaneseq
      %v2275 = vshrl.u32 %v2274, 7
      %v2276 = vsub.s32 0, %v2275
      %v2277 = vrot.slane %v2272, %v2276
      %v2278 = vlaneseq
      %v2279 = vshrl.u32 %v2278, 7
      %v2280 = vsub.s32 1, %v2279
      %v2281 = vrot.slane %v2272, %v2280
      %v2282 = vlaneseq
      %v2283 = vshrl.u32 %v2282, 7
      %v2284 = vsub.s32 2, %v2283
      %v2285 = vrot.slane %v2272, %v2284
      %v2286 = vlaneseq
      %v2287 = vshrl.u32 %v2286, 7
      %v2288 = vsub.s32 3, %v2287
      %v2289 = vrot.slane %v2272, %v2288
      %v2290 = vlaneseq
      %v2291 = vshrl.u32 %v2290, 7
      %v2292 = vsub.s32 4, %v2291
      %v2293 = vrot.slane %v2272, %v2292
      %v2294 = vlaneseq
      %v2295 = vshrl.u32 %v2294, 7
      %v2296 = vsub.s32 5, %v2295
      %v2297 = vrot.slane %v2272, %v2296
      %v2304 = vadd.f32 %v2080, %v2277
      %v2305 = vadd.f32 %v2081, %v2281
      %v2306 = vadd.f32 %v2082, %v2285
      %v2307 = vadd.f32 %v2083, %v2289
      %v2308 = vadd.f32 %v2084, %v2293
      %v2309 = vadd.f32 %v2085, %v2297
      %v2310 = vadd.f32 %v2086, %v2277
      %v2311 = vadd.f32 %v2087, %v2281
      %v2312 = vadd.f32 %v2088, %v2285
      %v2313 = vadd.f32 %v2089, %v2289
      %v2314 = vadd.f32 %v2090, %v2293
      %v2315 = vadd.f32 %v2091, %v2297
      %v2316 = vadd.f32 %v2092, %v2277
      %v2317 = vadd.f32 %v2093, %v2281
      %v2318 = vadd.f32 %v2094, %v2285
      %v2319 = vadd.f32 %v2095, %v2289
      %v2320 = vadd.f32 %v2096, %v2293
      %v2321 = vadd.f32 %v2097, %v2297
      %v2322 = vadd.f32 %v2098, %v2277
      %v2323 = vadd.f32 %v2099, %v2281
      %v2324 = vadd.f32 %v2100, %v2285
      %v2325 = vadd.f32 %v2101, %v2289
      %v2326 = vadd.f32 %v2102, %v2293
      %v2327 = vadd.f32 %v2103, %v2297
      %v2328 = vadd.f32 %v2104, %v2277
      %v2329 = vadd.f32 %v2105, %v2281
      %v2330 = vadd.f32 %v2106, %v2285
      %v2331 = vadd.f32 %v2107, %v2289
      %v2332 = vadd.f32 %v2108, %v2293
      %v2333 = vadd.f32 %v2109, %v2297
      %v2334 = vadd.f32 %v2110, %v2277
      %v2335 = vadd.f32 %v2111, %v2281
      %v2336 = vadd.f32 %v2112, %v2285
      %v2337 = vadd.f32 %v2113, %v2289
      %v2338 = vadd.f32 %v2114, %v2293
      %v2339 = vadd.f32 %v2115, %v2297
      %v2340 = vadd.f32 %v2116, %v2277
      %v2341 = vadd.f32 %v2117, %v2281
      %v2342 = vadd.f32 %v2118, %v2285
      %v2343 = vadd.f32 %v2119, %v2289
      %v2344 = vadd.f32 %v2120, %v2293
      %v2345 = vadd.f32 %v2121, %v2297
      %v2346 = vadd.f32 %v2122, %v2277
      %v2347 = vadd.f32 %v2123, %v2281
      %v2348 = vadd.f32 %v2124, %v2285
      %v2349 = vadd.f32 %v2125, %v2289
      %v2350 = vadd.f32 %v2126, %v2293
      %v2351 = vadd.f32 %v2127, %v2297
      %v2352 = vadd.f32 %v2128, %v2277
      %v2353 = vadd.f32 %v2129, %v2281
      %v2354 = vadd.f32 %v2130, %v2285
      %v2355 = vadd.f32 %v2131, %v2289
      %v2356 = vadd.f32 %v2132, %v2293
      %v2357 = vadd.f32 %v2133, %v2297
      %v2358 = vadd.f32 %v2134, %v2277
      %v2359 = vadd.f32 %v2135, %v2281
      %v2360 = vadd.f32 %v2136, %v2285
      %v2361 = vadd.f32 %v2137, %v2289
      %v2362 = vadd.f32 %v2138, %v2293
      %v2363 = vadd.f32 %v2139, %v2297
      %v2364 = vadd.f32 %v2140, %v2277
      %v2365 = vadd.f32 %v2141, %v2281
      %v2366 = vadd.f32 %v2142, %v2285
      %v2367 = vadd.f32 %v2143, %v2289
      %v2368 = vadd.f32 %v2144, %v2293
      %v2369 = vadd.f32 %v2145, %v2297
      %v2370 = vadd.f32 %v2146, %v2277
      %v2371 = vadd.f32 %v2147, %v2281
      %v2372 = vadd.f32 %v2148, %v2285
      %v2373 = vadd.f32 %v2149, %v2289
      %v2374 = vadd.f32 %v2150, %v2293
      %v2375 = vadd.f32 %v2151, %v2297
      %v2376 = vadd.f32 %v2152, %v2277
      %v2377 = vadd.f32 %v2153, %v2281
      %v2378 = vadd.f32 %v2154, %v2285
      %v2379 = vadd.f32 %v2155, %v2289
      %v2380 = vadd.f32 %v2156, %v2293
      %v2381 = vadd.f32 %v2157, %v2297
      %v2382 = vadd.f32 %v2158, %v2277
      %v2383 = vadd.f32 %v2159, %v2281
      %v2384 = vadd.f32 %v2160, %v2285
      %v2385 = vadd.f32 %v2161, %v2289
      %v2386 = vadd.f32 %v2162, %v2293
      %v2387 = vadd.f32 %v2163, %v2297
      %v2388 = vadd.f32 %v2164, %v2277
      %v2389 = vadd.f32 %v2165, %v2281
      %v2390 = vadd.f32 %v2166, %v2285
      %v2391 = vadd.f32 %v2167, %v2289
      %v2392 = vadd.f32 %v2168, %v2293
      %v2393 = vadd.f32 %v2169, %v2297
      %v2394 = vadd.f32 %v2170, %v2277
      %v2395 = vadd.f32 %v2171, %v2281
      %v2396 = vadd.f32 %v2172, %v2285
      %v2397 = vadd.f32 %v2173, %v2289
      %v2398 = vadd.f32 %v2174, %v2293
      %v2399 = vadd.f32 %v2175, %v2297
      %v2400 = vadd.f32 %v2176, %v2277
      %v2401 = vadd.f32 %v2177, %v2281
      %v2402 = vadd.f32 %v2178, %v2285
      %v2403 = vadd.f32 %v2179, %v2289
      %v2404 = vadd.f32 %v2180, %v2293
      %v2405 = vadd.f32 %v2181, %v2297
      %v2406 = vadd.f32 %v2182, %v2277
      %v2407 = vadd.f32 %v2183, %v2281
      %v2408 = vadd.f32 %v2184, %v2285
      %v2409 = vadd.f32 %v2185, %v2289
      %v2410 = vadd.f32 %v2186, %v2293
      %v2411 = vadd.f32 %v2187, %v2297
      %v2412 = vadd.f32 %v2188, %v2277
      %v2413 = vadd.f32 %v2189, %v2281
      %v2414 = vadd.f32 %v2190, %v2285
      %v2415 = vadd.f32 %v2191, %v2289
      %v2416 = vadd.f32 %v2192, %v2293
      %v2417 = vadd.f32 %v2193, %v2297
      %v2418 = vadd.f32 %v2194, %v2277
      %v2419 = vadd.f32 %v2195, %v2281
      %v2420 = vadd.f32 %v2196, %v2285
      %v2421 = vadd.f32 %v2197, %v2289
      %v2422 = vadd.f32 %v2198, %v2293
      %v2423 = vadd.f32 %v2199, %v2297
      %v2424 = vadd.f32 %v2200, %v2277
      %v2425 = vadd.f32 %v2201, %v2281
      %v2426 = vadd.f32 %v2202, %v2285
      %v2427 = vadd.f32 %v2203, %v2289
      %v2428 = vadd.f32 %v2204, %v2293
      %v2429 = vadd.f32 %v2205, %v2297
      %v2430 = vadd.f32 %v2206, %v2277
      %v2431 = vadd.f32 %v2207, %v2281
      %v2432 = vadd.f32 %v2208, %v2285
      %v2433 = vadd.f32 %v2209, %v2289
      %v2434 = vadd.f32 %v2210, %v2293
      %v2435 = vadd.f32 %v2211, %v2297
      %v2436 = vadd.f32 %v2212, %v2277
      %v2437 = vadd.f32 %v2213, %v2281
      %v2438 = vadd.f32 %v2214, %v2285
      %v2439 = vadd.f32 %v2215, %v2289
      %v2440 = vadd.f32 %v2216, %v2293
      %v2441 = vadd.f32 %v2217, %v2297
      %v2442 = vadd.f32 %v2218, %v2277
      %v2443 = vadd.f32 %v2219, %v2281
      %v2444 = vadd.f32 %v2220, %v2285
      %v2445 = vadd.f32 %v2221, %v2289
      %v2446 = vadd.f32 %v2222, %v2293
      %v2447 = vadd.f32 %v2223, %v2297
      %v2448 = vadd.f32 %v2224, %v2277
      %v2449 = vadd.f32 %v2225, %v2281
      %v2450 = vadd.f32 %v2226, %v2285
      %v2451 = vadd.f32 %v2227, %v2289
      %v2452 = vadd.f32 %v2228, %v2293
      %v2453 = vadd.f32 %v2229, %v2297
      %v2454 = vadd.f32 %v2230, %v2277
      %v2455 = vadd.f32 %v2231, %v2281
      %v2456 = vadd.f32 %v2232, %v2285
      %v2457 = vadd.f32 %v2233, %v2289
      %v2458 = vadd.f32 %v2234, %v2293
      %v2459 = vadd.f32 %v2235, %v2297
      %v2460 = vadd.f32 %v2236, %v2277
      %v2461 = vadd.f32 %v2237, %v2281
      %v2462 = vadd.f32 %v2238, %v2285
      %v2463 = vadd.f32 %v2239, %v2289
      %v2464 = vadd.f32 %v2240, %v2293
      %v2465 = vadd.f32 %v2241, %v2297
      %v2466 = vadd.f32 %v2242, %v2277
      %v2467 = vadd.f32 %v2243, %v2281
      %v2468 = vadd.f32 %v2244, %v2285
      %v2469 = vadd.f32 %v2245, %v2289
      %v2470 = vadd.f32 %v2246, %v2293
      %v2471 = vadd.f32 %v2247, %v2297
      %v2472 = vadd.f32 %v2248, %v2277
      %v2473 = vadd.f32 %v2249, %v2281
      %v2474 = vadd.f32 %v2250, %v2285
      %v2475 = vadd.f32 %v2251, %v2289
      %v2476 = vadd.f32 %v2252, %v2293
      %v2477 = vadd.f32 %v2253, %v2297
      %v2478 = vadd.f32 %v2254, %v2277
      %v2479 = vadd.f32 %v2255, %v2281
      %v2480 = vadd.f32 %v2256, %v2285
      %v2481 = vadd.f32 %v2257, %v2289
      %v2482 = vadd.f32 %v2258, %v2293
      %v2483 = vadd.f32 %v2259, %v2297
      %v2484 = vadd.f32 %v2260, %v2277
      %v2485 = vadd.f32 %v2261, %v2281
      %v2486 = vadd.f32 %v2262, %v2285
      %v2487 = vadd.f32 %v2263, %v2289
      %v2488 = vadd.f32 %v2264, %v2293
      %v2489 = vadd.f32 %v2265, %v2297
      %v2490 = vadd.f32 %v2266, %v2277
      %v2491 = vadd.f32 %v2267, %v2281
      %v2492 = vadd.f32 %v2268, %v2285
      %v2493 = vadd.f32 %v2269, %v2289
      %v2494 = vadd.f32 %v2270, %v2293
      %v2495 = vadd.f32 %v2271, %v2297
      %v2496 = vpack.c.bf16 %v2310, %v2304
      %v2497 = vpack.c.bf16 %v2311, %v2305
      %v2498 = vpack.c.bf16 %v2312, %v2306
      %v2499 = vpack.c.bf16 %v2313, %v2307
      %v2500 = vpack.c.bf16 %v2314, %v2308
      %v2501 = vpack.c.bf16 %v2315, %v2309
      %v2502 = vpack.c.bf16 %v2322, %v2316
      %v2503 = vpack.c.bf16 %v2323, %v2317
      %v2504 = vpack.c.bf16 %v2324, %v2318
      %v2505 = vpack.c.bf16 %v2325, %v2319
      %v2506 = vpack.c.bf16 %v2326, %v2320
      %v2507 = vpack.c.bf16 %v2327, %v2321
      %v2508 = vpack.c.bf16 %v2334, %v2328
      %v2509 = vpack.c.bf16 %v2335, %v2329
      %v2510 = vpack.c.bf16 %v2336, %v2330
      %v2511 = vpack.c.bf16 %v2337, %v2331
      %v2512 = vpack.c.bf16 %v2338, %v2332
      %v2513 = vpack.c.bf16 %v2339, %v2333
      %v2514 = vpack.c.bf16 %v2346, %v2340
      %v2515 = vpack.c.bf16 %v2347, %v2341
      %v2516 = vpack.c.bf16 %v2348, %v2342
      %v2517 = vpack.c.bf16 %v2349, %v2343
      %v2518 = vpack.c.bf16 %v2350, %v2344
      %v2519 = vpack.c.bf16 %v2351, %v2345
      %v2520 = vpack.c.bf16 %v2358, %v2352
      %v2521 = vpack.c.bf16 %v2359, %v2353
      %v2522 = vpack.c.bf16 %v2360, %v2354
      %v2523 = vpack.c.bf16 %v2361, %v2355
      %v2524 = vpack.c.bf16 %v2362, %v2356
      %v2525 = vpack.c.bf16 %v2363, %v2357
      %v2526 = vpack.c.bf16 %v2370, %v2364
      %v2527 = vpack.c.bf16 %v2371, %v2365
      %v2528 = vpack.c.bf16 %v2372, %v2366
      %v2529 = vpack.c.bf16 %v2373, %v2367
      %v2530 = vpack.c.bf16 %v2374, %v2368
      %v2531 = vpack.c.bf16 %v2375, %v2369
      %v2532 = vpack.c.bf16 %v2382, %v2376
      %v2533 = vpack.c.bf16 %v2383, %v2377
      %v2534 = vpack.c.bf16 %v2384, %v2378
      %v2535 = vpack.c.bf16 %v2385, %v2379
      %v2536 = vpack.c.bf16 %v2386, %v2380
      %v2537 = vpack.c.bf16 %v2387, %v2381
      %v2538 = vpack.c.bf16 %v2394, %v2388
      %v2539 = vpack.c.bf16 %v2395, %v2389
      %v2540 = vpack.c.bf16 %v2396, %v2390
      %v2541 = vpack.c.bf16 %v2397, %v2391
      %v2542 = vpack.c.bf16 %v2398, %v2392
      %v2543 = vpack.c.bf16 %v2399, %v2393
      %v2544 = vpack.c.bf16 %v2406, %v2400
      %v2545 = vpack.c.bf16 %v2407, %v2401
      %v2546 = vpack.c.bf16 %v2408, %v2402
      %v2547 = vpack.c.bf16 %v2409, %v2403
      %v2548 = vpack.c.bf16 %v2410, %v2404
      %v2549 = vpack.c.bf16 %v2411, %v2405
      %v2550 = vpack.c.bf16 %v2418, %v2412
      %v2551 = vpack.c.bf16 %v2419, %v2413
      %v2552 = vpack.c.bf16 %v2420, %v2414
      %v2553 = vpack.c.bf16 %v2421, %v2415
      %v2554 = vpack.c.bf16 %v2422, %v2416
      %v2555 = vpack.c.bf16 %v2423, %v2417
      %v2556 = vpack.c.bf16 %v2430, %v2424
      %v2557 = vpack.c.bf16 %v2431, %v2425
      %v2558 = vpack.c.bf16 %v2432, %v2426
      %v2559 = vpack.c.bf16 %v2433, %v2427
      %v2560 = vpack.c.bf16 %v2434, %v2428
      %v2561 = vpack.c.bf16 %v2435, %v2429
      %v2562 = vpack.c.bf16 %v2442, %v2436
      %v2563 = vpack.c.bf16 %v2443, %v2437
      %v2564 = vpack.c.bf16 %v2444, %v2438
      %v2565 = vpack.c.bf16 %v2445, %v2439
      %v2566 = vpack.c.bf16 %v2446, %v2440
      %v2567 = vpack.c.bf16 %v2447, %v2441
      %v2568 = vpack.c.bf16 %v2454, %v2448
      %v2569 = vpack.c.bf16 %v2455, %v2449
      %v2570 = vpack.c.bf16 %v2456, %v2450
      %v2571 = vpack.c.bf16 %v2457, %v2451
      %v2572 = vpack.c.bf16 %v2458, %v2452
      %v2573 = vpack.c.bf16 %v2459, %v2453
      %v2574 = vpack.c.bf16 %v2466, %v2460
      %v2575 = vpack.c.bf16 %v2467, %v2461
      %v2576 = vpack.c.bf16 %v2468, %v2462
      %v2577 = vpack.c.bf16 %v2469, %v2463
      %v2578 = vpack.c.bf16 %v2470, %v2464
      %v2579 = vpack.c.bf16 %v2471, %v2465
      %v2580 = vpack.c.bf16 %v2478, %v2472
      %v2581 = vpack.c.bf16 %v2479, %v2473
      %v2582 = vpack.c.bf16 %v2480, %v2474
      %v2583 = vpack.c.bf16 %v2481, %v2475
      %v2584 = vpack.c.bf16 %v2482, %v2476
      %v2585 = vpack.c.bf16 %v2483, %v2477
      %v2586 = vpack.c.bf16 %v2490, %v2484
      %v2587 = vpack.c.bf16 %v2491, %v2485
      %v2588 = vpack.c.bf16 %v2492, %v2486
      %v2589 = vpack.c.bf16 %v2493, %v2487
      %v2590 = vpack.c.bf16 %v2494, %v2488
      %v2591 = vpack.c.bf16 %v2495, %v2489
      %v2688 = vunpack.c.l.b16 %v2496
      %v2689 = vunpack.c.l.b16 %v2497
      %v2690 = vunpack.c.l.b16 %v2498
      %v2691 = vunpack.c.l.b16 %v2499
      %v2692 = vunpack.c.l.b16 %v2500
      %v2693 = vunpack.c.l.b16 %v2501
      %v2694 = vunpack.c.h.b16 %v2496
      %v2695 = vunpack.c.h.b16 %v2497
      %v2696 = vunpack.c.h.b16 %v2498
      %v2697 = vunpack.c.h.b16 %v2499
      %v2698 = vunpack.c.h.b16 %v2500
      %v2699 = vunpack.c.h.b16 %v2501
      %v2700 = vunpack.c.l.b16 %v2502
      %v2701 = vunpack.c.l.b16 %v2503
      %v2702 = vunpack.c.l.b16 %v2504
      %v2703 = vunpack.c.l.b16 %v2505
      %v2704 = vunpack.c.l.b16 %v2506
      %v2705 = vunpack.c.l.b16 %v2507
      %v2706 = vunpack.c.h.b16 %v2502
      %v2707 = vunpack.c.h.b16 %v2503
      %v2708 = vunpack.c.h.b16 %v2504
      %v2709 = vunpack.c.h.b16 %v2505
      %v2710 = vunpack.c.h.b16 %v2506
      %v2711 = vunpack.c.h.b16 %v2507
      %v2712 = vunpack.c.l.b16 %v2508
      %v2713 = vunpack.c.l.b16 %v2509
      %v2714 = vunpack.c.l.b16 %v2510
      %v2715 = vunpack.c.l.b16 %v2511
      %v2716 = vunpack.c.l.b16 %v2512
      %v2717 = vunpack.c.l.b16 %v2513
      %v2718 = vunpack.c.h.b16 %v2508
      %v2719 = vunpack.c.h.b16 %v2509
      %v2720 = vunpack.c.h.b16 %v2510
      %v2721 = vunpack.c.h.b16 %v2511
      %v2722 = vunpack.c.h.b16 %v2512
      %v2723 = vunpack.c.h.b16 %v2513
      %v2724 = vunpack.c.l.b16 %v2514
      %v2725 = vunpack.c.l.b16 %v2515
      %v2726 = vunpack.c.l.b16 %v2516
      %v2727 = vunpack.c.l.b16 %v2517
      %v2728 = vunpack.c.l.b16 %v2518
      %v2729 = vunpack.c.l.b16 %v2519
      %v2730 = vunpack.c.h.b16 %v2514
      %v2731 = vunpack.c.h.b16 %v2515
      %v2732 = vunpack.c.h.b16 %v2516
      %v2733 = vunpack.c.h.b16 %v2517
      %v2734 = vunpack.c.h.b16 %v2518
      %v2735 = vunpack.c.h.b16 %v2519
      %v2736 = vunpack.c.l.b16 %v2520
      %v2737 = vunpack.c.l.b16 %v2521
      %v2738 = vunpack.c.l.b16 %v2522
      %v2739 = vunpack.c.l.b16 %v2523
      %v2740 = vunpack.c.l.b16 %v2524
      %v2741 = vunpack.c.l.b16 %v2525
      %v2742 = vunpack.c.h.b16 %v2520
      %v2743 = vunpack.c.h.b16 %v2521
      %v2744 = vunpack.c.h.b16 %v2522
      %v2745 = vunpack.c.h.b16 %v2523
      %v2746 = vunpack.c.h.b16 %v2524
      %v2747 = vunpack.c.h.b16 %v2525
      %v2748 = vunpack.c.l.b16 %v2526
      %v2749 = vunpack.c.l.b16 %v2527
      %v2750 = vunpack.c.l.b16 %v2528
      %v2751 = vunpack.c.l.b16 %v2529
      %v2752 = vunpack.c.l.b16 %v2530
      %v2753 = vunpack.c.l.b16 %v2531
      %v2754 = vunpack.c.h.b16 %v2526
      %v2755 = vunpack.c.h.b16 %v2527
      %v2756 = vunpack.c.h.b16 %v2528
      %v2757 = vunpack.c.h.b16 %v2529
      %v2758 = vunpack.c.h.b16 %v2530
      %v2759 = vunpack.c.h.b16 %v2531
      %v2760 = vunpack.c.l.b16 %v2532
      %v2761 = vunpack.c.l.b16 %v2533
      %v2762 = vunpack.c.l.b16 %v2534
      %v2763 = vunpack.c.l.b16 %v2535
      %v2764 = vunpack.c.l.b16 %v2536
      %v2765 = vunpack.c.l.b16 %v2537
      %v2766 = vunpack.c.h.b16 %v2532
      %v2767 = vunpack.c.h.b16 %v2533
      %v2768 = vunpack.c.h.b16 %v2534
      %v2769 = vunpack.c.h.b16 %v2535
      %v2770 = vunpack.c.h.b16 %v2536
      %v2771 = vunpack.c.h.b16 %v2537
      %v2772 = vunpack.c.l.b16 %v2538
      %v2773 = vunpack.c.l.b16 %v2539
      %v2774 = vunpack.c.l.b16 %v2540
      %v2775 = vunpack.c.l.b16 %v2541
      %v2776 = vunpack.c.l.b16 %v2542
      %v2777 = vunpack.c.l.b16 %v2543
      %v2778 = vunpack.c.h.b16 %v2538
      %v2779 = vunpack.c.h.b16 %v2539
      %v2780 = vunpack.c.h.b16 %v2540
      %v2781 = vunpack.c.h.b16 %v2541
      %v2782 = vunpack.c.h.b16 %v2542
      %v2783 = vunpack.c.h.b16 %v2543
      %v2784 = vunpack.c.l.b16 %v2544
      %v2785 = vunpack.c.l.b16 %v2545
      %v2786 = vunpack.c.l.b16 %v2546
      %v2787 = vunpack.c.l.b16 %v2547
      %v2788 = vunpack.c.l.b16 %v2548
      %v2789 = vunpack.c.l.b16 %v2549
      %v2790 = vunpack.c.h.b16 %v2544
      %v2791 = vunpack.c.h.b16 %v2545
      %v2792 = vunpack.c.h.b16 %v2546
      %v2793 = vunpack.c.h.b16 %v2547
      %v2794 = vunpack.c.h.b16 %v2548
      %v2795 = vunpack.c.h.b16 %v2549
      %v2796 = vunpack.c.l.b16 %v2550
      %v2797 = vunpack.c.l.b16 %v2551
      %v2798 = vunpack.c.l.b16 %v2552
      %v2799 = vunpack.c.l.b16 %v2553
      %v2800 = vunpack.c.l.b16 %v2554
      %v2801 = vunpack.c.l.b16 %v2555
      %v2802 = vunpack.c.h.b16 %v2550
      %v2803 = vunpack.c.h.b16 %v2551
      %v2804 = vunpack.c.h.b16 %v2552
      %v2805 = vunpack.c.h.b16 %v2553
      %v2806 = vunpack.c.h.b16 %v2554
      %v2807 = vunpack.c.h.b16 %v2555
      %v2808 = vunpack.c.l.b16 %v2556
      %v2809 = vunpack.c.l.b16 %v2557
      %v2810 = vunpack.c.l.b16 %v2558
      %v2811 = vunpack.c.l.b16 %v2559
      %v2812 = vunpack.c.l.b16 %v2560
      %v2813 = vunpack.c.l.b16 %v2561
      %v2814 = vunpack.c.h.b16 %v2556
      %v2815 = vunpack.c.h.b16 %v2557
      %v2816 = vunpack.c.h.b16 %v2558
      %v2817 = vunpack.c.h.b16 %v2559
      %v2818 = vunpack.c.h.b16 %v2560
      %v2819 = vunpack.c.h.b16 %v2561
      %v2820 = vunpack.c.l.b16 %v2562
      %v2821 = vunpack.c.l.b16 %v2563
      %v2822 = vunpack.c.l.b16 %v2564
      %v2823 = vunpack.c.l.b16 %v2565
      %v2824 = vunpack.c.l.b16 %v2566
      %v2825 = vunpack.c.l.b16 %v2567
      %v2826 = vunpack.c.h.b16 %v2562
      %v2827 = vunpack.c.h.b16 %v2563
      %v2828 = vunpack.c.h.b16 %v2564
      %v2829 = vunpack.c.h.b16 %v2565
      %v2830 = vunpack.c.h.b16 %v2566
      %v2831 = vunpack.c.h.b16 %v2567
      %v2832 = vunpack.c.l.b16 %v2568
      %v2833 = vunpack.c.l.b16 %v2569
      %v2834 = vunpack.c.l.b16 %v2570
      %v2835 = vunpack.c.l.b16 %v2571
      %v2836 = vunpack.c.l.b16 %v2572
      %v2837 = vunpack.c.l.b16 %v2573
      %v2838 = vunpack.c.h.b16 %v2568
      %v2839 = vunpack.c.h.b16 %v2569
      %v2840 = vunpack.c.h.b16 %v2570
      %v2841 = vunpack.c.h.b16 %v2571
      %v2842 = vunpack.c.h.b16 %v2572
      %v2843 = vunpack.c.h.b16 %v2573
      %v2844 = vunpack.c.l.b16 %v2574
      %v2845 = vunpack.c.l.b16 %v2575
      %v2846 = vunpack.c.l.b16 %v2576
      %v2847 = vunpack.c.l.b16 %v2577
      %v2848 = vunpack.c.l.b16 %v2578
      %v2849 = vunpack.c.l.b16 %v2579
      %v2850 = vunpack.c.h.b16 %v2574
      %v2851 = vunpack.c.h.b16 %v2575
      %v2852 = vunpack.c.h.b16 %v2576
      %v2853 = vunpack.c.h.b16 %v2577
      %v2854 = vunpack.c.h.b16 %v2578
      %v2855 = vunpack.c.h.b16 %v2579
      %v2856 = vunpack.c.l.b16 %v2580
      %v2857 = vunpack.c.l.b16 %v2581
      %v2858 = vunpack.c.l.b16 %v2582
      %v2859 = vunpack.c.l.b16 %v2583
      %v2860 = vunpack.c.l.b16 %v2584
      %v2861 = vunpack.c.l.b16 %v2585
      %v2862 = vunpack.c.h.b16 %v2580
      %v2863 = vunpack.c.h.b16 %v2581
      %v2864 = vunpack.c.h.b16 %v2582
      %v2865 = vunpack.c.h.b16 %v2583
      %v2866 = vunpack.c.h.b16 %v2584
      %v2867 = vunpack.c.h.b16 %v2585
      %v2868 = vunpack.c.l.b16 %v2586
      %v2869 = vunpack.c.l.b16 %v2587
      %v2870 = vunpack.c.l.b16 %v2588
      %v2871 = vunpack.c.l.b16 %v2589
      %v2872 = vunpack.c.l.b16 %v2590
      %v2873 = vunpack.c.l.b16 %v2591
      %v2874 = vunpack.c.h.b16 %v2586
      %v2875 = vunpack.c.h.b16 %v2587
      %v2876 = vunpack.c.h.b16 %v2588
      %v2877 = vunpack.c.h.b16 %v2589
      %v2878 = vunpack.c.h.b16 %v2590
      %v2879 = vunpack.c.h.b16 %v2591
      %v2880 = vpack.c.b16 %v2689, %v2688
      %v2881 = vpack.c.b16 %v2691, %v2690
      %v2882 = vpack.c.b16 %v2693, %v2692
      %v2883 = vpack.c.b16 %v2695, %v2694
      %v2884 = vpack.c.b16 %v2697, %v2696
      %v2885 = vpack.c.b16 %v2699, %v2698
      %v2886 = vpack.c.b16 %v2701, %v2700
      %v2887 = vpack.c.b16 %v2703, %v2702
      %v2888 = vpack.c.b16 %v2705, %v2704
      %v2889 = vpack.c.b16 %v2707, %v2706
      %v2890 = vpack.c.b16 %v2709, %v2708
      %v2891 = vpack.c.b16 %v2711, %v2710
      %v2892 = vpack.c.b16 %v2713, %v2712
      %v2893 = vpack.c.b16 %v2715, %v2714
      %v2894 = vpack.c.b16 %v2717, %v2716
      %v2895 = vpack.c.b16 %v2719, %v2718
      %v2896 = vpack.c.b16 %v2721, %v2720
      %v2897 = vpack.c.b16 %v2723, %v2722
      %v2898 = vpack.c.b16 %v2725, %v2724
      %v2899 = vpack.c.b16 %v2727, %v2726
      %v2900 = vpack.c.b16 %v2729, %v2728
      %v2901 = vpack.c.b16 %v2731, %v2730
      %v2902 = vpack.c.b16 %v2733, %v2732
      %v2903 = vpack.c.b16 %v2735, %v2734
      %v2904 = vpack.c.b16 %v2737, %v2736
      %v2905 = vpack.c.b16 %v2739, %v2738
      %v2906 = vpack.c.b16 %v2741, %v2740
      %v2907 = vpack.c.b16 %v2743, %v2742
      %v2908 = vpack.c.b16 %v2745, %v2744
      %v2909 = vpack.c.b16 %v2747, %v2746
      %v2910 = vpack.c.b16 %v2749, %v2748
      %v2911 = vpack.c.b16 %v2751, %v2750
      %v2912 = vpack.c.b16 %v2753, %v2752
      %v2913 = vpack.c.b16 %v2755, %v2754
      %v2914 = vpack.c.b16 %v2757, %v2756
      %v2915 = vpack.c.b16 %v2759, %v2758
      %v2916 = vpack.c.b16 %v2761, %v2760
      %v2917 = vpack.c.b16 %v2763, %v2762
      %v2918 = vpack.c.b16 %v2765, %v2764
      %v2919 = vpack.c.b16 %v2767, %v2766
      %v2920 = vpack.c.b16 %v2769, %v2768
      %v2921 = vpack.c.b16 %v2771, %v2770
      %v2922 = vpack.c.b16 %v2773, %v2772
      %v2923 = vpack.c.b16 %v2775, %v2774
      %v2924 = vpack.c.b16 %v2777, %v2776
      %v2925 = vpack.c.b16 %v2779, %v2778
      %v2926 = vpack.c.b16 %v2781, %v2780
      %v2927 = vpack.c.b16 %v2783, %v2782
      %v2928 = vpack.c.b16 %v2785, %v2784
      %v2929 = vpack.c.b16 %v2787, %v2786
      %v2930 = vpack.c.b16 %v2789, %v2788
      %v2931 = vpack.c.b16 %v2791, %v2790
      %v2932 = vpack.c.b16 %v2793, %v2792
      %v2933 = vpack.c.b16 %v2795, %v2794
      %v2934 = vpack.c.b16 %v2797, %v2796
      %v2935 = vpack.c.b16 %v2799, %v2798
      %v2936 = vpack.c.b16 %v2801, %v2800
      %v2937 = vpack.c.b16 %v2803, %v2802
      %v2938 = vpack.c.b16 %v2805, %v2804
      %v2939 = vpack.c.b16 %v2807, %v2806
      %v2940 = vpack.c.b16 %v2809, %v2808
      %v2941 = vpack.c.b16 %v2811, %v2810
      %v2942 = vpack.c.b16 %v2813, %v2812
      %v2943 = vpack.c.b16 %v2815, %v2814
      %v2944 = vpack.c.b16 %v2817, %v2816
      %v2945 = vpack.c.b16 %v2819, %v2818
      %v2946 = vpack.c.b16 %v2821, %v2820
      %v2947 = vpack.c.b16 %v2823, %v2822
      %v2948 = vpack.c.b16 %v2825, %v2824
      %v2949 = vpack.c.b16 %v2827, %v2826
      %v2950 = vpack.c.b16 %v2829, %v2828
      %v2951 = vpack.c.b16 %v2831, %v2830
      %v2952 = vpack.c.b16 %v2833, %v2832
      %v2953 = vpack.c.b16 %v2835, %v2834
      %v2954 = vpack.c.b16 %v2837, %v2836
      %v2955 = vpack.c.b16 %v2839, %v2838
      %v2956 = vpack.c.b16 %v2841, %v2840
      %v2957 = vpack.c.b16 %v2843, %v2842
      %v2958 = vpack.c.b16 %v2845, %v2844
      %v2959 = vpack.c.b16 %v2847, %v2846
      %v2960 = vpack.c.b16 %v2849, %v2848
      %v2961 = vpack.c.b16 %v2851, %v2850
      %v2962 = vpack.c.b16 %v2853, %v2852
      %v2963 = vpack.c.b16 %v2855, %v2854
      %v2964 = vpack.c.b16 %v2857, %v2856
      %v2965 = vpack.c.b16 %v2859, %v2858
      %v2966 = vpack.c.b16 %v2861, %v2860
      %v2967 = vpack.c.b16 %v2863, %v2862
      %v2968 = vpack.c.b16 %v2865, %v2864
      %v2969 = vpack.c.b16 %v2867, %v2866
      %v2970 = vpack.c.b16 %v2869, %v2868
      %v2971 = vpack.c.b16 %v2871, %v2870
      %v2972 = vpack.c.b16 %v2873, %v2872
      %v2973 = vpack.c.b16 %v2875, %v2874
      %v2974 = vpack.c.b16 %v2877, %v2876
      %v2975 = vpack.c.b16 %v2879, %v2878
      %3072 = vst [vmem:[#allocation9] sm:$0xff] %v2880
      %3073 = vst [vmem:[#allocation9 + $0x8] sm:$0xff] %v2881
      %3074 = vst [vmem:[#allocation9 + $0x10] sm:$0xff] %v2882
      %3075 = vst [vmem:[#allocation9 + $0x18] sm:$0xff] %v2883
      %3076 = vst [vmem:[#allocation9 + $0x20] sm:$0xff] %v2884
      %3077 = vst [vmem:[#allocation9 + $0x28] sm:$0xff] %v2885
      %3078 = vst [vmem:[#allocation9 + $0x30] sm:$0xff] %v2886
      %3079 = vst [vmem:[#allocation9 + $0x38] sm:$0xff] %v2887
      %3080 = vst [vmem:[#allocation9 + $0x40] sm:$0xff] %v2888
      %3081 = vst [vmem:[#allocation9 + $0x48] sm:$0xff] %v2889
      %3082 = vst [vmem:[#allocation9 + $0x50] sm:$0xff] %v2890
      %3083 = vst [vmem:[#allocation9 + $0x58] sm:$0xff] %v2891
      %3084 = vst [vmem:[#allocation9 + $0x60] sm:$0xff] %v2892
      %3085 = vst [vmem:[#allocation9 + $0x68] sm:$0xff] %v2893
      %3086 = vst [vmem:[#allocation9 + $0x70] sm:$0xff] %v2894
      %3087 = vst [vmem:[#allocation9 + $0x78] sm:$0xff] %v2895
      %3088 = vst [vmem:[#allocation9 + $0x80] sm:$0xff] %v2896
      %3089 = vst [vmem:[#allocation9 + $0x88] sm:$0xff] %v2897
      %3090 = vst [vmem:[#allocation9 + $0x90] sm:$0xff] %v2898
      %3091 = vst [vmem:[#allocation9 + $0x98] sm:$0xff] %v2899
      %3092 = vst [vmem:[#allocation9 + $0xa0] sm:$0xff] %v2900
      %3093 = vst [vmem:[#allocation9 + $0xa8] sm:$0xff] %v2901
      %3094 = vst [vmem:[#allocation9 + $0xb0] sm:$0xff] %v2902
      %3095 = vst [vmem:[#allocation9 + $0xb8] sm:$0xff] %v2903
      %3096 = vst [vmem:[#allocation9 + $0xc0] sm:$0xff] %v2904
      %3097 = vst [vmem:[#allocation9 + $0xc8] sm:$0xff] %v2905
      %3098 = vst [vmem:[#allocation9 + $0xd0] sm:$0xff] %v2906
      %3099 = vst [vmem:[#allocation9 + $0xd8] sm:$0xff] %v2907
      %3100 = vst [vmem:[#allocation9 + $0xe0] sm:$0xff] %v2908
      %3101 = vst [vmem:[#allocation9 + $0xe8] sm:$0xff] %v2909
      %3102 = vst [vmem:[#allocation9 + $0xf0] sm:$0xff] %v2910
      %3103 = vst [vmem:[#allocation9 + $0xf8] sm:$0xff] %v2911
      %3104 = vst [vmem:[#allocation9 + $0x100] sm:$0xff] %v2912
      %3105 = vst [vmem:[#allocation9 + $0x108] sm:$0xff] %v2913
      %3106 = vst [vmem:[#allocation9 + $0x110] sm:$0xff] %v2914
      %3107 = vst [vmem:[#allocation9 + $0x118] sm:$0xff] %v2915
      %3108 = vst [vmem:[#allocation9 + $0x120] sm:$0xff] %v2916
      %3109 = vst [vmem:[#allocation9 + $0x128] sm:$0xff] %v2917
      %3110 = vst [vmem:[#allocation9 + $0x130] sm:$0xff] %v2918
      %3111 = vst [vmem:[#allocation9 + $0x138] sm:$0xff] %v2919
      %3112 = vst [vmem:[#allocation9 + $0x140] sm:$0xff] %v2920
      %3113 = vst [vmem:[#allocation9 + $0x148] sm:$0xff] %v2921
      %3114 = vst [vmem:[#allocation9 + $0x150] sm:$0xff] %v2922
      %3115 = vst [vmem:[#allocation9 + $0x158] sm:$0xff] %v2923
      %3116 = vst [vmem:[#allocation9 + $0x160] sm:$0xff] %v2924
      %3117 = vst [vmem:[#allocation9 + $0x168] sm:$0xff] %v2925
      %3118 = vst [vmem:[#allocation9 + $0x170] sm:$0xff] %v2926
      %3119 = vst [vmem:[#allocation9 + $0x178] sm:$0xff] %v2927
      %3120 = vst [vmem:[#allocation9 + $0x180] sm:$0xff] %v2928
      %3121 = vst [vmem:[#allocation9 + $0x188] sm:$0xff] %v2929
      %3122 = vst [vmem:[#allocation9 + $0x190] sm:$0xff] %v2930
      %3123 = vst [vmem:[#allocation9 + $0x198] sm:$0xff] %v2931
      %3124 = vst [vmem:[#allocation9 + $0x1a0] sm:$0xff] %v2932
      %3125 = vst [vmem:[#allocation9 + $0x1a8] sm:$0xff] %v2933
      %3126 = vst [vmem:[#allocation9 + $0x1b0] sm:$0xff] %v2934
      %3127 = vst [vmem:[#allocation9 + $0x1b8] sm:$0xff] %v2935
      %3128 = vst [vmem:[#allocation9 + $0x1c0] sm:$0xff] %v2936
      %3129 = vst [vmem:[#allocation9 + $0x1c8] sm:$0xff] %v2937
      %3130 = vst [vmem:[#allocation9 + $0x1d0] sm:$0xff] %v2938
      %3131 = vst [vmem:[#allocation9 + $0x1d8] sm:$0xff] %v2939
      %3132 = vst [vmem:[#allocation9 + $0x1e0] sm:$0xff] %v2940
      %3133 = vst [vmem:[#allocation9 + $0x1e8] sm:$0xff] %v2941
      %3134 = vst [vmem:[#allocation9 + $0x1f0] sm:$0xff] %v2942
      %3135 = vst [vmem:[#allocation9 + $0x1f8] sm:$0xff] %v2943
      %3136 = vst [vmem:[#allocation9 + $0x200] sm:$0xff] %v2944
      %3137 = vst [vmem:[#allocation9 + $0x208] sm:$0xff] %v2945
      %3138 = vst [vmem:[#allocation9 + $0x210] sm:$0xff] %v2946
      %3139 = vst [vmem:[#allocation9 + $0x218] sm:$0xff] %v2947
      %3140 = vst [vmem:[#allocation9 + $0x220] sm:$0xff] %v2948
      %3141 = vst [vmem:[#allocation9 + $0x228] sm:$0xff] %v2949
      %3142 = vst [vmem:[#allocation9 + $0x230] sm:$0xff] %v2950
      %3143 = vst [vmem:[#allocation9 + $0x238] sm:$0xff] %v2951
      %3144 = vst [vmem:[#allocation9 + $0x240] sm:$0xff] %v2952
      %3145 = vst [vmem:[#allocation9 + $0x248] sm:$0xff] %v2953
      %3146 = vst [vmem:[#allocation9 + $0x250] sm:$0xff] %v2954
      %3147 = vst [vmem:[#allocation9 + $0x258] sm:$0xff] %v2955
      %3148 = vst [vmem:[#allocation9 + $0x260] sm:$0xff] %v2956
      %3149 = vst [vmem:[#allocation9 + $0x268] sm:$0xff] %v2957
      %3150 = vst [vmem:[#allocation9 + $0x270] sm:$0xff] %v2958
      %3151 = vst [vmem:[#allocation9 + $0x278] sm:$0xff] %v2959
      %3152 = vst [vmem:[#allocation9 + $0x280] sm:$0xff] %v2960
      %3153 = vst [vmem:[#allocation9 + $0x288] sm:$0xff] %v2961
      %3154 = vst [vmem:[#allocation9 + $0x290] sm:$0xff] %v2962
      %3155 = vst [vmem:[#allocation9 + $0x298] sm:$0xff] %v2963
      %3156 = vst [vmem:[#allocation9 + $0x2a0] sm:$0xff] %v2964
      %3157 = vst [vmem:[#allocation9 + $0x2a8] sm:$0xff] %v2965
      %3158 = vst [vmem:[#allocation9 + $0x2b0] sm:$0xff] %v2966
      %3159 = vst [vmem:[#allocation9 + $0x2b8] sm:$0xff] %v2967
      %3160 = vst [vmem:[#allocation9 + $0x2c0] sm:$0xff] %v2968
      %3161 = vst [vmem:[#allocation9 + $0x2c8] sm:$0xff] %v2969
      %3162 = vst [vmem:[#allocation9 + $0x2d0] sm:$0xff] %v2970
      %3163 = vst [vmem:[#allocation9 + $0x2d8] sm:$0xff] %v2971
      %3164 = vst [vmem:[#allocation9 + $0x2e0] sm:$0xff] %v2972
      %3165 = vst [vmem:[#allocation9 + $0x2e8] sm:$0xff] %v2973
      %3166 = vst [vmem:[#allocation9 + $0x2f0] sm:$0xff] %v2974
      %3167 = vst [vmem:[#allocation9 + $0x2f8] sm:$0xff] %v2975
    $region33: #{tpu_custom_call.1} parent=1 // pred_fallthru
      _
    // Predicated region
    $region34: #{tpu_custom_call.1} parent=1 // pred_check
      _
    $region35: #{tpu_custom_call.1} parent=1 // pred_check_branch
      %3169 = sbr.rel (0) target = $region37
    $region36: #{tpu_custom_call.1} parent=1 // pred_region
      %s3171 = ssub.s32 12288, 12288
      %3172 = vsyncadd [#allocation5], %s3171
      %s3173 = sshll.u32 [#allocation9], 4
      %s3174 = int_to_ptr.vmem [resolvable:$true] %s3173
      %3179 = dma.vmem_to_hbm [thread:$0]  %s3174, 12288, %s3, [#allocation5], 384, 384, 24
    $region37: #{tpu_custom_call.1} parent=1 // pred_fallthru
      _
    // Predicated region
    $region38: #{tpu_custom_call.1} parent=1 // pred_check
      _
    $region39: #{tpu_custom_call.1} parent=1 // pred_check_branch
      %3181 = sbr.rel (0) target = $region41
    $region40: #{tpu_custom_call.1} parent=1 // pred_region
      %3182 = dma.done [#allocation5], 12288
    $region41: #{tpu_custom_call.1} parent=1 // pred_fallthru
      _
    %3183 = vsyncpa [#allocation4], 1
    %3184 = vsyncpa [#allocation7], 1
    %3185 = vsyncpa [#allocation5], 1

</llo_original>
